<compile_context>
chip_gen: v5e
topology: v5e:2x2
jax: 0.10.0
libtpu: 0.0.40
codegen_flags: <defaults>
</compile_context>

<pallas_src>
import functools
import math

import jax
import jax.numpy as jnp
from jax import lax
from jax.experimental import pallas as pl
from jax.experimental.pallas import tpu as pltpu


# ----------------------------- in-kernel math ------------------------------

def _erf_f32(z):
    # Abramowitz & Stegun 7.1.26 rational approximation, |err| < 1.5e-7.
    # f32-accurate stand-in for PyTorch's exact-erf GELU (approximate='none').
    p = 0.3275911
    a1, a2, a3, a4, a5 = (0.254829592, -0.284496736, 1.421413741,
                          -1.453152027, 1.061405429)
    sgn = jnp.where(z >= 0.0, 1.0, -1.0)
    az = jnp.abs(z)
    t = 1.0 / (1.0 + p * az)
    poly = ((((a5 * t + a4) * t + a3) * t + a2) * t + a1) * t
    return sgn * (1.0 - poly * jnp.exp(-az * az))


def _gelu_exact(z):
    return 0.5 * z * (1.0 + _erf_f32(z * 0.7071067811865476))


def _layernorm(z, g, b, eps=1e-5):
    mu = jnp.mean(z, axis=-1, keepdims=True)
    zc = z - mu
    var = jnp.mean(zc * zc, axis=-1, keepdims=True)
    return zc * lax.rsqrt(var + eps) * g + b


def _bf16(v):
    return v.astype(jnp.bfloat16)


# ------------------- fused transformer stack + channel reduce ---------------

def fused_kernel(x_ref, m_ref, crb_ref,
                 wqkv_ref, wo_ref, w1_ref, w2_ref,
                 bqkv_ref, b1_ref, vec_ref,
                 o_ref, y_sc, ctx_sc, *, nhead):
    l = pl.program_id(1)
    n_layers = pl.num_programs(1)

    # load the (already sequence-permuted) activations once per batch element
    @pl.when(l == 0)
    def _():
        y_sc[...] = x_ref[0]

    x = y_sc[...]                               # (S, D) float32
    S, D = x.shape
    dh = D // nhead
    scale = 1.0 / math.sqrt(dh)

    vecs = vec_ref[0]                           # (6, D): bo, g1, be1, b2, g2, be2
    bo, g1, be1 = vecs[0:1, :], vecs[1:2, :], vecs[2:3, :]
    b2, g2, be2 = vecs[3:4, :], vecs[4:5, :], vecs[5:6, :]

    # ---- multi-head self attention: one fused (S,D)@(D,3D) bf16 projection ----
    qkv = jnp.dot(_bf16(x), wqkv_ref[0],
                  preferred_element_type=jnp.float32) + bqkv_ref[0]   # (S, 3D)

    # TODO(synk): for long sequences / d_model=384 on v7x (64 MiB VMEM), tile
    # the q dimension flash-style instead of holding full (S,S) scores per head.
    for h in range(nhead):                      # heads statically unrolled
        q = qkv[:, h * dh:(h + 1) * dh]
        k = qkv[:, D + h * dh:D + (h + 1) * dh]
        v = qkv[:, 2 * D + h * dh:2 * D + (h + 1) * dh]
        s = lax.dot_general(_bf16(q), _bf16(k), (((1,), (1,)), ((), ())),
                            preferred_element_type=jnp.float32) * scale
        s = s - jnp.max(s, axis=-1, keepdims=True)
        e = jnp.exp(s)
        p = e * pl.reciprocal(jnp.sum(e, axis=-1, keepdims=True), approx=True)
        ctx_sc[:, h * dh:(h + 1) * dh] = jnp.dot(
            _bf16(p), _bf16(v), preferred_element_type=jnp.float32)

    # single full-width output projection on the concatenated context
    attn = jnp.dot(_bf16(ctx_sc[...]), wo_ref[0],
                   preferred_element_type=jnp.float32) + bo

    # ---- post-norm residual blocks (norm_first=False) ----
    x1 = _layernorm(x + attn, g1, be1)
    hmid = _gelu_exact(jnp.dot(_bf16(x1), w1_ref[0],
                               preferred_element_type=jnp.float32) + b1_ref[0])
    ff = jnp.dot(_bf16(hmid), w2_ref[0],
                 preferred_element_type=jnp.float32) + b2
    y = _layernorm(x1 + ff, g2, be2)
    y_sc[...] = y

    # ---- last layer: channel reduce + output permute fused as one matmul ----
    @pl.when(l == n_layers - 1)
    def _():
        o_ref[0] = jnp.dot(m_ref[...], y,
                           preferred_element_type=jnp.float32) + crb_ref[0]


def fused_transformer_reduce(y, reducer_mat, params, *, nhead):
    B, S, D = y.shape
    L, _, F = params["w1"].shape
    GT = reducer_mat.shape[0]

    grid_spec = pltpu.PrefetchScalarGridSpec(
        num_scalar_prefetch=0,
        grid=(B, L),
        in_specs=[
            pl.BlockSpec((1, S, D), lambda b, l: (b, 0, 0)),       # activations
            pl.BlockSpec((GT, S), lambda b, l: (0, 0)),            # reducer matrix
            pl.BlockSpec(memory_space=pltpu.MemorySpace.SMEM),     # reducer bias
            pl.BlockSpec((1, D, 3 * D), lambda b, l: (l, 0, 0)),   # Wqkv (bf16)
            pl.BlockSpec((1, D, D), lambda b, l: (l, 0, 0)),       # Wo   (bf16)
            pl.BlockSpec((1, D, F), lambda b, l: (l, 0, 0)),       # W1   (bf16)
            pl.BlockSpec((1, F, D), lambda b, l: (l, 0, 0)),       # W2   (bf16)
            pl.BlockSpec((1, 1, 3 * D), lambda b, l: (l, 0, 0)),   # bqkv
            pl.BlockSpec((1, 1, F), lambda b, l: (l, 0, 0)),       # b1
            pl.BlockSpec((1, 6, D), lambda b, l: (l, 0, 0)),       # bo/ln1/b2/ln2
        ],
        out_specs=pl.BlockSpec((1, GT, D), lambda b, l: (b, 0, 0)),
        scratch_shapes=[
            pltpu.VMEM((S, D), jnp.float32),    # running activation (layer carry)
            pltpu.VMEM((S, D), jnp.float32),    # concatenated attention context
        ],
    )
    fn = pl.pallas_call(
        functools.partial(fused_kernel, nhead=nhead),
        out_shape=jax.ShapeDtypeStruct((B, GT, D), jnp.float32),
        grid_spec=grid_spec,
        compiler_params=pltpu.CompilerParams(
            dimension_semantics=("parallel", "arbitrary")),
    )
    return fn(y, reducer_mat, params["cr_b"],
              params["wqkv"], params["wo"], params["w1"], params["w2"],
              params["bqkv"], params["b1"], params["vecs"])


# ------------------------------- full forward -------------------------------

def dimension_reducer_forward(x, params, *, nhead):
    """x: [B, C_T*(K_T+1), L+H, D]  ->  [B, C_T, L+H, D]"""
    B, C, T, D = x.shape
    S = T * C
    K_n = params["cr_w"].shape[0]
    G = C // K_n                                  # == C_T

    # x.permute(0,2,1,3).reshape(B, (L+H)*C, D): one tiny XLA transpose of the
    # raw input, executed once (all inter-layer round-trips are gone).
    # TODO(synk): fold this gather into the kernel's input DMA for large shapes.
    y = jnp.transpose(x, (0, 2, 1, 3)).reshape(B, S, D)

    # Selection-weight matrix fusing channel_reducer + its permutes:
    #   out[g*T + t, :] = sum_k cr_w[k] * y[t*C + g*K_n + k, :]
    r = jnp.arange(G * T)
    g_idx, t_idx = r // T, r % T
    cols = (t_idx * C + g_idx * K_n)[:, None] + jnp.arange(K_n)[None, :]
    onehot = (cols[:, :, None] == jnp.arange(S)[None, None, :]).astype(jnp.float32)
    reducer_mat = (onehot * params["cr_w"][None, :, None]).sum(axis=1)  # (G*T, S)

    out = fused_transformer_reduce(y, reducer_mat, params, nhead=nhead)  # (B, G*T, D)
    return out.reshape(B, G, T, D)                # [B, C_T, L+H, D]


# ------------------------------ parameter init -------------------------------

def init_params(key, d_model, nhead, num_layers, K_n):
    D = d_model
    F = 4 * D

    def nrm(k, shape, scale=0.05):
        return scale * jax.random.normal(k, shape, jnp.float32)

    keys = jax.random.split(key, 10)
    wqkv = nrm(keys[0], (num_layers, D, 3 * D)).astype(jnp.bfloat16)
    wo = nrm(keys[1], (num_layers, D, D)).astype(jnp.bfloat16)
    w1 = nrm(keys[2], (num_layers, D, F)).astype(jnp.bfloat16)
    w2 = nrm(keys[3], (num_layers, F, D)).astype(jnp.bfloat16)
    bqkv = nrm(keys[4], (num_layers, 1, 3 * D), 0.02)
    b1 = nrm(keys[5], (num_layers, 1, F), 0.02)

    # packed (1,D) vectors: rows = [bo, ln1.gamma, ln1.beta, b2, ln2.gamma, ln2.beta]
    bo = nrm(keys[6], (num_layers, 1, D), 0.02)
    b2 = nrm(keys[7], (num_layers, 1, D), 0.02)
    ones = jnp.ones((num_layers, 1, D), jnp.float32)
    zeros = jnp.zeros((num_layers, 1, D), jnp.float32)
    vecs = jnp.concatenate([bo, ones, zeros, b2, ones, zeros], axis=1)  # (L, 6, D)

    cr_w = nrm(keys[8], (K_n,), 0.5)
    cr_b = nrm(keys[9], (1,), 0.02)
    return dict(wqkv=wqkv, wo=wo, w1=w1, w2=w2, bqkv=bqkv, b1=b1,
                vecs=vecs, cr_w=cr_w, cr_b=cr_b)


# ---------------------------------- main -------------------------------------

if __name__ == "__main__":
    # small shapes consistent with the module; d_model kept a multiple of 128
    # (module default 384 also is) so every store is lane-dense.
    B, C_T, K_n, LplusH = 2, 2, 2, 8
    d_model, nhead, num_layers = 128, 8, 3
    C = C_T * K_n                                 # C_T*(K_T+1), with K_T+1 == K_n

    key = jax.random.PRNGKey(0)
    key, xkey = jax.random.split(key)
    x = jax.random.normal(xkey, (B, C, LplusH, d_model), jnp.float32)
    params = init_params(key, d_model, nhead, num_layers, K_n)

    fwd = jax.jit(functools.partial(dimension_reducer_forward, nhead=nhead))
    out = jax.block_until_ready(fwd(x, params))

    assert out.shape == (B, C_T, LplusH, d_model), out.shape
    assert bool(jnp.all(jnp.isfinite(out)))
    print("KERNEL_OK")
</pallas_src>

<mosaic_0001>
module attributes {stable_mosaic.version = 11 : i64} {
  func.func @fused_kernel(%arg0: i32, %arg1: i32, %arg2: memref<1x32x128xf32, #tpu.memory_space<vmem>>, %arg3: memref<16x32xf32, #tpu.memory_space<vmem>>, %arg4: memref<1xf32, #tpu.memory_space<smem>>, %arg5: memref<1x128x384xbf16, #tpu.memory_space<vmem>>, %arg6: memref<1x128x128xbf16, #tpu.memory_space<vmem>>, %arg7: memref<1x128x512xbf16, #tpu.memory_space<vmem>>, %arg8: memref<1x512x128xbf16, #tpu.memory_space<vmem>>, %arg9: memref<1x1x384xf32, #tpu.memory_space<vmem>>, %arg10: memref<1x1x512xf32, #tpu.memory_space<vmem>>, %arg11: memref<1x6x128xf32, #tpu.memory_space<vmem>>, %arg12: memref<1x16x128xf32, #tpu.memory_space<vmem>>, %arg13: memref<32x128xf32, #tpu.memory_space<vmem>>, %arg14: memref<32x128xf32, #tpu.memory_space<vmem>>) attributes {dimension_semantics = [#tpu.dimension_semantics<parallel>, #tpu.dimension_semantics<arbitrary>], iteration_bounds = array<i64: 2, 3>, scalar_prefetch = 0 : i64, scratch_operands = 2 : i64, tpu.core_type = #tpu.core_type<tc>, window_params = [{transform_indices = @transform_0, window_bounds = array<i64: 1, 32, 128>}, {pipeline_mode = #tpu.pipeline_mode<synchronous>, transform_indices = @transform_1, window_bounds = array<i64: 16, 32>}, {transform_indices = @transform_2, window_bounds = array<i64: 1>}, {transform_indices = @transform_3, window_bounds = array<i64: 1, 128, 384>}, {transform_indices = @transform_4, window_bounds = array<i64: 1, 128, 128>}, {transform_indices = @transform_5, window_bounds = array<i64: 1, 128, 512>}, {transform_indices = @transform_6, window_bounds = array<i64: 1, 512, 128>}, {transform_indices = @transform_7, window_bounds = array<i64: 1, 1, 384>}, {transform_indices = @transform_8, window_bounds = array<i64: 1, 1, 512>}, {transform_indices = @transform_9, window_bounds = array<i64: 1, 6, 128>}, {transform_indices = @transform_10, window_bounds = array<i64: 1, 16, 128>}]} {
    %c0_i32 = arith.constant 0 : i32
    %0 = arith.cmpi eq, %arg1, %c0_i32 : i32
    %1 = arith.extui %0 : i1 to i32
    %c0_i32_0 = arith.constant 0 : i32
    %2 = arith.cmpi ne, %1, %c0_i32_0 : i32
    scf.if %2 {
      %c0_106 = arith.constant 0 : index
      %c0_107 = arith.constant 0 : index
      %c0_108 = arith.constant 0 : index
      %304 = vector.load %arg2[%c0_106, %c0_107, %c0_108] : memref<1x32x128xf32, #tpu.memory_space<vmem>>, vector<1x32x128xf32>
      %305 = vector.shape_cast %304 : vector<1x32x128xf32> to vector<32x128xf32>
      %c0_109 = arith.constant 0 : index
      %c0_110 = arith.constant 0 : index
      %306 = vector.load %arg13[%c0_109, %c0_110] : memref<32x128xf32, #tpu.memory_space<vmem>>, vector<32x128xf32>
      tpu.vector_store %arg13[%c0_109, %c0_110], %305 {strides = array<i32>} : memref<32x128xf32, #tpu.memory_space<vmem>>, vector<32x128xf32>,
    } else {
    }
    %c0 = arith.constant 0 : index
    %c0_1 = arith.constant 0 : index
    %3 = vector.load %arg13[%c0, %c0_1] : memref<32x128xf32, #tpu.memory_space<vmem>>, vector<32x128xf32>
    %c0_2 = arith.constant 0 : index
    %c0_3 = arith.constant 0 : index
    %c0_4 = arith.constant 0 : index
    %4 = vector.load %arg11[%c0_2, %c0_3, %c0_4] : memref<1x6x128xf32, #tpu.memory_space<vmem>>, vector<1x6x128xf32>
    %5 = vector.shape_cast %4 : vector<1x6x128xf32> to vector<6x128xf32>
    %6 = vector.extract_strided_slice %5 {offsets = [0, 0], sizes = [1, 128], strides = [1, 1]} : vector<6x128xf32> to vector<1x128xf32>
    %7 = vector.extract_strided_slice %5 {offsets = [1, 0], sizes = [1, 128], strides = [1, 1]} : vector<6x128xf32> to vector<1x128xf32>
    %8 = vector.extract_strided_slice %5 {offsets = [2, 0], sizes = [1, 128], strides = [1, 1]} : vector<6x128xf32> to vector<1x128xf32>
    %9 = vector.extract_strided_slice %5 {offsets = [3, 0], sizes = [1, 128], strides = [1, 1]} : vector<6x128xf32> to vector<1x128xf32>
    %10 = vector.extract_strided_slice %5 {offsets = [4, 0], sizes = [1, 128], strides = [1, 1]} : vector<6x128xf32> to vector<1x128xf32>
    %11 = vector.extract_strided_slice %5 {offsets = [5, 0], sizes = [1, 128], strides = [1, 1]} : vector<6x128xf32> to vector<1x128xf32>
    %12 = arith.truncf %3 : vector<32x128xf32> to vector<32x128xbf16>
    %c0_5 = arith.constant 0 : index
    %c0_6 = arith.constant 0 : index
    %c0_7 = arith.constant 0 : index
    %13 = vector.load %arg5[%c0_5, %c0_6, %c0_7] : memref<1x128x384xbf16, #tpu.memory_space<vmem>>, vector<1x128x384xbf16>
    %14 = vector.shape_cast %13 : vector<1x128x384xbf16> to vector<128x384xbf16>
    %cst = arith.constant dense<0.000000e+00> : vector<32x384xf32>
    %15 = tpu.matmul %12, %14, %cst {dimension_numbers = #tpu.dot_dimension_numbers<[1], [0], [0], [1], [0, 0, 1, 1], [], []>} : vector<32x128xbf16>, vector<128x384xbf16>, vector<32x384xf32> -> vector<32x384xf32>
    %c0_8 = arith.constant 0 : index
    %c0_9 = arith.constant 0 : index
    %c0_10 = arith.constant 0 : index
    %16 = vector.load %arg9[%c0_8, %c0_9, %c0_10] : memref<1x1x384xf32, #tpu.memory_space<vmem>>, vector<1x1x384xf32>
    %17 = vector.shape_cast %16 : vector<1x1x384xf32> to vector<1x384xf32>
    %18 = vector.broadcast %17 : vector<1x384xf32> to vector<32x384xf32>
    %19 = arith.addf %15, %18 : vector<32x384xf32>
    %20 = vector.extract_strided_slice %19 {offsets = [0, 0], sizes = [32, 16], strides = [1, 1]} : vector<32x384xf32> to vector<32x16xf32>
    %21 = vector.extract_strided_slice %19 {offsets = [0, 128], sizes = [32, 16], strides = [1, 1]} : vector<32x384xf32> to vector<32x16xf32>
    %22 = vector.extract_strided_slice %19 {offsets = [0, 256], sizes = [32, 16], strides = [1, 1]} : vector<32x384xf32> to vector<32x16xf32>
    %23 = arith.truncf %20 : vector<32x16xf32> to vector<32x16xbf16>
    %24 = arith.truncf %21 : vector<32x16xf32> to vector<32x16xbf16>
    %cst_11 = arith.constant dense<0.000000e+00> : vector<32x32xf32>
    %25 = tpu.matmul %23, %24, %cst_11 {dimension_numbers = #tpu.dot_dimension_numbers<[1], [1], [0], [0], [0, 0, 1, 0], [], []>} : vector<32x16xbf16>, vector<32x16xbf16>, vector<32x32xf32> -> vector<32x32xf32>
    %cst_12 = arith.constant 2.500000e-01 : f32
    %26 = vector.broadcast %cst_12 : f32 to vector<32x32xf32>
    %27 = arith.mulf %25, %26 : vector<32x32xf32>
    %cst_13 = arith.constant dense<0xFF800000> : vector<32xf32>
    %28 = vector.multi_reduction <maximumf>, %27, %cst_13 [1] : vector<32x32xf32> to vector<32xf32>
    %29 = vector.shape_cast %28 : vector<32xf32> to vector<32x1xf32>
    %30 = vector.broadcast %29 : vector<32x1xf32> to vector<32x32xf32>
    %31 = arith.subf %27, %30 : vector<32x32xf32>
    %32 = math.exp %31 : vector<32x32xf32>
    %cst_14 = arith.constant dense<0.000000e+00> : vector<32xf32>
    %33 = vector.multi_reduction <add>, %32, %cst_14 [1] : vector<32x32xf32> to vector<32xf32>
    %34 = vector.shape_cast %33 : vector<32xf32> to vector<32x1xf32>
    %35 = tpu.reciprocal %34 {approx = true} : vector<32x1xf32> -> vector<32x1xf32>
    %36 = vector.broadcast %35 : vector<32x1xf32> to vector<32x32xf32>
    %37 = arith.mulf %32, %36 : vector<32x32xf32>
    %38 = arith.truncf %37 : vector<32x32xf32> to vector<32x32xbf16>
    %39 = arith.truncf %22 : vector<32x16xf32> to vector<32x16xbf16>
    %cst_15 = arith.constant dense<0.000000e+00> : vector<32x16xf32>
    %40 = tpu.matmul %38, %39, %cst_15 {dimension_numbers = #tpu.dot_dimension_numbers<[1], [0], [0], [1], [0, 0, 1, 1], [], []>} : vector<32x32xbf16>, vector<32x16xbf16>, vector<32x16xf32> -> vector<32x16xf32>
    %c0_16 = arith.constant 0 : index
    %c0_17 = arith.constant 0 : index
    %41 = vector.load %arg14[%c0_16, %c0_17] : memref<32x128xf32, #tpu.memory_space<vmem>>, vector<32x16xf32>
    tpu.vector_store %arg14[%c0_16, %c0_17], %40 {strides = array<i32>} : memref<32x128xf32, #tpu.memory_space<vmem>>, vector<32x16xf32>,
    %42 = vector.extract_strided_slice %19 {offsets = [0, 16], sizes = [32, 16], strides = [1, 1]} : vector<32x384xf32> to vector<32x16xf32>
    %43 = vector.extract_strided_slice %19 {offsets = [0, 144], sizes = [32, 16], strides = [1, 1]} : vector<32x384xf32> to vector<32x16xf32>
    %44 = vector.extract_strided_slice %19 {offsets = [0, 272], sizes = [32, 16], strides = [1, 1]} : vector<32x384xf32> to vector<32x16xf32>
    %45 = arith.truncf %42 : vector<32x16xf32> to vector<32x16xbf16>
    %46 = arith.truncf %43 : vector<32x16xf32> to vector<32x16xbf16>
    %cst_18 = arith.constant dense<0.000000e+00> : vector<32x32xf32>
    %47 = tpu.matmul %45, %46, %cst_18 {dimension_numbers = #tpu.dot_dimension_numbers<[1], [1], [0], [0], [0, 0, 1, 0], [], []>} : vector<32x16xbf16>, vector<32x16xbf16>, vector<32x32xf32> -> vector<32x32xf32>
    %cst_19 = arith.constant 2.500000e-01 : f32
    %48 = vector.broadcast %cst_19 : f32 to vector<32x32xf32>
    %49 = arith.mulf %47, %48 : vector<32x32xf32>
    %cst_20 = arith.constant dense<0xFF800000> : vector<32xf32>
    %50 = vector.multi_reduction <maximumf>, %49, %cst_20 [1] : vector<32x32xf32> to vector<32xf32>
    %51 = vector.shape_cast %50 : vector<32xf32> to vector<32x1xf32>
    %52 = vector.broadcast %51 : vector<32x1xf32> to vector<32x32xf32>
    %53 = arith.subf %49, %52 : vector<32x32xf32>
    %54 = math.exp %53 : vector<32x32xf32>
    %cst_21 = arith.constant dense<0.000000e+00> : vector<32xf32>
    %55 = vector.multi_reduction <add>, %54, %cst_21 [1] : vector<32x32xf32> to vector<32xf32>
    %56 = vector.shape_cast %55 : vector<32xf32> to vector<32x1xf32>
    %57 = tpu.reciprocal %56 {approx = true} : vector<32x1xf32> -> vector<32x1xf32>
    %58 = vector.broadcast %57 : vector<32x1xf32> to vector<32x32xf32>
    %59 = arith.mulf %54, %58 : vector<32x32xf32>
    %60 = arith.truncf %59 : vector<32x32xf32> to vector<32x32xbf16>
    %61 = arith.truncf %44 : vector<32x16xf32> to vector<32x16xbf16>
    %cst_22 = arith.constant dense<0.000000e+00> : vector<32x16xf32>
    %62 = tpu.matmul %60, %61, %cst_22 {dimension_numbers = #tpu.dot_dimension_numbers<[1], [0], [0], [1], [0, 0, 1, 1], [], []>} : vector<32x32xbf16>, vector<32x16xbf16>, vector<32x16xf32> -> vector<32x16xf32>
    %c0_23 = arith.constant 0 : index
    %c16 = arith.constant 16 : index
    %63 = vector.load %arg14[%c0_23, %c16] : memref<32x128xf32, #tpu.memory_space<vmem>>, vector<32x16xf32>
    tpu.vector_store %arg14[%c0_23, %c16], %62 {strides = array<i32>} : memref<32x128xf32, #tpu.memory_space<vmem>>, vector<32x16xf32>,
    %64 = vector.extract_strided_slice %19 {offsets = [0, 32], sizes = [32, 16], strides = [1, 1]} : vector<32x384xf32> to vector<32x16xf32>
    %65 = vector.extract_strided_slice %19 {offsets = [0, 160], sizes = [32, 16], strides = [1, 1]} : vector<32x384xf32> to vector<32x16xf32>
    %66 = vector.extract_strided_slice %19 {offsets = [0, 288], sizes = [32, 16], strides = [1, 1]} : vector<32x384xf32> to vector<32x16xf32>
    %67 = arith.truncf %64 : vector<32x16xf32> to vector<32x16xbf16>
    %68 = arith.truncf %65 : vector<32x16xf32> to vector<32x16xbf16>
    %cst_24 = arith.constant dense<0.000000e+00> : vector<32x32xf32>
    %69 = tpu.matmul %67, %68, %cst_24 {dimension_numbers = #tpu.dot_dimension_numbers<[1], [1], [0], [0], [0, 0, 1, 0], [], []>} : vector<32x16xbf16>, vector<32x16xbf16>, vector<32x32xf32> -> vector<32x32xf32>
    %cst_25 = arith.constant 2.500000e-01 : f32
    %70 = vector.broadcast %cst_25 : f32 to vector<32x32xf32>
    %71 = arith.mulf %69, %70 : vector<32x32xf32>
    %cst_26 = arith.constant dense<0xFF800000> : vector<32xf32>
    %72 = vector.multi_reduction <maximumf>, %71, %cst_26 [1] : vector<32x32xf32> to vector<32xf32>
    %73 = vector.shape_cast %72 : vector<32xf32> to vector<32x1xf32>
    %74 = vector.broadcast %73 : vector<32x1xf32> to vector<32x32xf32>
    %75 = arith.subf %71, %74 : vector<32x32xf32>
    %76 = math.exp %75 : vector<32x32xf32>
    %cst_27 = arith.constant dense<0.000000e+00> : vector<32xf32>
    %77 = vector.multi_reduction <add>, %76, %cst_27 [1] : vector<32x32xf32> to vector<32xf32>
    %78 = vector.shape_cast %77 : vector<32xf32> to vector<32x1xf32>
    %79 = tpu.reciprocal %78 {approx = true} : vector<32x1xf32> -> vector<32x1xf32>
    %80 = vector.broadcast %79 : vector<32x1xf32> to vector<32x32xf32>
    %81 = arith.mulf %76, %80 : vector<32x32xf32>
    %82 = arith.truncf %81 : vector<32x32xf32> to vector<32x32xbf16>
    %83 = arith.truncf %66 : vector<32x16xf32> to vector<32x16xbf16>
    %cst_28 = arith.constant dense<0.000000e+00> : vector<32x16xf32>
    %84 = tpu.matmul %82, %83, %cst_28 {dimension_numbers = #tpu.dot_dimension_numbers<[1], [0], [0], [1], [0, 0, 1, 1], [], []>} : vector<32x32xbf16>, vector<32x16xbf16>, vector<32x16xf32> -> vector<32x16xf32>
    %c0_29 = arith.constant 0 : index
    %c32 = arith.constant 32 : index
    %85 = vector.load %arg14[%c0_29, %c32] : memref<32x128xf32, #tpu.memory_space<vmem>>, vector<32x16xf32>
    tpu.vector_store %arg14[%c0_29, %c32], %84 {strides = array<i32>} : memref<32x128xf32, #tpu.memory_space<vmem>>, vector<32x16xf32>,
    %86 = vector.extract_strided_slice %19 {offsets = [0, 48], sizes = [32, 16], strides = [1, 1]} : vector<32x384xf32> to vector<32x16xf32>
    %87 = vector.extract_strided_slice %19 {offsets = [0, 176], sizes = [32, 16], strides = [1, 1]} : vector<32x384xf32> to vector<32x16xf32>
    %88 = vector.extract_strided_slice %19 {offsets = [0, 304], sizes = [32, 16], strides = [1, 1]} : vector<32x384xf32> to vector<32x16xf32>
    %89 = arith.truncf %86 : vector<32x16xf32> to vector<32x16xbf16>
    %90 = arith.truncf %87 : vector<32x16xf32> to vector<32x16xbf16>
    %cst_30 = arith.constant dense<0.000000e+00> : vector<32x32xf32>
    %91 = tpu.matmul %89, %90, %cst_30 {dimension_numbers = #tpu.dot_dimension_numbers<[1], [1], [0], [0], [0, 0, 1, 0], [], []>} : vector<32x16xbf16>, vector<32x16xbf16>, vector<32x32xf32> -> vector<32x32xf32>
    %cst_31 = arith.constant 2.500000e-01 : f32
    %92 = vector.broadcast %cst_31 : f32 to vector<32x32xf32>
    %93 = arith.mulf %91, %92 : vector<32x32xf32>
    %cst_32 = arith.constant dense<0xFF800000> : vector<32xf32>
    %94 = vector.multi_reduction <maximumf>, %93, %cst_32 [1] : vector<32x32xf32> to vector<32xf32>
    %95 = vector.shape_cast %94 : vector<32xf32> to vector<32x1xf32>
    %96 = vector.broadcast %95 : vector<32x1xf32> to vector<32x32xf32>
    %97 = arith.subf %93, %96 : vector<32x32xf32>
    %98 = math.exp %97 : vector<32x32xf32>
    %cst_33 = arith.constant dense<0.000000e+00> : vector<32xf32>
    %99 = vector.multi_reduction <add>, %98, %cst_33 [1] : vector<32x32xf32> to vector<32xf32>
    %100 = vector.shape_cast %99 : vector<32xf32> to vector<32x1xf32>
    %101 = tpu.reciprocal %100 {approx = true} : vector<32x1xf32> -> vector<32x1xf32>
    %102 = vector.broadcast %101 : vector<32x1xf32> to vector<32x32xf32>
    %103 = arith.mulf %98, %102 : vector<32x32xf32>
    %104 = arith.truncf %103 : vector<32x32xf32> to vector<32x32xbf16>
    %105 = arith.truncf %88 : vector<32x16xf32> to vector<32x16xbf16>
    %cst_34 = arith.constant dense<0.000000e+00> : vector<32x16xf32>
    %106 = tpu.matmul %104, %105, %cst_34 {dimension_numbers = #tpu.dot_dimension_numbers<[1], [0], [0], [1], [0, 0, 1, 1], [], []>} : vector<32x32xbf16>, vector<32x16xbf16>, vector<32x16xf32> -> vector<32x16xf32>
    %c0_35 = arith.constant 0 : index
    %c48 = arith.constant 48 : index
    %107 = vector.load %arg14[%c0_35, %c48] : memref<32x128xf32, #tpu.memory_space<vmem>>, vector<32x16xf32>
    tpu.vector_store %arg14[%c0_35, %c48], %106 {strides = array<i32>} : memref<32x128xf32, #tpu.memory_space<vmem>>, vector<32x16xf32>,
    %108 = vector.extract_strided_slice %19 {offsets = [0, 64], sizes = [32, 16], strides = [1, 1]} : vector<32x384xf32> to vector<32x16xf32>
    %109 = vector.extract_strided_slice %19 {offsets = [0, 192], sizes = [32, 16], strides = [1, 1]} : vector<32x384xf32> to vector<32x16xf32>
    %110 = vector.extract_strided_slice %19 {offsets = [0, 320], sizes = [32, 16], strides = [1, 1]} : vector<32x384xf32> to vector<32x16xf32>
    %111 = arith.truncf %108 : vector<32x16xf32> to vector<32x16xbf16>
    %112 = arith.truncf %109 : vector<32x16xf32> to vector<32x16xbf16>
    %cst_36 = arith.constant dense<0.000000e+00> : vector<32x32xf32>
    %113 = tpu.matmul %111, %112, %cst_36 {dimension_numbers = #tpu.dot_dimension_numbers<[1], [1], [0], [0], [0, 0, 1, 0], [], []>} : vector<32x16xbf16>, vector<32x16xbf16>, vector<32x32xf32> -> vector<32x32xf32>
    %cst_37 = arith.constant 2.500000e-01 : f32
    %114 = vector.broadcast %cst_37 : f32 to vector<32x32xf32>
    %115 = arith.mulf %113, %114 : vector<32x32xf32>
    %cst_38 = arith.constant dense<0xFF800000> : vector<32xf32>
    %116 = vector.multi_reduction <maximumf>, %115, %cst_38 [1] : vector<32x32xf32> to vector<32xf32>
    %117 = vector.shape_cast %116 : vector<32xf32> to vector<32x1xf32>
    %118 = vector.broadcast %117 : vector<32x1xf32> to vector<32x32xf32>
    %119 = arith.subf %115, %118 : vector<32x32xf32>
    %120 = math.exp %119 : vector<32x32xf32>
    %cst_39 = arith.constant dense<0.000000e+00> : vector<32xf32>
    %121 = vector.multi_reduction <add>, %120, %cst_39 [1] : vector<32x32xf32> to vector<32xf32>
    %122 = vector.shape_cast %121 : vector<32xf32> to vector<32x1xf32>
    %123 = tpu.reciprocal %122 {approx = true} : vector<32x1xf32> -> vector<32x1xf32>
    %124 = vector.broadcast %123 : vector<32x1xf32> to vector<32x32xf32>
    %125 = arith.mulf %120, %124 : vector<32x32xf32>
    %126 = arith.truncf %125 : vector<32x32xf32> to vector<32x32xbf16>
    %127 = arith.truncf %110 : vector<32x16xf32> to vector<32x16xbf16>
    %cst_40 = arith.constant dense<0.000000e+00> : vector<32x16xf32>
    %128 = tpu.matmul %126, %127, %cst_40 {dimension_numbers = #tpu.dot_dimension_numbers<[1], [0], [0], [1], [0, 0, 1, 1], [], []>} : vector<32x32xbf16>, vector<32x16xbf16>, vector<32x16xf32> -> vector<32x16xf32>
    %c0_41 = arith.constant 0 : index
    %c64 = arith.constant 64 : index
    %129 = vector.load %arg14[%c0_41, %c64] : memref<32x128xf32, #tpu.memory_space<vmem>>, vector<32x16xf32>
    tpu.vector_store %arg14[%c0_41, %c64], %128 {strides = array<i32>} : memref<32x128xf32, #tpu.memory_space<vmem>>, vector<32x16xf32>,
    %130 = vector.extract_strided_slice %19 {offsets = [0, 80], sizes = [32, 16], strides = [1, 1]} : vector<32x384xf32> to vector<32x16xf32>
    %131 = vector.extract_strided_slice %19 {offsets = [0, 208], sizes = [32, 16], strides = [1, 1]} : vector<32x384xf32> to vector<32x16xf32>
    %132 = vector.extract_strided_slice %19 {offsets = [0, 336], sizes = [32, 16], strides = [1, 1]} : vector<32x384xf32> to vector<32x16xf32>
    %133 = arith.truncf %130 : vector<32x16xf32> to vector<32x16xbf16>
    %134 = arith.truncf %131 : vector<32x16xf32> to vector<32x16xbf16>
    %cst_42 = arith.constant dense<0.000000e+00> : vector<32x32xf32>
    %135 = tpu.matmul %133, %134, %cst_42 {dimension_numbers = #tpu.dot_dimension_numbers<[1], [1], [0], [0], [0, 0, 1, 0], [], []>} : vector<32x16xbf16>, vector<32x16xbf16>, vector<32x32xf32> -> vector<32x32xf32>
    %cst_43 = arith.constant 2.500000e-01 : f32
    %136 = vector.broadcast %cst_43 : f32 to vector<32x32xf32>
    %137 = arith.mulf %135, %136 : vector<32x32xf32>
    %cst_44 = arith.constant dense<0xFF800000> : vector<32xf32>
    %138 = vector.multi_reduction <maximumf>, %137, %cst_44 [1] : vector<32x32xf32> to vector<32xf32>
    %139 = vector.shape_cast %138 : vector<32xf32> to vector<32x1xf32>
    %140 = vector.broadcast %139 : vector<32x1xf32> to vector<32x32xf32>
    %141 = arith.subf %137, %140 : vector<32x32xf32>
    %142 = math.exp %141 : vector<32x32xf32>
    %cst_45 = arith.constant dense<0.000000e+00> : vector<32xf32>
    %143 = vector.multi_reduction <add>, %142, %cst_45 [1] : vector<32x32xf32> to vector<32xf32>
    %144 = vector.shape_cast %143 : vector<32xf32> to vector<32x1xf32>
    %145 = tpu.reciprocal %144 {approx = true} : vector<32x1xf32> -> vector<32x1xf32>
    %146 = vector.broadcast %145 : vector<32x1xf32> to vector<32x32xf32>
    %147 = arith.mulf %142, %146 : vector<32x32xf32>
    %148 = arith.truncf %147 : vector<32x32xf32> to vector<32x32xbf16>
    %149 = arith.truncf %132 : vector<32x16xf32> to vector<32x16xbf16>
    %cst_46 = arith.constant dense<0.000000e+00> : vector<32x16xf32>
    %150 = tpu.matmul %148, %149, %cst_46 {dimension_numbers = #tpu.dot_dimension_numbers<[1], [0], [0], [1], [0, 0, 1, 1], [], []>} : vector<32x32xbf16>, vector<32x16xbf16>, vector<32x16xf32> -> vector<32x16xf32>
    %c0_47 = arith.constant 0 : index
    %c80 = arith.constant 80 : index
    %151 = vector.load %arg14[%c0_47, %c80] : memref<32x128xf32, #tpu.memory_space<vmem>>, vector<32x16xf32>
    tpu.vector_store %arg14[%c0_47, %c80], %150 {strides = array<i32>} : memref<32x128xf32, #tpu.memory_space<vmem>>, vector<32x16xf32>,
    %152 = vector.extract_strided_slice %19 {offsets = [0, 96], sizes = [32, 16], strides = [1, 1]} : vector<32x384xf32> to vector<32x16xf32>
    %153 = vector.extract_strided_slice %19 {offsets = [0, 224], sizes = [32, 16], strides = [1, 1]} : vector<32x384xf32> to vector<32x16xf32>
    %154 = vector.extract_strided_slice %19 {offsets = [0, 352], sizes = [32, 16], strides = [1, 1]} : vector<32x384xf32> to vector<32x16xf32>
    %155 = arith.truncf %152 : vector<32x16xf32> to vector<32x16xbf16>
    %156 = arith.truncf %153 : vector<32x16xf32> to vector<32x16xbf16>
    %cst_48 = arith.constant dense<0.000000e+00> : vector<32x32xf32>
    %157 = tpu.matmul %155, %156, %cst_48 {dimension_numbers = #tpu.dot_dimension_numbers<[1], [1], [0], [0], [0, 0, 1, 0], [], []>} : vector<32x16xbf16>, vector<32x16xbf16>, vector<32x32xf32> -> vector<32x32xf32>
    %cst_49 = arith.constant 2.500000e-01 : f32
    %158 = vector.broadcast %cst_49 : f32 to vector<32x32xf32>
    %159 = arith.mulf %157, %158 : vector<32x32xf32>
    %cst_50 = arith.constant dense<0xFF800000> : vector<32xf32>
    %160 = vector.multi_reduction <maximumf>, %159, %cst_50 [1] : vector<32x32xf32> to vector<32xf32>
    %161 = vector.shape_cast %160 : vector<32xf32> to vector<32x1xf32>
    %162 = vector.broadcast %161 : vector<32x1xf32> to vector<32x32xf32>
    %163 = arith.subf %159, %162 : vector<32x32xf32>
    %164 = math.exp %163 : vector<32x32xf32>
    %cst_51 = arith.constant dense<0.000000e+00> : vector<32xf32>
    %165 = vector.multi_reduction <add>, %164, %cst_51 [1] : vector<32x32xf32> to vector<32xf32>
    %166 = vector.shape_cast %165 : vector<32xf32> to vector<32x1xf32>
    %167 = tpu.reciprocal %166 {approx = true} : vector<32x1xf32> -> vector<32x1xf32>
    %168 = vector.broadcast %167 : vector<32x1xf32> to vector<32x32xf32>
    %169 = arith.mulf %164, %168 : vector<32x32xf32>
    %170 = arith.truncf %169 : vector<32x32xf32> to vector<32x32xbf16>
    %171 = arith.truncf %154 : vector<32x16xf32> to vector<32x16xbf16>
    %cst_52 = arith.constant dense<0.000000e+00> : vector<32x16xf32>
    %172 = tpu.matmul %170, %171, %cst_52 {dimension_numbers = #tpu.dot_dimension_numbers<[1], [0], [0], [1], [0, 0, 1, 1], [], []>} : vector<32x32xbf16>, vector<32x16xbf16>, vector<32x16xf32> -> vector<32x16xf32>
    %c0_53 = arith.constant 0 : index
    %c96 = arith.constant 96 : index
    %173 = vector.load %arg14[%c0_53, %c96] : memref<32x128xf32, #tpu.memory_space<vmem>>, vector<32x16xf32>
    tpu.vector_store %arg14[%c0_53, %c96], %172 {strides = array<i32>} : memref<32x128xf32, #tpu.memory_space<vmem>>, vector<32x16xf32>,
    %174 = vector.extract_strided_slice %19 {offsets = [0, 112], sizes = [32, 16], strides = [1, 1]} : vector<32x384xf32> to vector<32x16xf32>
    %175 = vector.extract_strided_slice %19 {offsets = [0, 240], sizes = [32, 16], strides = [1, 1]} : vector<32x384xf32> to vector<32x16xf32>
    %176 = vector.extract_strided_slice %19 {offsets = [0, 368], sizes = [32, 16], strides = [1, 1]} : vector<32x384xf32> to vector<32x16xf32>
    %177 = arith.truncf %174 : vector<32x16xf32> to vector<32x16xbf16>
    %178 = arith.truncf %175 : vector<32x16xf32> to vector<32x16xbf16>
    %cst_54 = arith.constant dense<0.000000e+00> : vector<32x32xf32>
    %179 = tpu.matmul %177, %178, %cst_54 {dimension_numbers = #tpu.dot_dimension_numbers<[1], [1], [0], [0], [0, 0, 1, 0], [], []>} : vector<32x16xbf16>, vector<32x16xbf16>, vector<32x32xf32> -> vector<32x32xf32>
    %cst_55 = arith.constant 2.500000e-01 : f32
    %180 = vector.broadcast %cst_55 : f32 to vector<32x32xf32>
    %181 = arith.mulf %179, %180 : vector<32x32xf32>
    %cst_56 = arith.constant dense<0xFF800000> : vector<32xf32>
    %182 = vector.multi_reduction <maximumf>, %181, %cst_56 [1] : vector<32x32xf32> to vector<32xf32>
    %183 = vector.shape_cast %182 : vector<32xf32> to vector<32x1xf32>
    %184 = vector.broadcast %183 : vector<32x1xf32> to vector<32x32xf32>
    %185 = arith.subf %181, %184 : vector<32x32xf32>
    %186 = math.exp %185 : vector<32x32xf32>
    %cst_57 = arith.constant dense<0.000000e+00> : vector<32xf32>
    %187 = vector.multi_reduction <add>, %186, %cst_57 [1] : vector<32x32xf32> to vector<32xf32>
    %188 = vector.shape_cast %187 : vector<32xf32> to vector<32x1xf32>
    %189 = tpu.reciprocal %188 {approx = true} : vector<32x1xf32> -> vector<32x1xf32>
    %190 = vector.broadcast %189 : vector<32x1xf32> to vector<32x32xf32>
    %191 = arith.mulf %186, %190 : vector<32x32xf32>
    %192 = arith.truncf %191 : vector<32x32xf32> to vector<32x32xbf16>
    %193 = arith.truncf %176 : vector<32x16xf32> to vector<32x16xbf16>
    %cst_58 = arith.constant dense<0.000000e+00> : vector<32x16xf32>
    %194 = tpu.matmul %192, %193, %cst_58 {dimension_numbers = #tpu.dot_dimension_numbers<[1], [0], [0], [1], [0, 0, 1, 1], [], []>} : vector<32x32xbf16>, vector<32x16xbf16>, vector<32x16xf32> -> vector<32x16xf32>
    %c0_59 = arith.constant 0 : index
    %c112 = arith.constant 112 : index
    %195 = vector.load %arg14[%c0_59, %c112] : memref<32x128xf32, #tpu.memory_space<vmem>>, vector<32x16xf32>
    tpu.vector_store %arg14[%c0_59, %c112], %194 {strides = array<i32>} : memref<32x128xf32, #tpu.memory_space<vmem>>, vector<32x16xf32>,
    %c0_60 = arith.constant 0 : index
    %c0_61 = arith.constant 0 : index
    %196 = vector.load %arg14[%c0_60, %c0_61] : memref<32x128xf32, #tpu.memory_space<vmem>>, vector<32x128xf32>
    %197 = arith.truncf %196 : vector<32x128xf32> to vector<32x128xbf16>
    %c0_62 = arith.constant 0 : index
    %c0_63 = arith.constant 0 : index
    %c0_64 = arith.constant 0 : index
    %198 = vector.load %arg6[%c0_62, %c0_63, %c0_64] : memref<1x128x128xbf16, #tpu.memory_space<vmem>>, vector<1x128x128xbf16>
    %199 = vector.shape_cast %198 : vector<1x128x128xbf16> to vector<128x128xbf16>
    %cst_65 = arith.constant dense<0.000000e+00> : vector<32x128xf32>
    %200 = tpu.matmul %197, %199, %cst_65 {dimension_numbers = #tpu.dot_dimension_numbers<[1], [0], [0], [1], [0, 0, 1, 1], [], []>} : vector<32x128xbf16>, vector<128x128xbf16>, vector<32x128xf32> -> vector<32x128xf32>
    %201 = vector.broadcast %6 : vector<1x128xf32> to vector<32x128xf32>
    %202 = arith.addf %200, %201 : vector<32x128xf32>
    %203 = arith.addf %3, %202 : vector<32x128xf32>
    %cst_66 = arith.constant dense<0.000000e+00> : vector<32xf32>
    %204 = vector.multi_reduction <add>, %203, %cst_66 [1] : vector<32x128xf32> to vector<32xf32>
    %205 = vector.shape_cast %204 : vector<32xf32> to vector<32x1xf32>
    %cst_67 = arith.constant 1.280000e+02 : f32
    %206 = vector.broadcast %cst_67 : f32 to vector<32x1xf32>
    %207 = arith.divf %205, %206 : vector<32x1xf32>
    %208 = vector.broadcast %207 : vector<32x1xf32> to vector<32x128xf32>
    %209 = arith.subf %203, %208 : vector<32x128xf32>
    %210 = arith.mulf %209, %209 : vector<32x128xf32>
    %cst_68 = arith.constant dense<0.000000e+00> : vector<32xf32>
    %211 = vector.multi_reduction <add>, %210, %cst_68 [1] : vector<32x128xf32> to vector<32xf32>
    %212 = vector.shape_cast %211 : vector<32xf32> to vector<32x1xf32>
    %cst_69 = arith.constant 1.280000e+02 : f32
    %213 = vector.broadcast %cst_69 : f32 to vector<32x1xf32>
    %214 = arith.divf %212, %213 : vector<32x1xf32>
    %cst_70 = arith.constant 9.99999974E-6 : f32
    %215 = vector.broadcast %cst_70 : f32 to vector<32x1xf32>
    %216 = arith.addf %214, %215 : vector<32x1xf32>
    %217 = math.rsqrt %216 : vector<32x1xf32>
    %218 = vector.broadcast %217 : vector<32x1xf32> to vector<32x128xf32>
    %219 = arith.mulf %209, %218 : vector<32x128xf32>
    %220 = vector.broadcast %7 : vector<1x128xf32> to vector<32x128xf32>
    %221 = arith.mulf %219, %220 : vector<32x128xf32>
    %222 = vector.broadcast %8 : vector<1x128xf32> to vector<32x128xf32>
    %223 = arith.addf %221, %222 : vector<32x128xf32>
    %224 = arith.truncf %223 : vector<32x128xf32> to vector<32x128xbf16>
    %c0_71 = arith.constant 0 : index
    %c0_72 = arith.constant 0 : index
    %c0_73 = arith.constant 0 : index
    %225 = vector.load %arg7[%c0_71, %c0_72, %c0_73] : memref<1x128x512xbf16, #tpu.memory_space<vmem>>, vector<1x128x512xbf16>
    %226 = vector.shape_cast %225 : vector<1x128x512xbf16> to vector<128x512xbf16>
    %cst_74 = arith.constant dense<0.000000e+00> : vector<32x512xf32>
    %227 = tpu.matmul %224, %226, %cst_74 {dimension_numbers = #tpu.dot_dimension_numbers<[1], [0], [0], [1], [0, 0, 1, 1], [], []>} : vector<32x128xbf16>, vector<128x512xbf16>, vector<32x512xf32> -> vector<32x512xf32>
    %c0_75 = arith.constant 0 : index
    %c0_76 = arith.constant 0 : index
    %c0_77 = arith.constant 0 : index
    %228 = vector.load %arg10[%c0_75, %c0_76, %c0_77] : memref<1x1x512xf32, #tpu.memory_space<vmem>>, vector<1x1x512xf32>
    %229 = vector.shape_cast %228 : vector<1x1x512xf32> to vector<1x512xf32>
    %230 = vector.broadcast %229 : vector<1x512xf32> to vector<32x512xf32>
    %231 = arith.addf %227, %230 : vector<32x512xf32>
    %cst_78 = arith.constant 5.000000e-01 : f32
    %232 = vector.broadcast %cst_78 : f32 to vector<32x512xf32>
    %233 = arith.mulf %232, %231 : vector<32x512xf32>
    %cst_79 = arith.constant 0.707106769 : f32
    %234 = vector.broadcast %cst_79 : f32 to vector<32x512xf32>
    %235 = arith.mulf %231, %234 : vector<32x512xf32>
    %cst_80 = arith.constant 0.000000e+00 : f32
    %236 = vector.broadcast %cst_80 : f32 to vector<32x512xf32>
    %237 = arith.cmpf oge, %235, %236 : vector<32x512xf32>
    %cst_81 = arith.constant 1.000000e+00 : f32
    %cst_82 = arith.constant -1.000000e+00 : f32
    %238 = vector.broadcast %cst_81 : f32 to vector<32x512xf32>
    %239 = vector.broadcast %cst_82 : f32 to vector<32x512xf32>
    %240 = arith.select %237, %238, %239 : vector<32x512xi1>, vector<32x512xf32>
    %241 = math.absf %235 : vector<32x512xf32>
    %cst_83 = arith.constant 0.327591091 : f32
    %242 = vector.broadcast %cst_83 : f32 to vector<32x512xf32>
    %243 = arith.mulf %242, %241 : vector<32x512xf32>
    %cst_84 = arith.constant 1.000000e+00 : f32
    %244 = vector.broadcast %cst_84 : f32 to vector<32x512xf32>
    %245 = arith.addf %244, %243 : vector<32x512xf32>
    %cst_85 = arith.constant 1.000000e+00 : f32
    %246 = vector.broadcast %cst_85 : f32 to vector<32x512xf32>
    %247 = arith.divf %246, %245 : vector<32x512xf32>
    %cst_86 = arith.constant 1.06140542 : f32
    %248 = vector.broadcast %cst_86 : f32 to vector<32x512xf32>
    %249 = arith.mulf %248, %247 : vector<32x512xf32>
    %cst_87 = arith.constant -1.45315206 : f32
    %250 = vector.broadcast %cst_87 : f32 to vector<32x512xf32>
    %251 = arith.addf %249, %250 : vector<32x512xf32>
    %252 = arith.mulf %251, %247 : vector<32x512xf32>
    %cst_88 = arith.constant 1.42141378 : f32
    %253 = vector.broadcast %cst_88 : f32 to vector<32x512xf32>
    %254 = arith.addf %252, %253 : vector<32x512xf32>
    %255 = arith.mulf %254, %247 : vector<32x512xf32>
    %cst_89 = arith.constant -0.284496725 : f32
    %256 = vector.broadcast %cst_89 : f32 to vector<32x512xf32>
    %257 = arith.addf %255, %256 : vector<32x512xf32>
    %258 = arith.mulf %257, %247 : vector<32x512xf32>
    %cst_90 = arith.constant 0.254829586 : f32
    %259 = vector.broadcast %cst_90 : f32 to vector<32x512xf32>
    %260 = arith.addf %258, %259 : vector<32x512xf32>
    %261 = arith.mulf %260, %247 : vector<32x512xf32>
    %cst_91 = arith.constant 0.000000e+00 : f32
    %262 = vector.broadcast %cst_91 : f32 to vector<32x512xf32>
    %263 = arith.subf %262, %241 : vector<32x512xf32>
    %264 = arith.mulf %263, %241 : vector<32x512xf32>
    %265 = math.exp %264 : vector<32x512xf32>
    %266 = arith.mulf %261, %265 : vector<32x512xf32>
    %cst_92 = arith.constant 1.000000e+00 : f32
    %267 = vector.broadcast %cst_92 : f32 to vector<32x512xf32>
    %268 = arith.subf %267, %266 : vector<32x512xf32>
    %269 = arith.mulf %240, %268 : vector<32x512xf32>
    %cst_93 = arith.constant 1.000000e+00 : f32
    %270 = vector.broadcast %cst_93 : f32 to vector<32x512xf32>
    %271 = arith.addf %270, %269 : vector<32x512xf32>
    %272 = arith.mulf %233, %271 : vector<32x512xf32>
    %273 = arith.truncf %272 : vector<32x512xf32> to vector<32x512xbf16>
    %c0_94 = arith.constant 0 : index
    %c0_95 = arith.constant 0 : index
    %c0_96 = arith.constant 0 : index
    %274 = vector.load %arg8[%c0_94, %c0_95, %c0_96] : memref<1x512x128xbf16, #tpu.memory_space<vmem>>, vector<1x512x128xbf16>
    %275 = vector.shape_cast %274 : vector<1x512x128xbf16> to vector<512x128xbf16>
    %cst_97 = arith.constant dense<0.000000e+00> : vector<32x128xf32>
    %276 = tpu.matmul %273, %275, %cst_97 {dimension_numbers = #tpu.dot_dimension_numbers<[1], [0], [0], [1], [0, 0, 1, 1], [], []>} : vector<32x512xbf16>, vector<512x128xbf16>, vector<32x128xf32> -> vector<32x128xf32>
    %277 = vector.broadcast %9 : vector<1x128xf32> to vector<32x128xf32>
    %278 = arith.addf %276, %277 : vector<32x128xf32>
    %279 = arith.addf %223, %278 : vector<32x128xf32>
    %cst_98 = arith.constant dense<0.000000e+00> : vector<32xf32>
    %280 = vector.multi_reduction <add>, %279, %cst_98 [1] : vector<32x128xf32> to vector<32xf32>
    %281 = vector.shape_cast %280 : vector<32xf32> to vector<32x1xf32>
    %cst_99 = arith.constant 1.280000e+02 : f32
    %282 = vector.broadcast %cst_99 : f32 to vector<32x1xf32>
    %283 = arith.divf %281, %282 : vector<32x1xf32>
    %284 = vector.broadcast %283 : vector<32x1xf32> to vector<32x128xf32>
    %285 = arith.subf %279, %284 : vector<32x128xf32>
    %286 = arith.mulf %285, %285 : vector<32x128xf32>
    %cst_100 = arith.constant dense<0.000000e+00> : vector<32xf32>
    %287 = vector.multi_reduction <add>, %286, %cst_100 [1] : vector<32x128xf32> to vector<32xf32>
    %288 = vector.shape_cast %287 : vector<32xf32> to vector<32x1xf32>
    %cst_101 = arith.constant 1.280000e+02 : f32
    %289 = vector.broadcast %cst_101 : f32 to vector<32x1xf32>
    %290 = arith.divf %288, %289 : vector<32x1xf32>
    %cst_102 = arith.constant 9.99999974E-6 : f32
    %291 = vector.broadcast %cst_102 : f32 to vector<32x1xf32>
    %292 = arith.addf %290, %291 : vector<32x1xf32>
    %293 = math.rsqrt %292 : vector<32x1xf32>
    %294 = vector.broadcast %293 : vector<32x1xf32> to vector<32x128xf32>
    %295 = arith.mulf %285, %294 : vector<32x128xf32>
    %296 = vector.broadcast %10 : vector<1x128xf32> to vector<32x128xf32>
    %297 = arith.mulf %295, %296 : vector<32x128xf32>
    %298 = vector.broadcast %11 : vector<1x128xf32> to vector<32x128xf32>
    %299 = arith.addf %297, %298 : vector<32x128xf32>
    %c0_103 = arith.constant 0 : index
    %c0_104 = arith.constant 0 : index
    %300 = vector.load %arg13[%c0_103, %c0_104] : memref<32x128xf32, #tpu.memory_space<vmem>>, vector<32x128xf32>
    tpu.vector_store %arg13[%c0_103, %c0_104], %299 {strides = array<i32>} : memref<32x128xf32, #tpu.memory_space<vmem>>, vector<32x128xf32>,
    %c2_i32 = arith.constant 2 : i32
    %301 = arith.cmpi eq, %arg1, %c2_i32 : i32
    %302 = arith.extui %301 : i1 to i32
    %c0_i32_105 = arith.constant 0 : i32
    %303 = arith.cmpi ne, %302, %c0_i32_105 : i32
    scf.if %303 {
      %c0_106 = arith.constant 0 : index
      %c0_107 = arith.constant 0 : index
      %304 = vector.load %arg3[%c0_106, %c0_107] : memref<16x32xf32, #tpu.memory_space<vmem>>, vector<16x32xf32>
      %cst_108 = arith.constant dense<0.000000e+00> : vector<16x128xf32>
      %305 = tpu.matmul %304, %299, %cst_108 {dimension_numbers = #tpu.dot_dimension_numbers<[1], [0], [0], [1], [0, 0, 1, 1], [], []>} : vector<16x32xf32>, vector<32x128xf32>, vector<16x128xf32> -> vector<16x128xf32>
      %c0_109 = arith.constant 0 : index
      %306 = memref.load %arg4[%c0_109] : memref<1xf32, #tpu.memory_space<smem>>
      %307 = vector.broadcast %306 : f32 to vector<16x128xf32>
      %308 = arith.addf %305, %307 : vector<16x128xf32>
      %c0_110 = arith.constant 0 : index
      %c0_111 = arith.constant 0 : index
      %c0_112 = arith.constant 0 : index
      %309 = vector.load %arg12[%c0_110, %c0_111, %c0_112] : memref<1x16x128xf32, #tpu.memory_space<vmem>>, vector<1x16x128xf32>
      %310 = vector.shape_cast %309 : vector<1x16x128xf32> to vector<16x128xf32>
      %311 = vector.shape_cast %308 : vector<16x128xf32> to vector<1x16x128xf32>
      tpu.vector_store %arg12[%c0_110, %c0_111, %c0_112], %311 {strides = array<i32>} : memref<1x16x128xf32, #tpu.memory_space<vmem>>, vector<1x16x128xf32>,
    } else {
    }
    return
  }
  func.func @transform_0(%arg0: i32, %arg1: i32) -> (i32, i32, i32) {
    %c0_i32 = arith.constant 0 : i32
    %c0_i32_0 = arith.constant 0 : i32
    %c0_i32_1 = arith.constant 0 : i32
    return %arg0, %c0_i32, %c0_i32_0 : i32, i32, i32
  }
  func.func @transform_1(%arg0: i32, %arg1: i32) -> (i32, i32) {
    %c0_i32 = arith.constant 0 : i32
    %c0_i32_0 = arith.constant 0 : i32
    %c0_i32_1 = arith.constant 0 : i32
    return %c0_i32, %c0_i32_0 : i32, i32
  }
  func.func @transform_2(%arg0: i32, %arg1: i32) -> i32 {
    %c0_i32 = arith.constant 0 : i32
    %c0_i32_0 = arith.constant 0 : i32
    return %c0_i32 : i32
  }
  func.func @transform_3(%arg0: i32, %arg1: i32) -> (i32, i32, i32) {
    %c0_i32 = arith.constant 0 : i32
    %c0_i32_0 = arith.constant 0 : i32
    %c0_i32_1 = arith.constant 0 : i32
    return %arg1, %c0_i32, %c0_i32_0 : i32, i32, i32
  }
  func.func @transform_4(%arg0: i32, %arg1: i32) -> (i32, i32, i32) {
    %c0_i32 = arith.constant 0 : i32
    %c0_i32_0 = arith.constant 0 : i32
    %c0_i32_1 = arith.constant 0 : i32
    return %arg1, %c0_i32, %c0_i32_0 : i32, i32, i32
  }
  func.func @transform_5(%arg0: i32, %arg1: i32) -> (i32, i32, i32) {
    %c0_i32 = arith.constant 0 : i32
    %c0_i32_0 = arith.constant 0 : i32
    %c0_i32_1 = arith.constant 0 : i32
    return %arg1, %c0_i32, %c0_i32_0 : i32, i32, i32
  }
  func.func @transform_6(%arg0: i32, %arg1: i32) -> (i32, i32, i32) {
    %c0_i32 = arith.constant 0 : i32
    %c0_i32_0 = arith.constant 0 : i32
    %c0_i32_1 = arith.constant 0 : i32
    return %arg1, %c0_i32, %c0_i32_0 : i32, i32, i32
  }
  func.func @transform_7(%arg0: i32, %arg1: i32) -> (i32, i32, i32) {
    %c0_i32 = arith.constant 0 : i32
    %c0_i32_0 = arith.constant 0 : i32
    %c0_i32_1 = arith.constant 0 : i32
    return %arg1, %c0_i32, %c0_i32_0 : i32, i32, i32
  }
  func.func @transform_8(%arg0: i32, %arg1: i32) -> (i32, i32, i32) {
    %c0_i32 = arith.constant 0 : i32
    %c0_i32_0 = arith.constant 0 : i32
    %c0_i32_1 = arith.constant 0 : i32
    return %arg1, %c0_i32, %c0_i32_0 : i32, i32, i32
  }
  func.func @transform_9(%arg0: i32, %arg1: i32) -> (i32, i32, i32) {
    %c0_i32 = arith.constant 0 : i32
    %c0_i32_0 = arith.constant 0 : i32
    %c0_i32_1 = arith.constant 0 : i32
    return %arg1, %c0_i32, %c0_i32_0 : i32, i32, i32
  }
  func.func @transform_10(%arg0: i32, %arg1: i32) -> (i32, i32, i32) {
    %c0_i32 = arith.constant 0 : i32
    %c0_i32_0 = arith.constant 0 : i32
    %c0_i32_1 = arith.constant 0 : i32
    return %arg0, %c0_i32, %c0_i32_0 : i32, i32, i32
  }
}

</mosaic_0001>

<llo_original>
// kernel: dimension_reducer_forward.1
$region0: #{dimension_reducer_forward.1}
  #allocation0 [shape = 'u32[]', space=smem, size = 0x4, offset = 0x4, fixed_abs, tag = 'smem constant byte address 0x4 - core index']
  #allocation1 [shape = 'u32[72,128]{1,0:T(1,128)}', space=vmem, size = 0x9000, scoped, tag = 'internal scratch']
  #allocation2 [shape = 'f32[32,128]{1,0:T(8,128)}', space=vmem, size = 0x4000, scoped, tag = 'scratch operand']
  #allocation3 [shape = 'f32[32,128]{1,0:T(8,128)}', space=vmem, size = 0x4000, scoped, tag = 'scratch operand']
  #allocation4 [shape = 'f32[1]{0:T(128)S(6)}', space=smem, size = 0x200, scoped, tag = 'scoped memory for dimension_reducer_forward.1']
  %s0 = inlined_call_operand.vmem [shape: f32[2,32,128], index: 0, kind: input, shape index: {}]
  %s1 = inlined_call_operand.vmem [shape: f32[16,32], index: 1, kind: input, shape index: {}]
  %s2 = inlined_call_operand.<no memory space> [shape: f32[1], index: 2, kind: input, shape index: {}]
  %s3 = inlined_call_operand.hbm [shape: bf16[3,128,384], index: 3, kind: input, shape index: {}]
  %s4 = inlined_call_operand.hbm [shape: bf16[3,128,128], index: 4, kind: input, shape index: {}]
  %s5 = inlined_call_operand.hbm [shape: bf16[3,128,512], index: 5, kind: input, shape index: {}]
  %s6 = inlined_call_operand.hbm [shape: bf16[3,512,128], index: 6, kind: input, shape index: {}]
  %s7 = inlined_call_operand.vmem [shape: f32[3,1,384], index: 7, kind: input, shape index: {}]
  %s8 = inlined_call_operand.vmem [shape: f32[3,1,512], index: 8, kind: input, shape index: {}]
  %s9 = inlined_call_operand.vmem [shape: f32[3,6,128], index: 9, kind: input, shape index: {}]
  %s10 = inlined_call_operand.hbm [shape: f32[2,16,128], index: 10, kind: output, shape index: {}]
  %s11 = sld [smem:[#allocation0]]
  $region97: #{dimension_reducer_forward.1} parent=0
    _
  %s13 = ssub.s32 1, %s11
  %s14 = scalar_select 0, %s13, %s11
  %15 = sst [smem:[#allocation4]] %s2
  $region1: #{dimension_reducer_forward.1} parent=0
    #allocation5 [shape = 'u8[196608]{0}', space=vmem, size = 0x30000, scoped, tag = 'input window, operand 3']
    #allocation6 [shape = 's32[2]{0}', space=sflag, size = 0x8, scoped, tag = 'scoped memory for dimension_reducer_forward.1']
    #allocation7 [shape = 's32[2]{0}', space=sflag, size = 0x8, scoped, tag = 'scoped memory for dimension_reducer_forward.1']
    #allocation8 [shape = 'u8[65536]{0}', space=vmem, size = 0x10000, scoped, tag = 'input window, operand 4']
    #allocation9 [shape = 's32[2]{0}', space=sflag, size = 0x8, scoped, tag = 'scoped memory for dimension_reducer_forward.1']
    #allocation10 [shape = 'u8[262144]{0}', space=vmem, size = 0x40000, scoped, tag = 'input window, operand 5']
    #allocation11 [shape = 'u8[262144]{0}', space=vmem, size = 0x40000, scoped, tag = 'input window, operand 6']
    #allocation12 [shape = 's32[2]{0}', space=sflag, size = 0x8, scoped, tag = 'scoped memory for dimension_reducer_forward.1']
    #allocation13 [shape = 'u8[16384]{0}', space=vmem, size = 0x4000, scoped, tag = 'output window, operand 0']
    %16 = vsyncpa [#allocation6], 0
    %s17 = scalar_lea.sflag [#allocation6], 1
    %18 = vsyncpa %s17, 0
    %19 = vsyncpa [#allocation9], 0
    %s20 = scalar_lea.sflag [#allocation9], 1
    %21 = vsyncpa %s20, 0
    %22 = vsyncpa [#allocation12], 0
    %s23 = scalar_lea.sflag [#allocation12], 1
    %24 = vsyncpa %s23, 0
    %25 = vsyncpa [#allocation7], 0
    %s26 = scalar_lea.sflag [#allocation7], 1
    %27 = vsyncpa %s26, 0
    loop: start=0, step=1, limit=8
    $region2: #{dimension_reducer_forward.1} parent=1 // loop_pre_header
      _
    $region3: #{dimension_reducer_forward.1} parent=1 // loop_header
      %s29 = sphi 0, %s33
      %p30 = scmp.ge.s32.totalorder %s29, 8
      %s36 = sphi 0, %s48
      %s37 = sphi 0, %s44
      %s38 = sphi 0, %s36
      %s39 = sphi 0, %s37
      %s40 = sphi 0, %s38
      %s41 = sphi 0, %s39
      %s51 = sphi 0, %s53
      %s54 = sphi 0, %s51
      %s55 = sphi 0, %s54
      %s71 = sphi 0, %s55
      %s75 = sphi 0, %s75
      %s77 = sphi 0, %s75
      %s78 = sphi 0, %s77
      %s92 = sphi 0, %s78
      %s96 = sphi 0, %s96
      %s98 = sphi 0, %s96
      %s99 = sphi 0, %s98
      %s113 = sphi 0, %s99
      %s119 = sphi 0, %s121
      %s122 = sphi 0, %s119
      %s123 = sphi 0, %s122
      %s139 = sphi 0, %s123
      %s145 = sphi 0, %s147
      %s148 = sphi 0, %s145
      %s149 = sphi 0, %s148
      %s165 = sphi 0, %s149
      %s171 = sphi 0, %s173
      %s174 = sphi 0, %s171
      %s175 = sphi 0, %s174
      %s191 = sphi 0, %s175
      %s197 = sphi 0, %s199
      %s200 = sphi 0, %s197
      %s201 = sphi 0, %s200
      %s217 = sphi 0, %s201
      %s223 = sphi 0, %s225
      %s226 = sphi 0, %s223
      %s227 = sphi 0, %s226
      %s243 = sphi 0, %s227
      %s249 = sphi 0, %s251
      %s252 = sphi 0, %s249
      %s253 = sphi 0, %s252
      %s269 = sphi 0, %s253
      %s275 = sphi 0, %s277
      %s278 = sphi 0, %s275
      %s279 = sphi 0, %s278
      %s295 = sphi 0, %s279
      %s301 = sphi 0, %s303
      %s304 = sphi 0, %s301
      %s305 = sphi 0, %s304
      %s321 = sphi 0, %s305
    $region4: #{dimension_reducer_forward.1} parent=1 // loop_header_branch
      %32 = sbr.rel (%p30) target = $region8
    $region5: #{dimension_reducer_forward.1} parent=1 // loop_body
      %s34 = ssub.s32 %s29, 1
      %s35 = ssub.s32 %s29, 2
      %s42 = sadd.s32 1, %s37
      %p43 = scmp.ge.s32.totalorder %s42, 3
      %s44 = scalar_select %p43, 0, %s42
      %s45 = sadd.s32 1, %s36
      %s46 = scalar_select %p43, %s45, %s36
      %p47 = scmp.ge.s32.totalorder %s46, 2
      %s48 = scalar_select %p47, 0, %s46
      %s49 = ssub.s32 %s36, %s48
      %p50 = scmp.eq.s32.totalorder %s49, 0
      %s52 = sadd.s32 %s51, 1
      %s53 = scalar_select %p50, %s51, %s52
      %p56 = pneg %p50
      %p57 = scmp.eq.s32.totalorder %s29, 5
      %p58 = por %p56, %p57
      %p59 = scmp.ne.s32.totalorder %s51, %s54
      %p60 = scmp.eq.s32.totalorder %s29, 0
      %p61 = por %p59, %p60
      %p62 = scmp.ne.s32.totalorder %s51, %s54
      %p63 = scmp.eq.s32.totalorder %s34, 5
      %p64 = por %p62, %p63
      %p65 = scmp.ne.s32.totalorder %s54, %s55
      %p66 = scmp.eq.s32.totalorder %s34, 0
      %p67 = por %p65, %p66
      %p68 = scmp.ne.s32.totalorder %s54, %s55
      %p69 = scmp.eq.s32.totalorder %s35, 5
      %p70 = por %p68, %p69
      %p72 = scmp.ne.s32.totalorder %s55, %s71
      %p73 = scmp.eq.s32.totalorder %s35, 0
      %p74 = por %p72, %p73
      %s76 = sadd.s32 %s75, 1
      %p79 = scmp.eq.s32.totalorder %s29, 5
      %p80 = scmp.ne.s32.totalorder %s75, %s77
      %p81 = scmp.eq.s32.totalorder %s29, 0
      %p82 = por %p80, %p81
      %p83 = scmp.ne.s32.totalorder %s75, %s77
      %p84 = scmp.eq.s32.totalorder %s34, 5
      %p85 = por %p83, %p84
      %p86 = scmp.ne.s32.totalorder %s77, %s78
      %p87 = scmp.eq.s32.totalorder %s34, 0
      %p88 = por %p86, %p87
      %p89 = scmp.ne.s32.totalorder %s77, %s78
      %p90 = scmp.eq.s32.totalorder %s35, 5
      %p91 = por %p89, %p90
      %p93 = scmp.ne.s32.totalorder %s78, %s92
      %p94 = scmp.eq.s32.totalorder %s35, 0
      %p95 = por %p93, %p94
      %s97 = sadd.s32 %s96, 1
      %p100 = scmp.eq.s32.totalorder %s29, 5
      %p101 = scmp.ne.s32.totalorder %s96, %s98
      %p102 = scmp.eq.s32.totalorder %s29, 0
      %p103 = por %p101, %p102
      %p104 = scmp.ne.s32.totalorder %s96, %s98
      %p105 = scmp.eq.s32.totalorder %s34, 5
      %p106 = por %p104, %p105
      %p107 = scmp.ne.s32.totalorder %s98, %s99
      %p108 = scmp.eq.s32.totalorder %s34, 0
      %p109 = por %p107, %p108
      %p110 = scmp.ne.s32.totalorder %s98, %s99
      %p111 = scmp.eq.s32.totalorder %s35, 5
      %p112 = por %p110, %p111
      %p114 = scmp.ne.s32.totalorder %s99, %s113
      %p115 = scmp.eq.s32.totalorder %s35, 0
      %p116 = por %p114, %p115
      %s117 = ssub.s32 %s37, %s44
      %p118 = scmp.eq.s32.totalorder %s117, 0
      %s120 = sadd.s32 %s119, 1
      %s121 = scalar_select %p118, %s119, %s120
      %p124 = pneg %p118
      %p125 = scmp.eq.s32.totalorder %s29, 5
      %p126 = por %p124, %p125
      %p127 = scmp.ne.s32.totalorder %s119, %s122
      %p128 = scmp.eq.s32.totalorder %s29, 0
      %p129 = por %p127, %p128
      %p130 = scmp.ne.s32.totalorder %s119, %s122
      %p131 = scmp.eq.s32.totalorder %s34, 5
      %p132 = por %p130, %p131
      %p133 = scmp.ne.s32.totalorder %s122, %s123
      %p134 = scmp.eq.s32.totalorder %s34, 0
      %p135 = por %p133, %p134
      %p136 = scmp.ne.s32.totalorder %s122, %s123
      %p137 = scmp.eq.s32.totalorder %s35, 5
      %p138 = por %p136, %p137
      %p140 = scmp.ne.s32.totalorder %s123, %s139
      %p141 = scmp.eq.s32.totalorder %s35, 0
      %p142 = por %p140, %p141
      %s143 = ssub.s32 %s37, %s44
      %p144 = scmp.eq.s32.totalorder %s143, 0
      %s146 = sadd.s32 %s145, 1
      %s147 = scalar_select %p144, %s145, %s146
      %p150 = pneg %p144
      %p151 = scmp.eq.s32.totalorder %s29, 5
      %p152 = por %p150, %p151
      %p153 = scmp.ne.s32.totalorder %s145, %s148
      %p154 = scmp.eq.s32.totalorder %s29, 0
      %p155 = por %p153, %p154
      %p156 = scmp.ne.s32.totalorder %s145, %s148
      %p157 = scmp.eq.s32.totalorder %s34, 5
      %p158 = por %p156, %p157
      %p159 = scmp.ne.s32.totalorder %s148, %s149
      %p160 = scmp.eq.s32.totalorder %s34, 0
      %p161 = por %p159, %p160
      %p162 = scmp.ne.s32.totalorder %s148, %s149
      %p163 = scmp.eq.s32.totalorder %s35, 5
      %p164 = por %p162, %p163
      %p166 = scmp.ne.s32.totalorder %s149, %s165
      %p167 = scmp.eq.s32.totalorder %s35, 0
      %p168 = por %p166, %p167
      %s169 = ssub.s32 %s37, %s44
      %p170 = scmp.eq.s32.totalorder %s169, 0
      %s172 = sadd.s32 %s171, 1
      %s173 = scalar_select %p170, %s171, %s172
      %p176 = pneg %p170
      %p177 = scmp.eq.s32.totalorder %s29, 5
      %p178 = por %p176, %p177
      %p179 = scmp.ne.s32.totalorder %s171, %s174
      %p180 = scmp.eq.s32.totalorder %s29, 0
      %p181 = por %p179, %p180
      %p182 = scmp.ne.s32.totalorder %s171, %s174
      %p183 = scmp.eq.s32.totalorder %s34, 5
      %p184 = por %p182, %p183
      %p185 = scmp.ne.s32.totalorder %s174, %s175
      %p186 = scmp.eq.s32.totalorder %s34, 0
      %p187 = por %p185, %p186
      %p188 = scmp.ne.s32.totalorder %s174, %s175
      %p189 = scmp.eq.s32.totalorder %s35, 5
      %p190 = por %p188, %p189
      %p192 = scmp.ne.s32.totalorder %s175, %s191
      %p193 = scmp.eq.s32.totalorder %s35, 0
      %p194 = por %p192, %p193
      %s195 = ssub.s32 %s37, %s44
      %p196 = scmp.eq.s32.totalorder %s195, 0
      %s198 = sadd.s32 %s197, 1
      %s199 = scalar_select %p196, %s197, %s198
      %p202 = pneg %p196
      %p203 = scmp.eq.s32.totalorder %s29, 5
      %p204 = por %p202, %p203
      %p205 = scmp.ne.s32.totalorder %s197, %s200
      %p206 = scmp.eq.s32.totalorder %s29, 0
      %p207 = por %p205, %p206
      %p208 = scmp.ne.s32.totalorder %s197, %s200
      %p209 = scmp.eq.s32.totalorder %s34, 5
      %p210 = por %p208, %p209
      %p211 = scmp.ne.s32.totalorder %s200, %s201
      %p212 = scmp.eq.s32.totalorder %s34, 0
      %p213 = por %p211, %p212
      %p214 = scmp.ne.s32.totalorder %s200, %s201
      %p215 = scmp.eq.s32.totalorder %s35, 5
      %p216 = por %p214, %p215
      %p218 = scmp.ne.s32.totalorder %s201, %s217
      %p219 = scmp.eq.s32.totalorder %s35, 0
      %p220 = por %p218, %p219
      %s221 = ssub.s32 %s37, %s44
      %p222 = scmp.eq.s32.totalorder %s221, 0
      %s224 = sadd.s32 %s223, 1
      %s225 = scalar_select %p222, %s223, %s224
      %p228 = pneg %p222
      %p229 = scmp.eq.s32.totalorder %s29, 5
      %p230 = por %p228, %p229
      %p231 = scmp.ne.s32.totalorder %s223, %s226
      %p232 = scmp.eq.s32.totalorder %s29, 0
      %p233 = por %p231, %p232
      %p234 = scmp.ne.s32.totalorder %s223, %s226
      %p235 = scmp.eq.s32.totalorder %s34, 5
      %p236 = por %p234, %p235
      %p237 = scmp.ne.s32.totalorder %s226, %s227
      %p238 = scmp.eq.s32.totalorder %s34, 0
      %p239 = por %p237, %p238
      %p240 = scmp.ne.s32.totalorder %s226, %s227
      %p241 = scmp.eq.s32.totalorder %s35, 5
      %p242 = por %p240, %p241
      %p244 = scmp.ne.s32.totalorder %s227, %s243
      %p245 = scmp.eq.s32.totalorder %s35, 0
      %p246 = por %p244, %p245
      %s247 = ssub.s32 %s37, %s44
      %p248 = scmp.eq.s32.totalorder %s247, 0
      %s250 = sadd.s32 %s249, 1
      %s251 = scalar_select %p248, %s249, %s250
      %p254 = pneg %p248
      %p255 = scmp.eq.s32.totalorder %s29, 5
      %p256 = por %p254, %p255
      %p257 = scmp.ne.s32.totalorder %s249, %s252
      %p258 = scmp.eq.s32.totalorder %s29, 0
      %p259 = por %p257, %p258
      %p260 = scmp.ne.s32.totalorder %s249, %s252
      %p261 = scmp.eq.s32.totalorder %s34, 5
      %p262 = por %p260, %p261
      %p263 = scmp.ne.s32.totalorder %s252, %s253
      %p264 = scmp.eq.s32.totalorder %s34, 0
      %p265 = por %p263, %p264
      %p266 = scmp.ne.s32.totalorder %s252, %s253
      %p267 = scmp.eq.s32.totalorder %s35, 5
      %p268 = por %p266, %p267
      %p270 = scmp.ne.s32.totalorder %s253, %s269
      %p271 = scmp.eq.s32.totalorder %s35, 0
      %p272 = por %p270, %p271
      %s273 = ssub.s32 %s37, %s44
      %p274 = scmp.eq.s32.totalorder %s273, 0
      %s276 = sadd.s32 %s275, 1
      %s277 = scalar_select %p274, %s275, %s276
      %p280 = pneg %p274
      %p281 = scmp.eq.s32.totalorder %s29, 5
      %p282 = por %p280, %p281
      %p283 = scmp.ne.s32.totalorder %s275, %s278
      %p284 = scmp.eq.s32.totalorder %s29, 0
      %p285 = por %p283, %p284
      %p286 = scmp.ne.s32.totalorder %s275, %s278
      %p287 = scmp.eq.s32.totalorder %s34, 5
      %p288 = por %p286, %p287
      %p289 = scmp.ne.s32.totalorder %s278, %s279
      %p290 = scmp.eq.s32.totalorder %s34, 0
      %p291 = por %p289, %p290
      %p292 = scmp.ne.s32.totalorder %s278, %s279
      %p293 = scmp.eq.s32.totalorder %s35, 5
      %p294 = por %p292, %p293
      %p296 = scmp.ne.s32.totalorder %s279, %s295
      %p297 = scmp.eq.s32.totalorder %s35, 0
      %p298 = por %p296, %p297
      %s299 = ssub.s32 %s36, %s48
      %p300 = scmp.eq.s32.totalorder %s299, 0
      %s302 = sadd.s32 %s301, 1
      %s303 = scalar_select %p300, %s301, %s302
      %p306 = pneg %p300
      %p307 = scmp.eq.s32.totalorder %s29, 5
      %p308 = por %p306, %p307
      %p309 = scmp.ne.s32.totalorder %s301, %s304
      %p310 = scmp.eq.s32.totalorder %s29, 0
      %p311 = por %p309, %p310
      %p312 = scmp.ne.s32.totalorder %s301, %s304
      %p313 = scmp.eq.s32.totalorder %s34, 5
      %p314 = por %p312, %p313
      %p315 = scmp.ne.s32.totalorder %s304, %s305
      %p316 = scmp.eq.s32.totalorder %s34, 0
      %p317 = por %p315, %p316
      %p318 = scmp.ne.s32.totalorder %s304, %s305
      %p319 = scmp.eq.s32.totalorder %s35, 5
      %p320 = por %p318, %p319
      %p322 = scmp.ne.s32.totalorder %s305, %s321
      %p323 = scmp.eq.s32.totalorder %s35, 0
      %p324 = por %p322, %p323
      %p325 = scmp.le.s32.totalorder 1, %s29
      %p326 = scmp.lt.s32.totalorder %s29, 7
      %p327 = pnand %p325, %p326
      %p328 = pneg %p327
      // Predicated region
      $region9: #{dimension_reducer_forward.1} parent=5 // pred_check
        _
      $region10: #{dimension_reducer_forward.1} parent=5 // pred_check_branch
        %330 = sbr.rel (%p327) target = $region12
      $region11: #{dimension_reducer_forward.1} parent=5 // pred_region
        %s331 = ssub.s32 %s29, 1
        // Predicated region
        $region13: #{dimension_reducer_forward.1} parent=11 // pred_check
          %p332 = pneg %p88
        $region14: #{dimension_reducer_forward.1} parent=11 // pred_check_branch
          %334 = sbr.rel (%p332) target = $region16
        $region15: #{dimension_reducer_forward.1} parent=11 // pred_region
          _
        $region16: #{dimension_reducer_forward.1} parent=11 // pred_fallthru
          _
        // Predicated region
        $region17: #{dimension_reducer_forward.1} parent=11 // pred_check
          %p335 = pneg %p109
        $region18: #{dimension_reducer_forward.1} parent=11 // pred_check_branch
          %337 = sbr.rel (%p335) target = $region20
        $region19: #{dimension_reducer_forward.1} parent=11 // pred_region
          _
        $region20: #{dimension_reducer_forward.1} parent=11 // pred_fallthru
          _
      $region12: #{dimension_reducer_forward.1} parent=5 // pred_fallthru
        _
      %p338 = scmp.lt.s32.totalorder %s29, 6
      // Predicated region
      $region21: #{dimension_reducer_forward.1} parent=5 // pred_check
        %p339 = pneg %p338
      $region22: #{dimension_reducer_forward.1} parent=5 // pred_check_branch
        %341 = sbr.rel (%p339) target = $region24
      $region23: #{dimension_reducer_forward.1} parent=5 // pred_region
        // Predicated region
        $region25: #{dimension_reducer_forward.1} parent=23 // pred_check
          %p342 = pneg %p61
        $region26: #{dimension_reducer_forward.1} parent=23 // pred_check_branch
          %344 = sbr.rel (%p342) target = $region28
        $region27: #{dimension_reducer_forward.1} parent=23 // pred_region
          %p345 = scmp.lt.s32.totalorder %s36, 1
          %s346 = scalar_select %p345, %s36, 1
          %s347 = smul.addr %s346, 4
          %s348 = smul.addr %s347, 8
          %s349 = scalar_lea.vmem %s0, %s348
        $region28: #{dimension_reducer_forward.1} parent=23 // pred_fallthru
          _
        // Predicated region
        $region29: #{dimension_reducer_forward.1} parent=23 // pred_check
          %p350 = pneg %p129
        $region30: #{dimension_reducer_forward.1} parent=23 // pred_check_branch
          %352 = sbr.rel (%p350) target = $region32
        $region31: #{dimension_reducer_forward.1} parent=23 // pred_region
          %s353 = sand.u32 %s119, 1
          %s354 = scalar_lea.sflag [#allocation6], %s353
          %s355 = sand.u32 %s119, 1
          %s356 = smul.addr %s355, 192
          %s357 = scalar_lea.vmem [#allocation5], %s356
          %359 = vsyncadd %s354, 0
          %s360 = smul.addr %s37, 48
          %s361 = smul.addr %s360, 4
          %s362 = scalar_lea.hbm %s3, %s361
          %s363 = sshll.u32 %s362, 4
          %s364 = int_to_ptr.hbm [resolvable:$true] %s363
          %s365 = sshll.u32 %s357, 4
          %s366 = int_to_ptr.vmem [resolvable:$true] %s365
          %371 = dma.hbm_to_vmem [thread:$0]  %s364, 3072, %s366, %s354, 192, 192, 12
        $region32: #{dimension_reducer_forward.1} parent=23 // pred_fallthru
          _
        // Predicated region
        $region33: #{dimension_reducer_forward.1} parent=23 // pred_check
          %p372 = pneg %p155
        $region34: #{dimension_reducer_forward.1} parent=23 // pred_check_branch
          %374 = sbr.rel (%p372) target = $region36
        $region35: #{dimension_reducer_forward.1} parent=23 // pred_region
          %s375 = sand.u32 %s29, 1
          %s376 = scalar_lea.sflag [#allocation9], %s375
          %s377 = sand.u32 %s145, 1
          %s378 = smul.addr %s377, 64
          %s379 = scalar_lea.vmem [#allocation8], %s378
          %381 = vsyncadd %s376, 0
          %s382 = smul.addr %s37, 16
          %s383 = smul.addr %s382, 4
          %s384 = scalar_lea.hbm %s4, %s383
          %s385 = sshll.u32 %s384, 4
          %s386 = int_to_ptr.hbm [resolvable:$true] %s385
          %s387 = sshll.u32 %s379, 4
          %s388 = int_to_ptr.vmem [resolvable:$true] %s387
          %393 = dma.hbm_to_vmem [thread:$0]  %s386, 1024, %s388, %s376, 64, 64, 4
        $region36: #{dimension_reducer_forward.1} parent=23 // pred_fallthru
          _
        // Predicated region
        $region37: #{dimension_reducer_forward.1} parent=23 // pred_check
          %p394 = pneg %p181
        $region38: #{dimension_reducer_forward.1} parent=23 // pred_check_branch
          %396 = sbr.rel (%p394) target = $region40
        $region39: #{dimension_reducer_forward.1} parent=23 // pred_region
          %s397 = sand.u32 %s29, 1
          %s398 = scalar_lea.sflag [#allocation9], %s397
          %s399 = sand.u32 %s171, 1
          %s400 = smul.addr %s399, 256
          %s401 = scalar_lea.vmem [#allocation10], %s400
          %403 = vsyncadd %s398, 0
          %s404 = smul.addr %s37, 64
          %s405 = smul.addr %s404, 4
          %s406 = scalar_lea.hbm %s5, %s405
          %s407 = sshll.u32 %s406, 4
          %s408 = int_to_ptr.hbm [resolvable:$true] %s407
          %s409 = sshll.u32 %s401, 4
          %s410 = int_to_ptr.vmem [resolvable:$true] %s409
          %415 = dma.hbm_to_vmem [thread:$0]  %s408, 4096, %s410, %s398, 256, 256, 16
        $region40: #{dimension_reducer_forward.1} parent=23 // pred_fallthru
          _
        // Predicated region
        $region41: #{dimension_reducer_forward.1} parent=23 // pred_check
          %p416 = pneg %p207
        $region42: #{dimension_reducer_forward.1} parent=23 // pred_check_branch
          %418 = sbr.rel (%p416) target = $region44
        $region43: #{dimension_reducer_forward.1} parent=23 // pred_region
          %s419 = sand.u32 %s197, 1
          %s420 = scalar_lea.sflag [#allocation12], %s419
          %s421 = sand.u32 %s197, 1
          %s422 = smul.addr %s421, 256
          %s423 = scalar_lea.vmem [#allocation11], %s422
          %425 = vsyncadd %s420, 0
          %s426 = smul.addr %s37, 64
          %s427 = smul.addr %s426, 4
          %s428 = scalar_lea.hbm %s6, %s427
          %s429 = sshll.u32 %s428, 4
          %s430 = int_to_ptr.hbm [resolvable:$true] %s429
          %s431 = sshll.u32 %s423, 4
          %s432 = int_to_ptr.vmem [resolvable:$true] %s431
          %437 = dma.hbm_to_vmem [thread:$0]  %s430, 4096, %s432, %s420, 64, 64, 4
        $region44: #{dimension_reducer_forward.1} parent=23 // pred_fallthru
          _
        // Predicated region
        $region45: #{dimension_reducer_forward.1} parent=23 // pred_check
          %p438 = pneg %p233
        $region46: #{dimension_reducer_forward.1} parent=23 // pred_check_branch
          %440 = sbr.rel (%p438) target = $region48
        $region47: #{dimension_reducer_forward.1} parent=23 // pred_region
          %p441 = scmp.lt.s32.totalorder %s37, 2
          %s442 = scalar_select %p441, %s37, 2
          %s443 = smul.addr %s442, 3
          %s444 = scalar_lea.vmem %s7, %s443
        $region48: #{dimension_reducer_forward.1} parent=23 // pred_fallthru
          _
        // Predicated region
        $region49: #{dimension_reducer_forward.1} parent=23 // pred_check
          %p445 = pneg %p259
        $region50: #{dimension_reducer_forward.1} parent=23 // pred_check_branch
          %447 = sbr.rel (%p445) target = $region52
        $region51: #{dimension_reducer_forward.1} parent=23 // pred_region
          %p448 = scmp.lt.s32.totalorder %s37, 2
          %s449 = scalar_select %p448, %s37, 2
          %s450 = smul.addr %s449, 4
          %s451 = scalar_lea.vmem %s8, %s450
        $region52: #{dimension_reducer_forward.1} parent=23 // pred_fallthru
          _
        // Predicated region
        $region53: #{dimension_reducer_forward.1} parent=23 // pred_check
          %p452 = pneg %p285
        $region54: #{dimension_reducer_forward.1} parent=23 // pred_check_branch
          %454 = sbr.rel (%p452) target = $region56
        $region55: #{dimension_reducer_forward.1} parent=23 // pred_region
          %p455 = scmp.lt.s32.totalorder %s37, 2
          %s456 = scalar_select %p455, %s37, 2
          %s457 = smul.addr %s456, 8
          %s458 = scalar_lea.vmem %s9, %s457
        $region56: #{dimension_reducer_forward.1} parent=23 // pred_fallthru
          _
      $region24: #{dimension_reducer_forward.1} parent=5 // pred_fallthru
        _
      %p459 = scmp.le.s32.totalorder 1, %s29
      %p460 = scmp.lt.s32.totalorder %s29, 7
      %p461 = pnand %p459, %p460
      %p462 = pneg %p461
      // Predicated region
      $region57: #{dimension_reducer_forward.1} parent=5 // pred_check
        _
      $region58: #{dimension_reducer_forward.1} parent=5 // pred_check_branch
        %464 = sbr.rel (%p461) target = $region60
      $region59: #{dimension_reducer_forward.1} parent=5 // pred_region
        %s465 = ssub.s32 %s29, 1
        %s466 = sand.u32 %s122, 1
        %s467 = scalar_lea.sflag [#allocation6], %s466
        %s468 = sand.u32 %s122, 1
        %s469 = smul.addr %s468, 192
        %s470 = scalar_lea.vmem [#allocation5], %s469
        // Predicated region
        $region61: #{dimension_reducer_forward.1} parent=59 // pred_check
          %p471 = pneg %p135
        $region62: #{dimension_reducer_forward.1} parent=59 // pred_check_branch
          %473 = sbr.rel (%p471) target = $region64
        $region63: #{dimension_reducer_forward.1} parent=59 // pred_region
          %475 = dma.done %s467, 3072
        $region64: #{dimension_reducer_forward.1} parent=59 // pred_fallthru
          _
        %s476 = sand.u32 %s34, 1
        %s477 = scalar_lea.sflag [#allocation9], %s476
        %s478 = sand.u32 %s148, 1
        %s479 = smul.addr %s478, 64
        %s480 = scalar_lea.vmem [#allocation8], %s479
        // Predicated region
        $region65: #{dimension_reducer_forward.1} parent=59 // pred_check
          %p481 = pneg %p161
        $region66: #{dimension_reducer_forward.1} parent=59 // pred_check_branch
          %483 = sbr.rel (%p481) target = $region68
        $region67: #{dimension_reducer_forward.1} parent=59 // pred_region
          %485 = dma.done %s477, 1024
        $region68: #{dimension_reducer_forward.1} parent=59 // pred_fallthru
          _
        %s486 = sand.u32 %s34, 1
        %s487 = scalar_lea.sflag [#allocation9], %s486
        %s488 = sand.u32 %s174, 1
        %s489 = smul.addr %s488, 256
        %s490 = scalar_lea.vmem [#allocation10], %s489
        // Predicated region
        $region69: #{dimension_reducer_forward.1} parent=59 // pred_check
          %p491 = pneg %p187
        $region70: #{dimension_reducer_forward.1} parent=59 // pred_check_branch
          %493 = sbr.rel (%p491) target = $region72
        $region71: #{dimension_reducer_forward.1} parent=59 // pred_region
          %495 = dma.done %s487, 4096
        $region72: #{dimension_reducer_forward.1} parent=59 // pred_fallthru
          _
        %s496 = sand.u32 %s200, 1
        %s497 = scalar_lea.sflag [#allocation12], %s496
        %s498 = sand.u32 %s200, 1
        %s499 = smul.addr %s498, 256
        %s500 = scalar_lea.vmem [#allocation11], %s499
        // Predicated region
        $region73: #{dimension_reducer_forward.1} parent=59 // pred_check
          %p501 = pneg %p213
        $region74: #{dimension_reducer_forward.1} parent=59 // pred_check_branch
          %503 = sbr.rel (%p501) target = $region76
        $region75: #{dimension_reducer_forward.1} parent=59 // pred_region
          %505 = dma.done %s497, 4096
        $region76: #{dimension_reducer_forward.1} parent=59 // pred_fallthru
          _
        %p506 = scmp.lt.s32.totalorder %s38, 1
        %s507 = scalar_select %p506, %s38, 1
        %s508 = smul.addr %s507, 4
        %s509 = smul.addr %s508, 8
        %s510 = scalar_lea.vmem %s0, %s509
        %p511 = pneg %p67
        %p512 = pneg %p64
        %p513 = pneg %p88
        %p514 = pneg %p85
        %p515 = pneg %p109
        %p516 = pneg %p106
        %s517 = sand.u32 %s122, 1
        %s518 = scalar_lea.sflag [#allocation6], %s517
        %s519 = sand.u32 %s122, 1
        %s520 = smul.addr %s519, 192
        %s521 = scalar_lea.vmem [#allocation5], %s520
        %p522 = pneg %p135
        %p523 = pneg %p132
        %s524 = sand.u32 %s34, 1
        %s525 = scalar_lea.sflag [#allocation9], %s524
        %s526 = sand.u32 %s148, 1
        %s527 = smul.addr %s526, 64
        %s528 = scalar_lea.vmem [#allocation8], %s527
        %p529 = pneg %p161
        %p530 = pneg %p158
        %s531 = sand.u32 %s34, 1
        %s532 = scalar_lea.sflag [#allocation9], %s531
        %s533 = sand.u32 %s174, 1
        %s534 = smul.addr %s533, 256
        %s535 = scalar_lea.vmem [#allocation10], %s534
        %p536 = pneg %p187
        %p537 = pneg %p184
        %s538 = sand.u32 %s200, 1
        %s539 = scalar_lea.sflag [#allocation12], %s538
        %s540 = sand.u32 %s200, 1
        %s541 = smul.addr %s540, 256
        %s542 = scalar_lea.vmem [#allocation11], %s541
        %p543 = pneg %p213
        %p544 = pneg %p210
        %p545 = scmp.lt.s32.totalorder %s39, 2
        %s546 = scalar_select %p545, %s39, 2
        %s547 = smul.addr %s546, 3
        %s548 = scalar_lea.vmem %s7, %s547
        %p549 = pneg %p239
        %p550 = pneg %p236
        %p551 = scmp.lt.s32.totalorder %s39, 2
        %s552 = scalar_select %p551, %s39, 2
        %s553 = smul.addr %s552, 4
        %s554 = scalar_lea.vmem %s8, %s553
        %p555 = pneg %p265
        %p556 = pneg %p262
        %p557 = scmp.lt.s32.totalorder %s39, 2
        %s558 = scalar_select %p557, %s39, 2
        %s559 = smul.addr %s558, 8
        %s560 = scalar_lea.vmem %s9, %s559
        %p561 = pneg %p291
        %p562 = pneg %p288
        %p563 = pneg %p317
        %p564 = pneg %p314
        %s565 = sand.u32 %s304, 1
        %s566 = scalar_lea.sflag [#allocation7], %s565
        %s567 = sand.u32 %s304, 1
        %s568 = smul.addr %s567, 16
        %s569 = scalar_lea.vmem [#allocation13], %s568
        %p570 = scmp.lt.s32.totalorder %s38, 1
        %s571 = scalar_select %p570, %s38, 1
        %s572 = smul.addr %s571, 4
        %s573 = smul.addr %s572, 8
        %s574 = scalar_lea.vmem %s0, %s573
        %p575 = scmp.lt.s32.totalorder %s39, 2
        %s576 = scalar_select %p575, %s39, 2
        %s577 = smul.addr %s576, 3
        %s578 = scalar_lea.vmem %s7, %s577
        %p579 = scmp.lt.s32.totalorder %s39, 2
        %s580 = scalar_select %p579, %s39, 2
        %s581 = smul.addr %s580, 4
        %s582 = scalar_lea.vmem %s8, %s581
        %p583 = scmp.lt.s32.totalorder %s39, 2
        %s584 = scalar_select %p583, %s39, 2
        %s585 = smul.addr %s584, 8
        %s586 = scalar_lea.vmem %s9, %s585
        %p588 = scmp.eq.s32.totalorder %s39, 0
        // Predicated region
        $region77: #{dimension_reducer_forward.1} parent=59 // pred_check
          %p589 = pneg %p588
        $region78: #{dimension_reducer_forward.1} parent=59 // pred_check_branch
          %591 = sbr.rel (%p589) target = $region80
        $region79: #{dimension_reducer_forward.1} parent=59 // pred_region
          %v592 = vld [vmem:[%s574] sm:$0xff]
          %v593 = vld [vmem:[%s574 + $0x8] sm:$0xff]
          %v594 = vld [vmem:[%s574 + $0x10] sm:$0xff]
          %v595 = vld [vmem:[%s574 + $0x18] sm:$0xff]
          %596 = vst [vmem:[#allocation2] sm:$0xff] %v592
          %597 = vst [vmem:[#allocation2 + $0x8] sm:$0xff] %v593
          %598 = vst [vmem:[#allocation2 + $0x10] sm:$0xff] %v594
          %599 = vst [vmem:[#allocation2 + $0x18] sm:$0xff] %v595
        $region80: #{dimension_reducer_forward.1} parent=59 // pred_fallthru
          _
        %v600 = vld [vmem:[#allocation2] sm:$0xff]
        %v601 = vld [vmem:[#allocation2 + $0x8] sm:$0xff]
        %v602 = vld [vmem:[#allocation2 + $0x10] sm:$0xff]
        %v603 = vld [vmem:[#allocation2 + $0x18] sm:$0xff]
        %v604 = vld [vmem:[%s586] sm:$0x3f]
        %v605 = vpack.c.bf16 %v601, %v600
        %v606 = vpack.c.bf16 %v603, %v602
        %v607 = vld [vmem:[%s470] sm:$0xff]
        %v608 = vld [vmem:[%s470 + $0x8] sm:$0xf]
        %v609 = vld [vmem:[%s470 + $0xc] sm:$0xff]
        %v610 = vld [vmem:[%s470 + $0x14] sm:$0xf]
        %v611 = vld [vmem:[%s470 + $0x18] sm:$0xff]
        %v612 = vld [vmem:[%s470 + $0x20] sm:$0xf]
        %v613 = vld [vmem:[%s470 + $0x24] sm:$0xff]
        %v614 = vld [vmem:[%s470 + $0x2c] sm:$0xf]
        %v615 = vld [vmem:[%s470 + $0x30] sm:$0xff]
        %v616 = vld [vmem:[%s470 + $0x38] sm:$0xf]
        %v617 = vld [vmem:[%s470 + $0x3c] sm:$0xff]
        %v618 = vld [vmem:[%s470 + $0x44] sm:$0xf]
        %v619 = vld [vmem:[%s470 + $0x48] sm:$0xff]
        %v620 = vld [vmem:[%s470 + $0x50] sm:$0xf]
        %v621 = vld [vmem:[%s470 + $0x54] sm:$0xff]
        %v622 = vld [vmem:[%s470 + $0x5c] sm:$0xf]
        %v623 = vld [vmem:[%s470 + $0x60] sm:$0xff]
        %v624 = vld [vmem:[%s470 + $0x68] sm:$0xf]
        %v625 = vld [vmem:[%s470 + $0x6c] sm:$0xff]
        %v626 = vld [vmem:[%s470 + $0x74] sm:$0xf]
        %v627 = vld [vmem:[%s470 + $0x78] sm:$0xff]
        %v628 = vld [vmem:[%s470 + $0x80] sm:$0xf]
        %v629 = vld [vmem:[%s470 + $0x84] sm:$0xff]
        %v630 = vld [vmem:[%s470 + $0x8c] sm:$0xf]
        %v631 = vld [vmem:[%s470 + $0x90] sm:$0xff]
        %v632 = vld [vmem:[%s470 + $0x98] sm:$0xf]
        %v633 = vld [vmem:[%s470 + $0x9c] sm:$0xff]
        %v634 = vld [vmem:[%s470 + $0xa4] sm:$0xf]
        %v635 = vld [vmem:[%s470 + $0xa8] sm:$0xff]
        %v636 = vld [vmem:[%s470 + $0xb0] sm:$0xf]
        %v637 = vld [vmem:[%s470 + $0xb4] sm:$0xff]
        %v638 = vld [vmem:[%s470 + $0xbc] sm:$0xf]
        %v639 = vld [vmem:[%s578] sm:$0x7]
        %v641 = vperm.slane %v639, 0
        %v642 = vperm.slane %v639, 1
        %v643 = vperm.slane %v639, 2
        %v679 = vunpack.c.l.b16 %v607
        %v680 = vunpack.c.h.b16 %v607
        %v681 = vunpack.c.l.b16 %v608
        %v682 = vunpack.c.l.b16 %v609
        %v683 = vunpack.c.h.b16 %v609
        %v684 = vunpack.c.l.b16 %v610
        %v685 = vunpack.c.l.b16 %v611
        %v686 = vunpack.c.h.b16 %v611
        %v687 = vunpack.c.l.b16 %v612
        %v688 = vunpack.c.l.b16 %v613
        %v689 = vunpack.c.h.b16 %v613
        %v690 = vunpack.c.l.b16 %v614
        %v691 = vunpack.c.l.b16 %v615
        %v692 = vunpack.c.h.b16 %v615
        %v693 = vunpack.c.l.b16 %v616
        %v694 = vunpack.c.l.b16 %v617
        %v695 = vunpack.c.h.b16 %v617
        %v696 = vunpack.c.l.b16 %v618
        %v697 = vunpack.c.l.b16 %v619
        %v698 = vunpack.c.h.b16 %v619
        %v699 = vunpack.c.l.b16 %v620
        %v700 = vunpack.c.l.b16 %v621
        %v701 = vunpack.c.h.b16 %v621
        %v702 = vunpack.c.l.b16 %v622
        %v703 = vunpack.c.l.b16 %v623
        %v704 = vunpack.c.h.b16 %v623
        %v705 = vunpack.c.l.b16 %v624
        %v706 = vunpack.c.l.b16 %v625
        %v707 = vunpack.c.h.b16 %v625
        %v708 = vunpack.c.l.b16 %v626
        %v709 = vunpack.c.l.b16 %v627
        %v710 = vunpack.c.h.b16 %v627
        %v711 = vunpack.c.l.b16 %v628
        %v712 = vunpack.c.l.b16 %v629
        %v713 = vunpack.c.h.b16 %v629
        %v714 = vunpack.c.l.b16 %v630
        %v715 = vunpack.c.l.b16 %v631
        %v716 = vunpack.c.h.b16 %v631
        %v717 = vunpack.c.l.b16 %v632
        %v718 = vunpack.c.l.b16 %v633
        %v719 = vunpack.c.h.b16 %v633
        %v720 = vunpack.c.l.b16 %v634
        %v721 = vunpack.c.l.b16 %v635
        %v722 = vunpack.c.h.b16 %v635
        %v723 = vunpack.c.l.b16 %v636
        %v724 = vunpack.c.l.b16 %v637
        %v725 = vunpack.c.h.b16 %v637
        %v726 = vunpack.c.l.b16 %v638
        %v727 = vpack.c.b16 %v682, %v679
        %v728 = vpack.c.b16 %v683, %v680
        %v729 = vpack.c.b16 %v684, %v681
        %v730 = vpack.c.b16 %v688, %v685
        %v731 = vpack.c.b16 %v689, %v686
        %v732 = vpack.c.b16 %v690, %v687
        %v733 = vpack.c.b16 %v694, %v691
        %v734 = vpack.c.b16 %v695, %v692
        %v735 = vpack.c.b16 %v696, %v693
        %v736 = vpack.c.b16 %v700, %v697
        %v737 = vpack.c.b16 %v701, %v698
        %v738 = vpack.c.b16 %v702, %v699
        %v739 = vpack.c.b16 %v706, %v703
        %v740 = vpack.c.b16 %v707, %v704
        %v741 = vpack.c.b16 %v708, %v705
        %v742 = vpack.c.b16 %v712, %v709
        %v743 = vpack.c.b16 %v713, %v710
        %v744 = vpack.c.b16 %v714, %v711
        %v745 = vpack.c.b16 %v718, %v715
        %v746 = vpack.c.b16 %v719, %v716
        %v747 = vpack.c.b16 %v720, %v717
        %v748 = vpack.c.b16 %v724, %v721
        %v749 = vpack.c.b16 %v725, %v722
        %v750 = vpack.c.b16 %v726, %v723
        %775 = vmatpush.bf16.msra.mxu0 %v748
        %776 = vmatpush.bf16.msra.mxu0 %v745
        %777 = vmatpush.bf16.msra.mxu0 %v742
        %778 = vmatpush.bf16.msra.mxu0 %v739
        %779 = vmatpush.bf16.msra.mxu0 %v736
        %780 = vmatpush.bf16.msra.mxu0 %v733
        %781 = vmatpush.bf16.msra.mxu0 %v730
        %782 = vmatpush.bf16.msra.mxu0 %v727
        %783 = vmatmul.bf16.gmra.mxu0 %v605
        %v784 = vpop.f32.mrf.mxu0
        %v785 = vadd.f32 %v641, %v784
        %v786 = vpop.f32.mrf.mxu0
        %v787 = vadd.f32 %v641, %v786
        %788 = vmatmul.bf16.gmra.mxu0 %v606
        %v789 = vpop.f32.mrf.mxu0
        %v790 = vadd.f32 %v641, %v789
        %v791 = vpop.f32.mrf.mxu0
        %v792 = vadd.f32 %v641, %v791
        %793 = vdwg.mxu0
        %794 = vmatpush.bf16.msra.mxu0 %v749
        %795 = vmatpush.bf16.msra.mxu0 %v746
        %796 = vmatpush.bf16.msra.mxu0 %v743
        %797 = vmatpush.bf16.msra.mxu0 %v740
        %798 = vmatpush.bf16.msra.mxu0 %v737
        %799 = vmatpush.bf16.msra.mxu0 %v734
        %800 = vmatpush.bf16.msra.mxu0 %v731
        %801 = vmatpush.bf16.msra.mxu0 %v728
        %802 = vmatmul.bf16.gmra.mxu0 %v605
        %v803 = vpop.f32.mrf.mxu0
        %v804 = vadd.f32 %v642, %v803
        %v805 = vpop.f32.mrf.mxu0
        %v806 = vadd.f32 %v642, %v805
        %807 = vmatmul.bf16.gmra.mxu0 %v606
        %v808 = vpop.f32.mrf.mxu0
        %v809 = vadd.f32 %v642, %v808
        %v810 = vpop.f32.mrf.mxu0
        %v811 = vadd.f32 %v642, %v810
        %812 = vdwg.mxu0
        %813 = vmatpush.bf16.msra.mxu0 %v750
        %814 = vmatpush.bf16.msra.mxu0 %v747
        %815 = vmatpush.bf16.msra.mxu0 %v744
        %816 = vmatpush.bf16.msra.mxu0 %v741
        %817 = vmatpush.bf16.msra.mxu0 %v738
        %818 = vmatpush.bf16.msra.mxu0 %v735
        %819 = vmatpush.bf16.msra.mxu0 %v732
        %820 = vmatpush.bf16.msra.mxu0 %v729
        %821 = vmatmul.bf16.gmra.mxu0 %v605
        %v822 = vpop.f32.mrf.mxu0
        %v823 = vadd.f32 %v643, %v822
        %v824 = vpop.f32.mrf.mxu0
        %v825 = vadd.f32 %v643, %v824
        %826 = vmatmul.bf16.gmra.mxu0 %v606
        %v827 = vpop.f32.mrf.mxu0
        %v828 = vadd.f32 %v643, %v827
        %v829 = vpop.f32.mrf.mxu0
        %v830 = vadd.f32 %v643, %v829
        %831 = vdwg.mxu0
        %v832 = vpack.c.bf16 %v787, %v785
        %v833 = vpack.c.bf16 %v792, %v790
        %v834 = vpack.c.bf16 %v806, %v804
        %v835 = vpack.c.bf16 %v811, %v809
        %vm836 = vcmask 130048
        %v838 = vsel %vm836, %v832, 0
        %v841 = vsel %vm836, %v833, 0
        %v844 = vsel %vm836, %v834, 0
        %v847 = vsel %vm836, %v835, 0
        %849 = vmatpush.bf16.xpose.msra.mxu0 0
        %850 = vmatpush.bf16.xpose.msra.mxu0 0
        %851 = vmatpush.bf16.xpose.msra.mxu0 0
        %852 = vmatpush.bf16.xpose.msra.mxu0 0
        %853 = vmatpush.bf16.xpose.msra.mxu0 0
        %854 = vmatpush.bf16.xpose.msra.mxu0 0
        %855 = vmatpush.bf16.xpose.msra.mxu0 %v847
        %856 = vmatpush.bf16.xpose.msra.mxu0 %v844
        %857 = vmatmul.bf16.gmra.mxu0 %v838
        %v858 = vpop.f32.mrf.mxu0
        %v859 = vadd.f32 0.0, %v858
        %v860 = vpop.f32.mrf.mxu0
        %v861 = vadd.f32 0.0, %v860
        %862 = vmatmul.bf16.gmra.mxu0 %v841
        %v863 = vpop.f32.mrf.mxu0
        %v864 = vadd.f32 0.0, %v863
        %v865 = vpop.f32.mrf.mxu0
        %v866 = vadd.f32 0.0, %v865
        %867 = vdwg.mxu0
        %v868 = vmul.f32 %v859, 0.25
        %v869 = vmul.f32 %v861, 0.25
        %v870 = vmul.f32 %v864, 0.25
        %v871 = vmul.f32 %v866, 0.25
        %vm872 = vcmask 261120
        %v873 = vsel %vm872, %v868, -inf
        %874 = vmax.xlane.f32.xlu0 %v873
        %v875 = vpop.xlane.xlu0 %874
        %v876 = vsel %vm872, %v869, -inf
        %877 = vmax.xlane.f32.xlu0 %v876
        %v878 = vpop.xlane.xlu0 %877
        %v879 = vsel %vm872, %v870, -inf
        %880 = vmax.xlane.f32.xlu0 %v879
        %v881 = vpop.xlane.xlu0 %880
        %v882 = vsel %vm872, %v871, -inf
        %883 = vmax.xlane.f32.xlu0 %v882
        %v884 = vpop.xlane.xlu0 %883
        %v885 = vsub.f32 %v868, %v875
        %v886 = vsub.f32 %v869, %v878
        %v887 = vsub.f32 %v870, %v881
        %v888 = vsub.f32 %v871, %v884
        %v889 = vmul.f32 %v885, 1.442695
        %v890 = vpow.pop %v889
        %v891 = vmul.f32 %v886, 1.442695
        %v892 = vpow.pop %v891
        %v893 = vmul.f32 %v887, 1.442695
        %v894 = vpow.pop %v893
        %v895 = vmul.f32 %v888, 1.442695
        %v896 = vpow.pop %v895
        %v897 = vsel %vm872, %v890, 0.0
        %898 = vadd.xlane.f32.xlu0 %v897
        %v899 = vpop.xlane.xlu0 %898
        %v900 = vsel %vm872, %v892, 0.0
        %901 = vadd.xlane.f32.xlu0 %v900
        %v902 = vpop.xlane.xlu0 %901
        %v903 = vsel %vm872, %v894, 0.0
        %904 = vadd.xlane.f32.xlu0 %v903
        %v905 = vpop.xlane.xlu0 %904
        %v906 = vsel %vm872, %v896, 0.0
        %907 = vadd.xlane.f32.xlu0 %v906
        %v908 = vpop.xlane.xlu0 %907
        %v909 = vrcp.pop %v899
        %v910 = vrcp.pop %v902
        %v911 = vrcp.pop %v905
        %v912 = vrcp.pop %v908
        %v913 = vmul.f32 %v890, %v909
        %v914 = vmul.f32 %v892, %v910
        %v915 = vmul.f32 %v894, %v911
        %v916 = vmul.f32 %v896, %v912
        %v917 = vpack.c.bf16 %v914, %v913
        %v918 = vpack.c.bf16 %v916, %v915
        %v919 = vpack.c.bf16 %v825, %v823
        %v920 = vpack.c.bf16 %v830, %v828
        %v922 = vsel %vm872, %v917, 0
        %v925 = vsel %vm872, %v918, 0
        %927 = vmatpush.bf16.msra.mxu0 0
        %928 = vmatpush.bf16.msra.mxu0 0
        %929 = vmatpush.bf16.msra.mxu0 0
        %930 = vmatpush.bf16.msra.mxu0 0
        %931 = vmatpush.bf16.msra.mxu0 0
        %932 = vmatpush.bf16.msra.mxu0 0
        %933 = vmatpush.bf16.msra.mxu0 %v920
        %934 = vmatpush.bf16.msra.mxu0 %v919
        %935 = vmatmul.bf16.gmra.mxu0 %v922
        %v936 = vpop.f32.mrf.mxu0
        %v937 = vadd.f32 0.0, %v936
        %v938 = vpop.f32.mrf.mxu0
        %v939 = vadd.f32 0.0, %v938
        %940 = vmatmul.bf16.gmra.mxu0 %v925
        %v941 = vpop.f32.mrf.mxu0
        %v942 = vadd.f32 0.0, %v941
        %v943 = vpop.f32.mrf.mxu0
        %v944 = vadd.f32 0.0, %v943
        %945 = vdwg.mxu0
        %946 = vst.msk [vmem:[#allocation3] sm:$0xff] %vm836, %v937
        %947 = vst.msk [vmem:[#allocation3 + $0x8] sm:$0xff] %vm836, %v939
        %948 = vst.msk [vmem:[#allocation3 + $0x10] sm:$0xff] %vm836, %v942
        %949 = vst.msk [vmem:[#allocation3 + $0x18] sm:$0xff] %vm836, %v944
        %952 = vrot.lane.b32.xlu0 %v832, 112
        %v953 = vpop.permute.xlu0 %952
        %954 = vrot.lane.b32.xlu0 %v833, 112
        %v955 = vpop.permute.xlu0 %954
        %958 = vrot.lane.b32.xlu0 %v834, 112
        %v959 = vpop.permute.xlu0 %958
        %960 = vrot.lane.b32.xlu0 %v835, 112
        %v961 = vpop.permute.xlu0 %960
        %v963 = vsel %vm836, %v953, 0
        %v966 = vsel %vm836, %v955, 0
        %v969 = vsel %vm836, %v959, 0
        %v972 = vsel %vm836, %v961, 0
        %974 = vmatpush.bf16.xpose.msra.mxu0 0
        %975 = vmatpush.bf16.xpose.msra.mxu0 0
        %976 = vmatpush.bf16.xpose.msra.mxu0 0
        %977 = vmatpush.bf16.xpose.msra.mxu0 0
        %978 = vmatpush.bf16.xpose.msra.mxu0 0
        %979 = vmatpush.bf16.xpose.msra.mxu0 0
        %980 = vmatpush.bf16.xpose.msra.mxu0 %v972
        %981 = vmatpush.bf16.xpose.msra.mxu0 %v969
        %982 = vmatmul.bf16.gmra.mxu0 %v963
        %v983 = vpop.f32.mrf.mxu0
        %v984 = vadd.f32 0.0, %v983
        %v985 = vpop.f32.mrf.mxu0
        %v986 = vadd.f32 0.0, %v985
        %987 = vmatmul.bf16.gmra.mxu0 %v966
        %v988 = vpop.f32.mrf.mxu0
        %v989 = vadd.f32 0.0, %v988
        %v990 = vpop.f32.mrf.mxu0
        %v991 = vadd.f32 0.0, %v990
        %992 = vdwg.mxu0
        %v993 = vmul.f32 %v984, 0.25
        %v994 = vmul.f32 %v986, 0.25
        %v995 = vmul.f32 %v989, 0.25
        %v996 = vmul.f32 %v991, 0.25
        %v997 = vsel %vm872, %v993, -inf
        %998 = vmax.xlane.f32.xlu0 %v997
        %v999 = vpop.xlane.xlu0 %998
        %v1000 = vsel %vm872, %v994, -inf
        %1001 = vmax.xlane.f32.xlu0 %v1000
        %v1002 = vpop.xlane.xlu0 %1001
        %v1003 = vsel %vm872, %v995, -inf
        %1004 = vmax.xlane.f32.xlu0 %v1003
        %v1005 = vpop.xlane.xlu0 %1004
        %v1006 = vsel %vm872, %v996, -inf
        %1007 = vmax.xlane.f32.xlu0 %v1006
        %v1008 = vpop.xlane.xlu0 %1007
        %v1009 = vsub.f32 %v993, %v999
        %v1010 = vsub.f32 %v994, %v1002
        %v1011 = vsub.f32 %v995, %v1005
        %v1012 = vsub.f32 %v996, %v1008
        %v1013 = vmul.f32 %v1009, 1.442695
        %v1014 = vpow.pop %v1013
        %v1015 = vmul.f32 %v1010, 1.442695
        %v1016 = vpow.pop %v1015
        %v1017 = vmul.f32 %v1011, 1.442695
        %v1018 = vpow.pop %v1017
        %v1019 = vmul.f32 %v1012, 1.442695
        %v1020 = vpow.pop %v1019
        %v1021 = vsel %vm872, %v1014, 0.0
        %1022 = vadd.xlane.f32.xlu0 %v1021
        %v1023 = vpop.xlane.xlu0 %1022
        %v1024 = vsel %vm872, %v1016, 0.0
        %1025 = vadd.xlane.f32.xlu0 %v1024
        %v1026 = vpop.xlane.xlu0 %1025
        %v1027 = vsel %vm872, %v1018, 0.0
        %1028 = vadd.xlane.f32.xlu0 %v1027
        %v1029 = vpop.xlane.xlu0 %1028
        %v1030 = vsel %vm872, %v1020, 0.0
        %1031 = vadd.xlane.f32.xlu0 %v1030
        %v1032 = vpop.xlane.xlu0 %1031
        %v1033 = vrcp.pop %v1023
        %v1034 = vrcp.pop %v1026
        %v1035 = vrcp.pop %v1029
        %v1036 = vrcp.pop %v1032
        %v1037 = vmul.f32 %v1014, %v1033
        %v1038 = vmul.f32 %v1016, %v1034
        %v1039 = vmul.f32 %v1018, %v1035
        %v1040 = vmul.f32 %v1020, %v1036
        %v1041 = vpack.c.bf16 %v1038, %v1037
        %v1042 = vpack.c.bf16 %v1040, %v1039
        %1045 = vrot.lane.b32.xlu0 %v919, 112
        %v1046 = vpop.permute.xlu0 %1045
        %1047 = vrot.lane.b32.xlu0 %v920, 112
        %v1048 = vpop.permute.xlu0 %1047
        %v1052 = vsel %vm872, %v1041, 0
        %v1055 = vsel %vm872, %v1042, 0
        %1057 = vmatpush.bf16.msra.mxu0 0
        %1058 = vmatpush.bf16.msra.mxu0 0
        %1059 = vmatpush.bf16.msra.mxu0 0
        %1060 = vmatpush.bf16.msra.mxu0 0
        %1061 = vmatpush.bf16.msra.mxu0 0
        %1062 = vmatpush.bf16.msra.mxu0 0
        %1063 = vmatpush.bf16.msra.mxu0 %v1048
        %1064 = vmatpush.bf16.msra.mxu0 %v1046
        %1065 = vmatmul.bf16.gmra.mxu0 %v1052
        %v1066 = vpop.f32.mrf.mxu0
        %v1067 = vadd.f32 0.0, %v1066
        %v1068 = vpop.f32.mrf.mxu0
        %v1069 = vadd.f32 0.0, %v1068
        %1070 = vmatmul.bf16.gmra.mxu0 %v1055
        %v1071 = vpop.f32.mrf.mxu0
        %v1072 = vadd.f32 0.0, %v1071
        %v1073 = vpop.f32.mrf.mxu0
        %v1074 = vadd.f32 0.0, %v1073
        %1075 = vdwg.mxu0
        %1080 = vrot.lane.b32.xlu0 %v1067, 16
        %v1081 = vpop.permute.xlu0 %1080
        %1082 = vrot.lane.b32.xlu0 %v1069, 16
        %v1083 = vpop.permute.xlu0 %1082
        %1084 = vrot.lane.b32.xlu0 %v1072, 16
        %v1085 = vpop.permute.xlu0 %1084
        %1086 = vrot.lane.b32.xlu0 %v1074, 16
        %v1087 = vpop.permute.xlu0 %1086
        %vm1092 = vcmask 261248
        %1093 = vst.msk [vmem:[#allocation3] sm:$0xff] %vm1092, %v1081
        %1094 = vst.msk [vmem:[#allocation3 + $0x8] sm:$0xff] %vm1092, %v1083
        %1095 = vst.msk [vmem:[#allocation3 + $0x10] sm:$0xff] %vm1092, %v1085
        %1096 = vst.msk [vmem:[#allocation3 + $0x18] sm:$0xff] %vm1092, %v1087
        %1097 = vrot.lane.b32.xlu0 %v832, 96
        %v1098 = vpop.permute.xlu0 %1097
        %1099 = vrot.lane.b32.xlu0 %v833, 96
        %v1100 = vpop.permute.xlu0 %1099
        %1101 = vrot.lane.b32.xlu0 %v834, 96
        %v1102 = vpop.permute.xlu0 %1101
        %1103 = vrot.lane.b32.xlu0 %v835, 96
        %v1104 = vpop.permute.xlu0 %1103
        %v1106 = vsel %vm836, %v1098, 0
        %v1109 = vsel %vm836, %v1100, 0
        %v1112 = vsel %vm836, %v1102, 0
        %v1115 = vsel %vm836, %v1104, 0
        %1117 = vmatpush.bf16.xpose.msra.mxu0 0
        %1118 = vmatpush.bf16.xpose.msra.mxu0 0
        %1119 = vmatpush.bf16.xpose.msra.mxu0 0
        %1120 = vmatpush.bf16.xpose.msra.mxu0 0
        %1121 = vmatpush.bf16.xpose.msra.mxu0 0
        %1122 = vmatpush.bf16.xpose.msra.mxu0 0
        %1123 = vmatpush.bf16.xpose.msra.mxu0 %v1115
        %1124 = vmatpush.bf16.xpose.msra.mxu0 %v1112
        %1125 = vmatmul.bf16.gmra.mxu0 %v1106
        %v1126 = vpop.f32.mrf.mxu0
        %v1127 = vadd.f32 0.0, %v1126
        %v1128 = vpop.f32.mrf.mxu0
        %v1129 = vadd.f32 0.0, %v1128
        %1130 = vmatmul.bf16.gmra.mxu0 %v1109
        %v1131 = vpop.f32.mrf.mxu0
        %v1132 = vadd.f32 0.0, %v1131
        %v1133 = vpop.f32.mrf.mxu0
        %v1134 = vadd.f32 0.0, %v1133
        %1135 = vdwg.mxu0
        %v1136 = vmul.f32 %v1127, 0.25
        %v1137 = vmul.f32 %v1129, 0.25
        %v1138 = vmul.f32 %v1132, 0.25
        %v1139 = vmul.f32 %v1134, 0.25
        %v1140 = vsel %vm872, %v1136, -inf
        %1141 = vmax.xlane.f32.xlu0 %v1140
        %v1142 = vpop.xlane.xlu0 %1141
        %v1143 = vsel %vm872, %v1137, -inf
        %1144 = vmax.xlane.f32.xlu0 %v1143
        %v1145 = vpop.xlane.xlu0 %1144
        %v1146 = vsel %vm872, %v1138, -inf
        %1147 = vmax.xlane.f32.xlu0 %v1146
        %v1148 = vpop.xlane.xlu0 %1147
        %v1149 = vsel %vm872, %v1139, -inf
        %1150 = vmax.xlane.f32.xlu0 %v1149
        %v1151 = vpop.xlane.xlu0 %1150
        %v1152 = vsub.f32 %v1136, %v1142
        %v1153 = vsub.f32 %v1137, %v1145
        %v1154 = vsub.f32 %v1138, %v1148
        %v1155 = vsub.f32 %v1139, %v1151
        %v1156 = vmul.f32 %v1152, 1.442695
        %v1157 = vpow.pop %v1156
        %v1158 = vmul.f32 %v1153, 1.442695
        %v1159 = vpow.pop %v1158
        %v1160 = vmul.f32 %v1154, 1.442695
        %v1161 = vpow.pop %v1160
        %v1162 = vmul.f32 %v1155, 1.442695
        %v1163 = vpow.pop %v1162
        %v1164 = vsel %vm872, %v1157, 0.0
        %1165 = vadd.xlane.f32.xlu0 %v1164
        %v1166 = vpop.xlane.xlu0 %1165
        %v1167 = vsel %vm872, %v1159, 0.0
        %1168 = vadd.xlane.f32.xlu0 %v1167
        %v1169 = vpop.xlane.xlu0 %1168
        %v1170 = vsel %vm872, %v1161, 0.0
        %1171 = vadd.xlane.f32.xlu0 %v1170
        %v1172 = vpop.xlane.xlu0 %1171
        %v1173 = vsel %vm872, %v1163, 0.0
        %1174 = vadd.xlane.f32.xlu0 %v1173
        %v1175 = vpop.xlane.xlu0 %1174
        %v1176 = vrcp.pop %v1166
        %v1177 = vrcp.pop %v1169
        %v1178 = vrcp.pop %v1172
        %v1179 = vrcp.pop %v1175
        %v1180 = vmul.f32 %v1157, %v1176
        %v1181 = vmul.f32 %v1159, %v1177
        %v1182 = vmul.f32 %v1161, %v1178
        %v1183 = vmul.f32 %v1163, %v1179
        %v1184 = vpack.c.bf16 %v1181, %v1180
        %v1185 = vpack.c.bf16 %v1183, %v1182
        %1186 = vrot.lane.b32.xlu0 %v919, 96
        %v1187 = vpop.permute.xlu0 %1186
        %1188 = vrot.lane.b32.xlu0 %v920, 96
        %v1189 = vpop.permute.xlu0 %1188
        %v1193 = vsel %vm872, %v1184, 0
        %v1196 = vsel %vm872, %v1185, 0
        %1198 = vmatpush.bf16.msra.mxu0 0
        %1199 = vmatpush.bf16.msra.mxu0 0
        %1200 = vmatpush.bf16.msra.mxu0 0
        %1201 = vmatpush.bf16.msra.mxu0 0
        %1202 = vmatpush.bf16.msra.mxu0 0
        %1203 = vmatpush.bf16.msra.mxu0 0
        %1204 = vmatpush.bf16.msra.mxu0 %v1189
        %1205 = vmatpush.bf16.msra.mxu0 %v1187
        %1206 = vmatmul.bf16.gmra.mxu0 %v1193
        %v1207 = vpop.f32.mrf.mxu0
        %v1208 = vadd.f32 0.0, %v1207
        %v1209 = vpop.f32.mrf.mxu0
        %v1210 = vadd.f32 0.0, %v1209
        %1211 = vmatmul.bf16.gmra.mxu0 %v1196
        %v1212 = vpop.f32.mrf.mxu0
        %v1213 = vadd.f32 0.0, %v1212
        %v1214 = vpop.f32.mrf.mxu0
        %v1215 = vadd.f32 0.0, %v1214
        %1216 = vdwg.mxu0
        %1221 = vrot.lane.b32.xlu0 %v1208, 32
        %v1222 = vpop.permute.xlu0 %1221
        %1223 = vrot.lane.b32.xlu0 %v1210, 32
        %v1224 = vpop.permute.xlu0 %1223
        %1225 = vrot.lane.b32.xlu0 %v1213, 32
        %v1226 = vpop.permute.xlu0 %1225
        %1227 = vrot.lane.b32.xlu0 %v1215, 32
        %v1228 = vpop.permute.xlu0 %1227
        %vm1233 = vcmask 392448
        %1234 = vst.msk [vmem:[#allocation3] sm:$0xff] %vm1233, %v1222
        %1235 = vst.msk [vmem:[#allocation3 + $0x8] sm:$0xff] %vm1233, %v1224
        %1236 = vst.msk [vmem:[#allocation3 + $0x10] sm:$0xff] %vm1233, %v1226
        %1237 = vst.msk [vmem:[#allocation3 + $0x18] sm:$0xff] %vm1233, %v1228
        %1238 = vrot.lane.b32.xlu0 %v832, 80
        %v1239 = vpop.permute.xlu0 %1238
        %1240 = vrot.lane.b32.xlu0 %v833, 80
        %v1241 = vpop.permute.xlu0 %1240
        %1242 = vrot.lane.b32.xlu0 %v834, 80
        %v1243 = vpop.permute.xlu0 %1242
        %1244 = vrot.lane.b32.xlu0 %v835, 80
        %v1245 = vpop.permute.xlu0 %1244
        %v1247 = vsel %vm836, %v1239, 0
        %v1250 = vsel %vm836, %v1241, 0
        %v1253 = vsel %vm836, %v1243, 0
        %v1256 = vsel %vm836, %v1245, 0
        %1258 = vmatpush.bf16.xpose.msra.mxu0 0
        %1259 = vmatpush.bf16.xpose.msra.mxu0 0
        %1260 = vmatpush.bf16.xpose.msra.mxu0 0
        %1261 = vmatpush.bf16.xpose.msra.mxu0 0
        %1262 = vmatpush.bf16.xpose.msra.mxu0 0
        %1263 = vmatpush.bf16.xpose.msra.mxu0 0
        %1264 = vmatpush.bf16.xpose.msra.mxu0 %v1256
        %1265 = vmatpush.bf16.xpose.msra.mxu0 %v1253
        %1266 = vmatmul.bf16.gmra.mxu0 %v1247
        %v1267 = vpop.f32.mrf.mxu0
        %v1268 = vadd.f32 0.0, %v1267
        %v1269 = vpop.f32.mrf.mxu0
        %v1270 = vadd.f32 0.0, %v1269
        %1271 = vmatmul.bf16.gmra.mxu0 %v1250
        %v1272 = vpop.f32.mrf.mxu0
        %v1273 = vadd.f32 0.0, %v1272
        %v1274 = vpop.f32.mrf.mxu0
        %v1275 = vadd.f32 0.0, %v1274
        %1276 = vdwg.mxu0
        %v1277 = vmul.f32 %v1268, 0.25
        %v1278 = vmul.f32 %v1270, 0.25
        %v1279 = vmul.f32 %v1273, 0.25
        %v1280 = vmul.f32 %v1275, 0.25
        %v1281 = vsel %vm872, %v1277, -inf
        %1282 = vmax.xlane.f32.xlu0 %v1281
        %v1283 = vpop.xlane.xlu0 %1282
        %v1284 = vsel %vm872, %v1278, -inf
        %1285 = vmax.xlane.f32.xlu0 %v1284
        %v1286 = vpop.xlane.xlu0 %1285
        %v1287 = vsel %vm872, %v1279, -inf
        %1288 = vmax.xlane.f32.xlu0 %v1287
        %v1289 = vpop.xlane.xlu0 %1288
        %v1290 = vsel %vm872, %v1280, -inf
        %1291 = vmax.xlane.f32.xlu0 %v1290
        %v1292 = vpop.xlane.xlu0 %1291
        %v1293 = vsub.f32 %v1277, %v1283
        %v1294 = vsub.f32 %v1278, %v1286
        %v1295 = vsub.f32 %v1279, %v1289
        %v1296 = vsub.f32 %v1280, %v1292
        %v1297 = vmul.f32 %v1293, 1.442695
        %v1298 = vpow.pop %v1297
        %v1299 = vmul.f32 %v1294, 1.442695
        %v1300 = vpow.pop %v1299
        %v1301 = vmul.f32 %v1295, 1.442695
        %v1302 = vpow.pop %v1301
        %v1303 = vmul.f32 %v1296, 1.442695
        %v1304 = vpow.pop %v1303
        %v1305 = vsel %vm872, %v1298, 0.0
        %1306 = vadd.xlane.f32.xlu0 %v1305
        %v1307 = vpop.xlane.xlu0 %1306
        %v1308 = vsel %vm872, %v1300, 0.0
        %1309 = vadd.xlane.f32.xlu0 %v1308
        %v1310 = vpop.xlane.xlu0 %1309
        %v1311 = vsel %vm872, %v1302, 0.0
        %1312 = vadd.xlane.f32.xlu0 %v1311
        %v1313 = vpop.xlane.xlu0 %1312
        %v1314 = vsel %vm872, %v1304, 0.0
        %1315 = vadd.xlane.f32.xlu0 %v1314
        %v1316 = vpop.xlane.xlu0 %1315
        %v1317 = vrcp.pop %v1307
        %v1318 = vrcp.pop %v1310
        %v1319 = vrcp.pop %v1313
        %v1320 = vrcp.pop %v1316
        %v1321 = vmul.f32 %v1298, %v1317
        %v1322 = vmul.f32 %v1300, %v1318
        %v1323 = vmul.f32 %v1302, %v1319
        %v1324 = vmul.f32 %v1304, %v1320
        %v1325 = vpack.c.bf16 %v1322, %v1321
        %v1326 = vpack.c.bf16 %v1324, %v1323
        %1327 = vrot.lane.b32.xlu0 %v919, 80
        %v1328 = vpop.permute.xlu0 %1327
        %1329 = vrot.lane.b32.xlu0 %v920, 80
        %v1330 = vpop.permute.xlu0 %1329
        %v1334 = vsel %vm872, %v1325, 0
        %v1337 = vsel %vm872, %v1326, 0
        %1339 = vmatpush.bf16.msra.mxu0 0
        %1340 = vmatpush.bf16.msra.mxu0 0
        %1341 = vmatpush.bf16.msra.mxu0 0
        %1342 = vmatpush.bf16.msra.mxu0 0
        %1343 = vmatpush.bf16.msra.mxu0 0
        %1344 = vmatpush.bf16.msra.mxu0 0
        %1345 = vmatpush.bf16.msra.mxu0 %v1330
        %1346 = vmatpush.bf16.msra.mxu0 %v1328
        %1347 = vmatmul.bf16.gmra.mxu0 %v1334
        %v1348 = vpop.f32.mrf.mxu0
        %v1349 = vadd.f32 0.0, %v1348
        %v1350 = vpop.f32.mrf.mxu0
        %v1351 = vadd.f32 0.0, %v1350
        %1352 = vmatmul.bf16.gmra.mxu0 %v1337
        %v1353 = vpop.f32.mrf.mxu0
        %v1354 = vadd.f32 0.0, %v1353
        %v1355 = vpop.f32.mrf.mxu0
        %v1356 = vadd.f32 0.0, %v1355
        %1357 = vdwg.mxu0
        %1362 = vrot.lane.b32.xlu0 %v1349, 48
        %v1363 = vpop.permute.xlu0 %1362
        %1364 = vrot.lane.b32.xlu0 %v1351, 48
        %v1365 = vpop.permute.xlu0 %1364
        %1366 = vrot.lane.b32.xlu0 %v1354, 48
        %v1367 = vpop.permute.xlu0 %1366
        %1368 = vrot.lane.b32.xlu0 %v1356, 48
        %v1369 = vpop.permute.xlu0 %1368
        %vm1374 = vcmask 523648
        %1375 = vst.msk [vmem:[#allocation3] sm:$0xff] %vm1374, %v1363
        %1376 = vst.msk [vmem:[#allocation3 + $0x8] sm:$0xff] %vm1374, %v1365
        %1377 = vst.msk [vmem:[#allocation3 + $0x10] sm:$0xff] %vm1374, %v1367
        %1378 = vst.msk [vmem:[#allocation3 + $0x18] sm:$0xff] %vm1374, %v1369
        %1379 = vrot.lane.b32.xlu0 %v832, 64
        %v1380 = vpop.permute.xlu0 %1379
        %1381 = vrot.lane.b32.xlu0 %v833, 64
        %v1382 = vpop.permute.xlu0 %1381
        %1383 = vrot.lane.b32.xlu0 %v834, 64
        %v1384 = vpop.permute.xlu0 %1383
        %1385 = vrot.lane.b32.xlu0 %v835, 64
        %v1386 = vpop.permute.xlu0 %1385
        %v1388 = vsel %vm836, %v1380, 0
        %v1391 = vsel %vm836, %v1382, 0
        %v1394 = vsel %vm836, %v1384, 0
        %v1397 = vsel %vm836, %v1386, 0
        %1399 = vmatpush.bf16.xpose.msra.mxu0 0
        %1400 = vmatpush.bf16.xpose.msra.mxu0 0
        %1401 = vmatpush.bf16.xpose.msra.mxu0 0
        %1402 = vmatpush.bf16.xpose.msra.mxu0 0
        %1403 = vmatpush.bf16.xpose.msra.mxu0 0
        %1404 = vmatpush.bf16.xpose.msra.mxu0 0
        %1405 = vmatpush.bf16.xpose.msra.mxu0 %v1397
        %1406 = vmatpush.bf16.xpose.msra.mxu0 %v1394
        %1407 = vmatmul.bf16.gmra.mxu0 %v1388
        %v1408 = vpop.f32.mrf.mxu0
        %v1409 = vadd.f32 0.0, %v1408
        %v1410 = vpop.f32.mrf.mxu0
        %v1411 = vadd.f32 0.0, %v1410
        %1412 = vmatmul.bf16.gmra.mxu0 %v1391
        %v1413 = vpop.f32.mrf.mxu0
        %v1414 = vadd.f32 0.0, %v1413
        %v1415 = vpop.f32.mrf.mxu0
        %v1416 = vadd.f32 0.0, %v1415
        %1417 = vdwg.mxu0
        %v1418 = vmul.f32 %v1409, 0.25
        %v1419 = vmul.f32 %v1411, 0.25
        %v1420 = vmul.f32 %v1414, 0.25
        %v1421 = vmul.f32 %v1416, 0.25
        %v1422 = vsel %vm872, %v1418, -inf
        %1423 = vmax.xlane.f32.xlu0 %v1422
        %v1424 = vpop.xlane.xlu0 %1423
        %v1425 = vsel %vm872, %v1419, -inf
        %1426 = vmax.xlane.f32.xlu0 %v1425
        %v1427 = vpop.xlane.xlu0 %1426
        %v1428 = vsel %vm872, %v1420, -inf
        %1429 = vmax.xlane.f32.xlu0 %v1428
        %v1430 = vpop.xlane.xlu0 %1429
        %v1431 = vsel %vm872, %v1421, -inf
        %1432 = vmax.xlane.f32.xlu0 %v1431
        %v1433 = vpop.xlane.xlu0 %1432
        %v1434 = vsub.f32 %v1418, %v1424
        %v1435 = vsub.f32 %v1419, %v1427
        %v1436 = vsub.f32 %v1420, %v1430
        %v1437 = vsub.f32 %v1421, %v1433
        %v1438 = vmul.f32 %v1434, 1.442695
        %v1439 = vpow.pop %v1438
        %v1440 = vmul.f32 %v1435, 1.442695
        %v1441 = vpow.pop %v1440
        %v1442 = vmul.f32 %v1436, 1.442695
        %v1443 = vpow.pop %v1442
        %v1444 = vmul.f32 %v1437, 1.442695
        %v1445 = vpow.pop %v1444
        %v1446 = vsel %vm872, %v1439, 0.0
        %1447 = vadd.xlane.f32.xlu0 %v1446
        %v1448 = vpop.xlane.xlu0 %1447
        %v1449 = vsel %vm872, %v1441, 0.0
        %1450 = vadd.xlane.f32.xlu0 %v1449
        %v1451 = vpop.xlane.xlu0 %1450
        %v1452 = vsel %vm872, %v1443, 0.0
        %1453 = vadd.xlane.f32.xlu0 %v1452
        %v1454 = vpop.xlane.xlu0 %1453
        %v1455 = vsel %vm872, %v1445, 0.0
        %1456 = vadd.xlane.f32.xlu0 %v1455
        %v1457 = vpop.xlane.xlu0 %1456
        %v1458 = vrcp.pop %v1448
        %v1459 = vrcp.pop %v1451
        %v1460 = vrcp.pop %v1454
        %v1461 = vrcp.pop %v1457
        %v1462 = vmul.f32 %v1439, %v1458
        %v1463 = vmul.f32 %v1441, %v1459
        %v1464 = vmul.f32 %v1443, %v1460
        %v1465 = vmul.f32 %v1445, %v1461
        %v1466 = vpack.c.bf16 %v1463, %v1462
        %v1467 = vpack.c.bf16 %v1465, %v1464
        %1468 = vrot.lane.b32.xlu0 %v919, 64
        %v1469 = vpop.permute.xlu0 %1468
        %1470 = vrot.lane.b32.xlu0 %v920, 64
        %v1471 = vpop.permute.xlu0 %1470
        %v1475 = vsel %vm872, %v1466, 0
        %v1478 = vsel %vm872, %v1467, 0
        %1480 = vmatpush.bf16.msra.mxu0 0
        %1481 = vmatpush.bf16.msra.mxu0 0
        %1482 = vmatpush.bf16.msra.mxu0 0
        %1483 = vmatpush.bf16.msra.mxu0 0
        %1484 = vmatpush.bf16.msra.mxu0 0
        %1485 = vmatpush.bf16.msra.mxu0 0
        %1486 = vmatpush.bf16.msra.mxu0 %v1471
        %1487 = vmatpush.bf16.msra.mxu0 %v1469
        %1488 = vmatmul.bf16.gmra.mxu0 %v1475
        %v1489 = vpop.f32.mrf.mxu0
        %v1490 = vadd.f32 0.0, %v1489
        %v1491 = vpop.f32.mrf.mxu0
        %v1492 = vadd.f32 0.0, %v1491
        %1493 = vmatmul.bf16.gmra.mxu0 %v1478
        %v1494 = vpop.f32.mrf.mxu0
        %v1495 = vadd.f32 0.0, %v1494
        %v1496 = vpop.f32.mrf.mxu0
        %v1497 = vadd.f32 0.0, %v1496
        %1498 = vdwg.mxu0
        %1503 = vrot.lane.b32.xlu0 %v1490, 64
        %v1504 = vpop.permute.xlu0 %1503
        %1505 = vrot.lane.b32.xlu0 %v1492, 64
        %v1506 = vpop.permute.xlu0 %1505
        %1507 = vrot.lane.b32.xlu0 %v1495, 64
        %v1508 = vpop.permute.xlu0 %1507
        %1509 = vrot.lane.b32.xlu0 %v1497, 64
        %v1510 = vpop.permute.xlu0 %1509
        %vm1515 = vcmask 654848
        %1516 = vst.msk [vmem:[#allocation3] sm:$0xff] %vm1515, %v1504
        %1517 = vst.msk [vmem:[#allocation3 + $0x8] sm:$0xff] %vm1515, %v1506
        %1518 = vst.msk [vmem:[#allocation3 + $0x10] sm:$0xff] %vm1515, %v1508
        %1519 = vst.msk [vmem:[#allocation3 + $0x18] sm:$0xff] %vm1515, %v1510
        %1520 = vrot.lane.b32.xlu0 %v832, 48
        %v1521 = vpop.permute.xlu0 %1520
        %1522 = vrot.lane.b32.xlu0 %v833, 48
        %v1523 = vpop.permute.xlu0 %1522
        %1524 = vrot.lane.b32.xlu0 %v834, 48
        %v1525 = vpop.permute.xlu0 %1524
        %1526 = vrot.lane.b32.xlu0 %v835, 48
        %v1527 = vpop.permute.xlu0 %1526
        %v1529 = vsel %vm836, %v1521, 0
        %v1532 = vsel %vm836, %v1523, 0
        %v1535 = vsel %vm836, %v1525, 0
        %v1538 = vsel %vm836, %v1527, 0
        %1540 = vmatpush.bf16.xpose.msra.mxu0 0
        %1541 = vmatpush.bf16.xpose.msra.mxu0 0
        %1542 = vmatpush.bf16.xpose.msra.mxu0 0
        %1543 = vmatpush.bf16.xpose.msra.mxu0 0
        %1544 = vmatpush.bf16.xpose.msra.mxu0 0
        %1545 = vmatpush.bf16.xpose.msra.mxu0 0
        %1546 = vmatpush.bf16.xpose.msra.mxu0 %v1538
        %1547 = vmatpush.bf16.xpose.msra.mxu0 %v1535
        %1548 = vmatmul.bf16.gmra.mxu0 %v1529
        %v1549 = vpop.f32.mrf.mxu0
        %v1550 = vadd.f32 0.0, %v1549
        %v1551 = vpop.f32.mrf.mxu0
        %v1552 = vadd.f32 0.0, %v1551
        %1553 = vmatmul.bf16.gmra.mxu0 %v1532
        %v1554 = vpop.f32.mrf.mxu0
        %v1555 = vadd.f32 0.0, %v1554
        %v1556 = vpop.f32.mrf.mxu0
        %v1557 = vadd.f32 0.0, %v1556
        %1558 = vdwg.mxu0
        %v1559 = vmul.f32 %v1550, 0.25
        %v1560 = vmul.f32 %v1552, 0.25
        %v1561 = vmul.f32 %v1555, 0.25
        %v1562 = vmul.f32 %v1557, 0.25
        %v1563 = vsel %vm872, %v1559, -inf
        %1564 = vmax.xlane.f32.xlu0 %v1563
        %v1565 = vpop.xlane.xlu0 %1564
        %v1566 = vsel %vm872, %v1560, -inf
        %1567 = vmax.xlane.f32.xlu0 %v1566
        %v1568 = vpop.xlane.xlu0 %1567
        %v1569 = vsel %vm872, %v1561, -inf
        %1570 = vmax.xlane.f32.xlu0 %v1569
        %v1571 = vpop.xlane.xlu0 %1570
        %v1572 = vsel %vm872, %v1562, -inf
        %1573 = vmax.xlane.f32.xlu0 %v1572
        %v1574 = vpop.xlane.xlu0 %1573
        %v1575 = vsub.f32 %v1559, %v1565
        %v1576 = vsub.f32 %v1560, %v1568
        %v1577 = vsub.f32 %v1561, %v1571
        %v1578 = vsub.f32 %v1562, %v1574
        %v1579 = vmul.f32 %v1575, 1.442695
        %v1580 = vpow.pop %v1579
        %v1581 = vmul.f32 %v1576, 1.442695
        %v1582 = vpow.pop %v1581
        %v1583 = vmul.f32 %v1577, 1.442695
        %v1584 = vpow.pop %v1583
        %v1585 = vmul.f32 %v1578, 1.442695
        %v1586 = vpow.pop %v1585
        %v1587 = vsel %vm872, %v1580, 0.0
        %1588 = vadd.xlane.f32.xlu0 %v1587
        %v1589 = vpop.xlane.xlu0 %1588
        %v1590 = vsel %vm872, %v1582, 0.0
        %1591 = vadd.xlane.f32.xlu0 %v1590
        %v1592 = vpop.xlane.xlu0 %1591
        %v1593 = vsel %vm872, %v1584, 0.0
        %1594 = vadd.xlane.f32.xlu0 %v1593
        %v1595 = vpop.xlane.xlu0 %1594
        %v1596 = vsel %vm872, %v1586, 0.0
        %1597 = vadd.xlane.f32.xlu0 %v1596
        %v1598 = vpop.xlane.xlu0 %1597
        %v1599 = vrcp.pop %v1589
        %v1600 = vrcp.pop %v1592
        %v1601 = vrcp.pop %v1595
        %v1602 = vrcp.pop %v1598
        %v1603 = vmul.f32 %v1580, %v1599
        %v1604 = vmul.f32 %v1582, %v1600
        %v1605 = vmul.f32 %v1584, %v1601
        %v1606 = vmul.f32 %v1586, %v1602
        %v1607 = vpack.c.bf16 %v1604, %v1603
        %v1608 = vpack.c.bf16 %v1606, %v1605
        %1609 = vrot.lane.b32.xlu0 %v919, 48
        %v1610 = vpop.permute.xlu0 %1609
        %1611 = vrot.lane.b32.xlu0 %v920, 48
        %v1612 = vpop.permute.xlu0 %1611
        %v1616 = vsel %vm872, %v1607, 0
        %v1619 = vsel %vm872, %v1608, 0
        %1621 = vmatpush.bf16.msra.mxu0 0
        %1622 = vmatpush.bf16.msra.mxu0 0
        %1623 = vmatpush.bf16.msra.mxu0 0
        %1624 = vmatpush.bf16.msra.mxu0 0
        %1625 = vmatpush.bf16.msra.mxu0 0
        %1626 = vmatpush.bf16.msra.mxu0 0
        %1627 = vmatpush.bf16.msra.mxu0 %v1612
        %1628 = vmatpush.bf16.msra.mxu0 %v1610
        %1629 = vmatmul.bf16.gmra.mxu0 %v1616
        %v1630 = vpop.f32.mrf.mxu0
        %v1631 = vadd.f32 0.0, %v1630
        %v1632 = vpop.f32.mrf.mxu0
        %v1633 = vadd.f32 0.0, %v1632
        %1634 = vmatmul.bf16.gmra.mxu0 %v1619
        %v1635 = vpop.f32.mrf.mxu0
        %v1636 = vadd.f32 0.0, %v1635
        %v1637 = vpop.f32.mrf.mxu0
        %v1638 = vadd.f32 0.0, %v1637
        %1639 = vdwg.mxu0
        %1644 = vrot.lane.b32.xlu0 %v1631, 80
        %v1645 = vpop.permute.xlu0 %1644
        %1646 = vrot.lane.b32.xlu0 %v1633, 80
        %v1647 = vpop.permute.xlu0 %1646
        %1648 = vrot.lane.b32.xlu0 %v1636, 80
        %v1649 = vpop.permute.xlu0 %1648
        %1650 = vrot.lane.b32.xlu0 %v1638, 80
        %v1651 = vpop.permute.xlu0 %1650
        %vm1656 = vcmask 786048
        %1657 = vst.msk [vmem:[#allocation3] sm:$0xff] %vm1656, %v1645
        %1658 = vst.msk [vmem:[#allocation3 + $0x8] sm:$0xff] %vm1656, %v1647
        %1659 = vst.msk [vmem:[#allocation3 + $0x10] sm:$0xff] %vm1656, %v1649
        %1660 = vst.msk [vmem:[#allocation3 + $0x18] sm:$0xff] %vm1656, %v1651
        %1661 = vrot.lane.b32.xlu0 %v832, 32
        %v1662 = vpop.permute.xlu0 %1661
        %1663 = vrot.lane.b32.xlu0 %v833, 32
        %v1664 = vpop.permute.xlu0 %1663
        %1665 = vrot.lane.b32.xlu0 %v834, 32
        %v1666 = vpop.permute.xlu0 %1665
        %1667 = vrot.lane.b32.xlu0 %v835, 32
        %v1668 = vpop.permute.xlu0 %1667
        %v1670 = vsel %vm836, %v1662, 0
        %v1673 = vsel %vm836, %v1664, 0
        %v1676 = vsel %vm836, %v1666, 0
        %v1679 = vsel %vm836, %v1668, 0
        %1681 = vmatpush.bf16.xpose.msra.mxu0 0
        %1682 = vmatpush.bf16.xpose.msra.mxu0 0
        %1683 = vmatpush.bf16.xpose.msra.mxu0 0
        %1684 = vmatpush.bf16.xpose.msra.mxu0 0
        %1685 = vmatpush.bf16.xpose.msra.mxu0 0
        %1686 = vmatpush.bf16.xpose.msra.mxu0 0
        %1687 = vmatpush.bf16.xpose.msra.mxu0 %v1679
        %1688 = vmatpush.bf16.xpose.msra.mxu0 %v1676
        %1689 = vmatmul.bf16.gmra.mxu0 %v1670
        %v1690 = vpop.f32.mrf.mxu0
        %v1691 = vadd.f32 0.0, %v1690
        %v1692 = vpop.f32.mrf.mxu0
        %v1693 = vadd.f32 0.0, %v1692
        %1694 = vmatmul.bf16.gmra.mxu0 %v1673
        %v1695 = vpop.f32.mrf.mxu0
        %v1696 = vadd.f32 0.0, %v1695
        %v1697 = vpop.f32.mrf.mxu0
        %v1698 = vadd.f32 0.0, %v1697
        %1699 = vdwg.mxu0
        %v1700 = vmul.f32 %v1691, 0.25
        %v1701 = vmul.f32 %v1693, 0.25
        %v1702 = vmul.f32 %v1696, 0.25
        %v1703 = vmul.f32 %v1698, 0.25
        %v1704 = vsel %vm872, %v1700, -inf
        %1705 = vmax.xlane.f32.xlu0 %v1704
        %v1706 = vpop.xlane.xlu0 %1705
        %v1707 = vsel %vm872, %v1701, -inf
        %1708 = vmax.xlane.f32.xlu0 %v1707
        %v1709 = vpop.xlane.xlu0 %1708
        %v1710 = vsel %vm872, %v1702, -inf
        %1711 = vmax.xlane.f32.xlu0 %v1710
        %v1712 = vpop.xlane.xlu0 %1711
        %v1713 = vsel %vm872, %v1703, -inf
        %1714 = vmax.xlane.f32.xlu0 %v1713
        %v1715 = vpop.xlane.xlu0 %1714
        %v1716 = vsub.f32 %v1700, %v1706
        %v1717 = vsub.f32 %v1701, %v1709
        %v1718 = vsub.f32 %v1702, %v1712
        %v1719 = vsub.f32 %v1703, %v1715
        %v1720 = vmul.f32 %v1716, 1.442695
        %v1721 = vpow.pop %v1720
        %v1722 = vmul.f32 %v1717, 1.442695
        %v1723 = vpow.pop %v1722
        %v1724 = vmul.f32 %v1718, 1.442695
        %v1725 = vpow.pop %v1724
        %v1726 = vmul.f32 %v1719, 1.442695
        %v1727 = vpow.pop %v1726
        %v1728 = vsel %vm872, %v1721, 0.0
        %1729 = vadd.xlane.f32.xlu0 %v1728
        %v1730 = vpop.xlane.xlu0 %1729
        %v1731 = vsel %vm872, %v1723, 0.0
        %1732 = vadd.xlane.f32.xlu0 %v1731
        %v1733 = vpop.xlane.xlu0 %1732
        %v1734 = vsel %vm872, %v1725, 0.0
        %1735 = vadd.xlane.f32.xlu0 %v1734
        %v1736 = vpop.xlane.xlu0 %1735
        %v1737 = vsel %vm872, %v1727, 0.0
        %1738 = vadd.xlane.f32.xlu0 %v1737
        %v1739 = vpop.xlane.xlu0 %1738
        %v1740 = vrcp.pop %v1730
        %v1741 = vrcp.pop %v1733
        %v1742 = vrcp.pop %v1736
        %v1743 = vrcp.pop %v1739
        %v1744 = vmul.f32 %v1721, %v1740
        %v1745 = vmul.f32 %v1723, %v1741
        %v1746 = vmul.f32 %v1725, %v1742
        %v1747 = vmul.f32 %v1727, %v1743
        %v1748 = vpack.c.bf16 %v1745, %v1744
        %v1749 = vpack.c.bf16 %v1747, %v1746
        %1750 = vrot.lane.b32.xlu0 %v919, 32
        %v1751 = vpop.permute.xlu0 %1750
        %1752 = vrot.lane.b32.xlu0 %v920, 32
        %v1753 = vpop.permute.xlu0 %1752
        %v1757 = vsel %vm872, %v1748, 0
        %v1760 = vsel %vm872, %v1749, 0
        %1762 = vmatpush.bf16.msra.mxu0 0
        %1763 = vmatpush.bf16.msra.mxu0 0
        %1764 = vmatpush.bf16.msra.mxu0 0
        %1765 = vmatpush.bf16.msra.mxu0 0
        %1766 = vmatpush.bf16.msra.mxu0 0
        %1767 = vmatpush.bf16.msra.mxu0 0
        %1768 = vmatpush.bf16.msra.mxu0 %v1753
        %1769 = vmatpush.bf16.msra.mxu0 %v1751
        %1770 = vmatmul.bf16.gmra.mxu0 %v1757
        %v1771 = vpop.f32.mrf.mxu0
        %v1772 = vadd.f32 0.0, %v1771
        %v1773 = vpop.f32.mrf.mxu0
        %v1774 = vadd.f32 0.0, %v1773
        %1775 = vmatmul.bf16.gmra.mxu0 %v1760
        %v1776 = vpop.f32.mrf.mxu0
        %v1777 = vadd.f32 0.0, %v1776
        %v1778 = vpop.f32.mrf.mxu0
        %v1779 = vadd.f32 0.0, %v1778
        %1780 = vdwg.mxu0
        %1785 = vrot.lane.b32.xlu0 %v1772, 96
        %v1786 = vpop.permute.xlu0 %1785
        %1787 = vrot.lane.b32.xlu0 %v1774, 96
        %v1788 = vpop.permute.xlu0 %1787
        %1789 = vrot.lane.b32.xlu0 %v1777, 96
        %v1790 = vpop.permute.xlu0 %1789
        %1791 = vrot.lane.b32.xlu0 %v1779, 96
        %v1792 = vpop.permute.xlu0 %1791
        %vm1797 = vcmask 917248
        %1798 = vst.msk [vmem:[#allocation3] sm:$0xff] %vm1797, %v1786
        %1799 = vst.msk [vmem:[#allocation3 + $0x8] sm:$0xff] %vm1797, %v1788
        %1800 = vst.msk [vmem:[#allocation3 + $0x10] sm:$0xff] %vm1797, %v1790
        %1801 = vst.msk [vmem:[#allocation3 + $0x18] sm:$0xff] %vm1797, %v1792
        %1802 = vrot.lane.b32.xlu0 %v832, 16
        %v1803 = vpop.permute.xlu0 %1802
        %1804 = vrot.lane.b32.xlu0 %v833, 16
        %v1805 = vpop.permute.xlu0 %1804
        %1806 = vrot.lane.b32.xlu0 %v834, 16
        %v1807 = vpop.permute.xlu0 %1806
        %1808 = vrot.lane.b32.xlu0 %v835, 16
        %v1809 = vpop.permute.xlu0 %1808
        %v1811 = vsel %vm836, %v1803, 0
        %v1814 = vsel %vm836, %v1805, 0
        %v1817 = vsel %vm836, %v1807, 0
        %v1820 = vsel %vm836, %v1809, 0
        %1822 = vmatpush.bf16.xpose.msra.mxu0 0
        %1823 = vmatpush.bf16.xpose.msra.mxu0 0
        %1824 = vmatpush.bf16.xpose.msra.mxu0 0
        %1825 = vmatpush.bf16.xpose.msra.mxu0 0
        %1826 = vmatpush.bf16.xpose.msra.mxu0 0
        %1827 = vmatpush.bf16.xpose.msra.mxu0 0
        %1828 = vmatpush.bf16.xpose.msra.mxu0 %v1820
        %1829 = vmatpush.bf16.xpose.msra.mxu0 %v1817
        %1830 = vmatmul.bf16.gmra.mxu0 %v1811
        %v1831 = vpop.f32.mrf.mxu0
        %v1832 = vadd.f32 0.0, %v1831
        %v1833 = vpop.f32.mrf.mxu0
        %v1834 = vadd.f32 0.0, %v1833
        %1835 = vmatmul.bf16.gmra.mxu0 %v1814
        %v1836 = vpop.f32.mrf.mxu0
        %v1837 = vadd.f32 0.0, %v1836
        %v1838 = vpop.f32.mrf.mxu0
        %v1839 = vadd.f32 0.0, %v1838
        %1840 = vdwg.mxu0
        %v1841 = vmul.f32 %v1832, 0.25
        %v1842 = vmul.f32 %v1834, 0.25
        %v1843 = vmul.f32 %v1837, 0.25
        %v1844 = vmul.f32 %v1839, 0.25
        %v1845 = vsel %vm872, %v1841, -inf
        %1846 = vmax.xlane.f32.xlu0 %v1845
        %v1847 = vpop.xlane.xlu0 %1846
        %v1848 = vsel %vm872, %v1842, -inf
        %1849 = vmax.xlane.f32.xlu0 %v1848
        %v1850 = vpop.xlane.xlu0 %1849
        %v1851 = vsel %vm872, %v1843, -inf
        %1852 = vmax.xlane.f32.xlu0 %v1851
        %v1853 = vpop.xlane.xlu0 %1852
        %v1854 = vsel %vm872, %v1844, -inf
        %1855 = vmax.xlane.f32.xlu0 %v1854
        %v1856 = vpop.xlane.xlu0 %1855
        %v1857 = vsub.f32 %v1841, %v1847
        %v1858 = vsub.f32 %v1842, %v1850
        %v1859 = vsub.f32 %v1843, %v1853
        %v1860 = vsub.f32 %v1844, %v1856
        %v1861 = vmul.f32 %v1857, 1.442695
        %v1862 = vpow.pop %v1861
        %v1863 = vmul.f32 %v1858, 1.442695
        %v1864 = vpow.pop %v1863
        %v1865 = vmul.f32 %v1859, 1.442695
        %v1866 = vpow.pop %v1865
        %v1867 = vmul.f32 %v1860, 1.442695
        %v1868 = vpow.pop %v1867
        %v1869 = vsel %vm872, %v1862, 0.0
        %1870 = vadd.xlane.f32.xlu0 %v1869
        %v1871 = vpop.xlane.xlu0 %1870
        %v1872 = vsel %vm872, %v1864, 0.0
        %1873 = vadd.xlane.f32.xlu0 %v1872
        %v1874 = vpop.xlane.xlu0 %1873
        %v1875 = vsel %vm872, %v1866, 0.0
        %1876 = vadd.xlane.f32.xlu0 %v1875
        %v1877 = vpop.xlane.xlu0 %1876
        %v1878 = vsel %vm872, %v1868, 0.0
        %1879 = vadd.xlane.f32.xlu0 %v1878
        %v1880 = vpop.xlane.xlu0 %1879
        %v1881 = vrcp.pop %v1871
        %v1882 = vrcp.pop %v1874
        %v1883 = vrcp.pop %v1877
        %v1884 = vrcp.pop %v1880
        %v1885 = vmul.f32 %v1862, %v1881
        %v1886 = vmul.f32 %v1864, %v1882
        %v1887 = vmul.f32 %v1866, %v1883
        %v1888 = vmul.f32 %v1868, %v1884
        %v1889 = vpack.c.bf16 %v1886, %v1885
        %v1890 = vpack.c.bf16 %v1888, %v1887
        %1891 = vrot.lane.b32.xlu0 %v919, 16
        %v1892 = vpop.permute.xlu0 %1891
        %1893 = vrot.lane.b32.xlu0 %v920, 16
        %v1894 = vpop.permute.xlu0 %1893
        %v1898 = vsel %vm872, %v1889, 0
        %v1901 = vsel %vm872, %v1890, 0
        %1903 = vmatpush.bf16.msra.mxu0 0
        %1904 = vmatpush.bf16.msra.mxu0 0
        %1905 = vmatpush.bf16.msra.mxu0 0
        %1906 = vmatpush.bf16.msra.mxu0 0
        %1907 = vmatpush.bf16.msra.mxu0 0
        %1908 = vmatpush.bf16.msra.mxu0 0
        %1909 = vmatpush.bf16.msra.mxu0 %v1894
        %1910 = vmatpush.bf16.msra.mxu0 %v1892
        %1911 = vmatmul.bf16.gmra.mxu0 %v1898
        %v1912 = vpop.f32.mrf.mxu0
        %v1913 = vadd.f32 0.0, %v1912
        %v1914 = vpop.f32.mrf.mxu0
        %v1915 = vadd.f32 0.0, %v1914
        %1916 = vmatmul.bf16.gmra.mxu0 %v1901
        %v1917 = vpop.f32.mrf.mxu0
        %v1918 = vadd.f32 0.0, %v1917
        %v1919 = vpop.f32.mrf.mxu0
        %v1920 = vadd.f32 0.0, %v1919
        %1921 = vdwg.mxu0
        %1926 = vrot.lane.b32.xlu0 %v1913, 112
        %v1927 = vpop.permute.xlu0 %1926
        %1928 = vrot.lane.b32.xlu0 %v1915, 112
        %v1929 = vpop.permute.xlu0 %1928
        %1930 = vrot.lane.b32.xlu0 %v1918, 112
        %v1931 = vpop.permute.xlu0 %1930
        %1932 = vrot.lane.b32.xlu0 %v1920, 112
        %v1933 = vpop.permute.xlu0 %1932
        %vm1938 = vcmask 1048448
        %1939 = vst.msk [vmem:[#allocation3] sm:$0xff] %vm1938, %v1927
        %1940 = vst.msk [vmem:[#allocation3 + $0x8] sm:$0xff] %vm1938, %v1929
        %1941 = vst.msk [vmem:[#allocation3 + $0x10] sm:$0xff] %vm1938, %v1931
        %1942 = vst.msk [vmem:[#allocation3 + $0x18] sm:$0xff] %vm1938, %v1933
        %v1943 = vld [vmem:[#allocation3] sm:$0xff]
        %v1944 = vld [vmem:[#allocation3 + $0x8] sm:$0xff]
        %v1945 = vld [vmem:[#allocation3 + $0x10] sm:$0xff]
        %v1946 = vld [vmem:[#allocation3 + $0x18] sm:$0xff]
        %v1947 = vpack.c.bf16 %v1944, %v1943
        %v1948 = vpack.c.bf16 %v1946, %v1945
        %v1949 = vld [vmem:[%s480] sm:$0xf]
        %v1950 = vld [vmem:[%s480 + $0x4] sm:$0xf]
        %v1951 = vld [vmem:[%s480 + $0x8] sm:$0xf]
        %v1952 = vld [vmem:[%s480 + $0xc] sm:$0xf]
        %v1953 = vld [vmem:[%s480 + $0x10] sm:$0xf]
        %v1954 = vld [vmem:[%s480 + $0x14] sm:$0xf]
        %v1955 = vld [vmem:[%s480 + $0x18] sm:$0xf]
        %v1956 = vld [vmem:[%s480 + $0x1c] sm:$0xf]
        %v1957 = vld [vmem:[%s480 + $0x20] sm:$0xf]
        %v1958 = vld [vmem:[%s480 + $0x24] sm:$0xf]
        %v1959 = vld [vmem:[%s480 + $0x28] sm:$0xf]
        %v1960 = vld [vmem:[%s480 + $0x2c] sm:$0xf]
        %v1961 = vld [vmem:[%s480 + $0x30] sm:$0xf]
        %v1962 = vld [vmem:[%s480 + $0x34] sm:$0xf]
        %v1963 = vld [vmem:[%s480 + $0x38] sm:$0xf]
        %v1964 = vld [vmem:[%s480 + $0x3c] sm:$0xf]
        %v1965 = vperm.slane %v604, 0
        %v1982 = vunpack.c.l.b16 %v1949
        %v1983 = vunpack.c.l.b16 %v1950
        %v1984 = vunpack.c.l.b16 %v1951
        %v1985 = vunpack.c.l.b16 %v1952
        %v1986 = vunpack.c.l.b16 %v1953
        %v1987 = vunpack.c.l.b16 %v1954
        %v1988 = vunpack.c.l.b16 %v1955
        %v1989 = vunpack.c.l.b16 %v1956
        %v1990 = vunpack.c.l.b16 %v1957
        %v1991 = vunpack.c.l.b16 %v1958
        %v1992 = vunpack.c.l.b16 %v1959
        %v1993 = vunpack.c.l.b16 %v1960
        %v1994 = vunpack.c.l.b16 %v1961
        %v1995 = vunpack.c.l.b16 %v1962
        %v1996 = vunpack.c.l.b16 %v1963
        %v1997 = vunpack.c.l.b16 %v1964
        %v1998 = vpack.c.b16 %v1983, %v1982
        %v1999 = vpack.c.b16 %v1985, %v1984
        %v2000 = vpack.c.b16 %v1987, %v1986
        %v2001 = vpack.c.b16 %v1989, %v1988
        %v2002 = vpack.c.b16 %v1991, %v1990
        %v2003 = vpack.c.b16 %v1993, %v1992
        %v2004 = vpack.c.b16 %v1995, %v1994
        %v2005 = vpack.c.b16 %v1997, %v1996
        %2014 = vmatpush.bf16.msra.mxu0 %v2005
        %2015 = vmatpush.bf16.msra.mxu0 %v2004
        %2016 = vmatpush.bf16.msra.mxu0 %v2003
        %2017 = vmatpush.bf16.msra.mxu0 %v2002
        %2018 = vmatpush.bf16.msra.mxu0 %v2001
        %2019 = vmatpush.bf16.msra.mxu0 %v2000
        %2020 = vmatpush.bf16.msra.mxu0 %v1999
        %2021 = vmatpush.bf16.msra.mxu0 %v1998
        %2022 = vmatmul.bf16.gmra.mxu0 %v1947
        %v2023 = vpop.f32.mrf.mxu0
        %v2024 = vadd.f32 %v1965, %v2023
        %v2025 = vpop.f32.mrf.mxu0
        %v2026 = vadd.f32 %v1965, %v2025
        %2027 = vmatmul.bf16.gmra.mxu0 %v1948
        %v2028 = vpop.f32.mrf.mxu0
        %v2029 = vadd.f32 %v1965, %v2028
        %v2030 = vpop.f32.mrf.mxu0
        %v2031 = vadd.f32 %v1965, %v2030
        %2032 = vdwg.mxu0
        %v2033 = vadd.f32 %v600, %v2024
        %v2034 = vadd.f32 %v601, %v2026
        %v2035 = vadd.f32 %v602, %v2029
        %v2036 = vadd.f32 %v603, %v2031
        %2037 = vadd.xlane.f32.xlu0 %v2033
        %v2038 = vpop.xlane.xlu0 %2037
        %2039 = vadd.xlane.f32.xlu0 %v2034
        %v2040 = vpop.xlane.xlu0 %2039
        %2041 = vadd.xlane.f32.xlu0 %v2035
        %v2042 = vpop.xlane.xlu0 %2041
        %2043 = vadd.xlane.f32.xlu0 %v2036
        %v2044 = vpop.xlane.xlu0 %2043
        %v2045 = vrcp.pop 128.0
        %v2046 = vmul.f32 128.0, %v2045
        %v2047 = vsub.f32 1.0, %v2046
        %v2048 = vmul.f32 %v2045, %v2047
        %v2049 = vadd.f32 %v2045, %v2048
        %vm2050 = vweird.f32 %v2045
        %v2051 = vsel %vm2050, %v2045, %v2049
        %v2052 = vmul.f32 %v2038, %v2051
        %v2053 = vmul.f32 %v2040, %v2051
        %v2054 = vmul.f32 %v2042, %v2051
        %v2055 = vmul.f32 %v2044, %v2051
        %v2056 = vsub.f32 %v2033, %v2052
        %v2057 = vsub.f32 %v2034, %v2053
        %v2058 = vsub.f32 %v2035, %v2054
        %v2059 = vsub.f32 %v2036, %v2055
        %v2060 = vmul.f32 %v2056, %v2056
        %v2061 = vmul.f32 %v2057, %v2057
        %v2062 = vmul.f32 %v2058, %v2058
        %v2063 = vmul.f32 %v2059, %v2059
        %2064 = vadd.xlane.f32.xlu0 %v2060
        %v2065 = vpop.xlane.xlu0 %2064
        %2066 = vadd.xlane.f32.xlu0 %v2061
        %v2067 = vpop.xlane.xlu0 %2066
        %2068 = vadd.xlane.f32.xlu0 %v2062
        %v2069 = vpop.xlane.xlu0 %2068
        %2070 = vadd.xlane.f32.xlu0 %v2063
        %v2071 = vpop.xlane.xlu0 %2070
        %v2072 = vmul.f32 %v2065, %v2051
        %v2073 = vmul.f32 %v2067, %v2051
        %v2074 = vmul.f32 %v2069, %v2051
        %v2075 = vmul.f32 %v2071, %v2051
        %v2076 = vadd.f32 %v2072, 1e-05
        %v2077 = vadd.f32 %v2073, 1e-05
        %v2078 = vadd.f32 %v2074, 1e-05
        %v2079 = vadd.f32 %v2075, 1e-05
        %v2080 = vrsqrt.pop %v2076
        %v2081 = vmul.f32 %v2080, %v2076
        %v2082 = vmul.f32 %v2081, %v2080
        %v2083 = vmul.f32 0.5, %v2082
        %v2084 = vsub.f32 1.5, %v2083
        %v2085 = vmul.f32 %v2080, %v2084
        %vm2086 = vweird.f32 %v2076
        %vm2087 = vweird.f32 %v2080
        %vm2088 = vmor %vm2086, %vm2087
        %v2089 = vsel %vm2088, %v2080, %v2085
        %v2090 = vrsqrt.pop %v2077
        %v2091 = vmul.f32 %v2090, %v2077
        %v2092 = vmul.f32 %v2091, %v2090
        %v2093 = vmul.f32 0.5, %v2092
        %v2094 = vsub.f32 1.5, %v2093
        %v2095 = vmul.f32 %v2090, %v2094
        %vm2096 = vweird.f32 %v2077
        %vm2097 = vweird.f32 %v2090
        %vm2098 = vmor %vm2096, %vm2097
        %v2099 = vsel %vm2098, %v2090, %v2095
        %v2100 = vrsqrt.pop %v2078
        %v2101 = vmul.f32 %v2100, %v2078
        %v2102 = vmul.f32 %v2101, %v2100
        %v2103 = vmul.f32 0.5, %v2102
        %v2104 = vsub.f32 1.5, %v2103
        %v2105 = vmul.f32 %v2100, %v2104
        %vm2106 = vweird.f32 %v2078
        %vm2107 = vweird.f32 %v2100
        %vm2108 = vmor %vm2106, %vm2107
        %v2109 = vsel %vm2108, %v2100, %v2105
        %v2110 = vrsqrt.pop %v2079
        %v2111 = vmul.f32 %v2110, %v2079
        %v2112 = vmul.f32 %v2111, %v2110
        %v2113 = vmul.f32 0.5, %v2112
        %v2114 = vsub.f32 1.5, %v2113
        %v2115 = vmul.f32 %v2110, %v2114
        %vm2116 = vweird.f32 %v2079
        %vm2117 = vweird.f32 %v2110
        %vm2118 = vmor %vm2116, %vm2117
        %v2119 = vsel %vm2118, %v2110, %v2115
        %v2120 = vmul.f32 %v2056, %v2089
        %v2121 = vmul.f32 %v2057, %v2099
        %v2122 = vmul.f32 %v2058, %v2109
        %v2123 = vmul.f32 %v2059, %v2119
        %v2124 = vperm.slane %v604, 1
        %v2125 = vmul.f32 %v2120, %v2124
        %v2126 = vmul.f32 %v2121, %v2124
        %v2127 = vmul.f32 %v2122, %v2124
        %v2128 = vmul.f32 %v2123, %v2124
        %v2129 = vperm.slane %v604, 2
        %v2130 = vadd.f32 %v2125, %v2129
        %v2131 = vadd.f32 %v2126, %v2129
        %v2132 = vadd.f32 %v2127, %v2129
        %v2133 = vadd.f32 %v2128, %v2129
        %v2134 = vpack.c.bf16 %v2131, %v2130
        %v2135 = vpack.c.bf16 %v2133, %v2132
        %v2136 = vld [vmem:[%s490] sm:$0xff]
        %v2137 = vld [vmem:[%s490 + $0x8] sm:$0xff]
        %v2138 = vld [vmem:[%s490 + $0x10] sm:$0xff]
        %v2139 = vld [vmem:[%s490 + $0x18] sm:$0xff]
        %v2140 = vld [vmem:[%s490 + $0x20] sm:$0xff]
        %v2141 = vld [vmem:[%s490 + $0x28] sm:$0xff]
        %v2142 = vld [vmem:[%s490 + $0x30] sm:$0xff]
        %v2143 = vld [vmem:[%s490 + $0x38] sm:$0xff]
        %v2144 = vld [vmem:[%s490 + $0x40] sm:$0xff]
        %v2145 = vld [vmem:[%s490 + $0x48] sm:$0xff]
        %v2146 = vld [vmem:[%s490 + $0x50] sm:$0xff]
        %v2147 = vld [vmem:[%s490 + $0x58] sm:$0xff]
        %v2148 = vld [vmem:[%s490 + $0x60] sm:$0xff]
        %v2149 = vld [vmem:[%s490 + $0x68] sm:$0xff]
        %v2150 = vld [vmem:[%s490 + $0x70] sm:$0xff]
        %v2151 = vld [vmem:[%s490 + $0x78] sm:$0xff]
        %v2152 = vld [vmem:[%s490 + $0x80] sm:$0xff]
        %v2153 = vld [vmem:[%s490 + $0x88] sm:$0xff]
        %v2154 = vld [vmem:[%s490 + $0x90] sm:$0xff]
        %v2155 = vld [vmem:[%s490 + $0x98] sm:$0xff]
        %v2156 = vld [vmem:[%s490 + $0xa0] sm:$0xff]
        %v2157 = vld [vmem:[%s490 + $0xa8] sm:$0xff]
        %v2158 = vld [vmem:[%s490 + $0xb0] sm:$0xff]
        %v2159 = vld [vmem:[%s490 + $0xb8] sm:$0xff]
        %v2160 = vld [vmem:[%s490 + $0xc0] sm:$0xff]
        %v2161 = vld [vmem:[%s490 + $0xc8] sm:$0xff]
        %v2162 = vld [vmem:[%s490 + $0xd0] sm:$0xff]
        %v2163 = vld [vmem:[%s490 + $0xd8] sm:$0xff]
        %v2164 = vld [vmem:[%s490 + $0xe0] sm:$0xff]
        %v2165 = vld [vmem:[%s490 + $0xe8] sm:$0xff]
        %v2166 = vld [vmem:[%s490 + $0xf0] sm:$0xff]
        %v2167 = vld [vmem:[%s490 + $0xf8] sm:$0xff]
        %v2168 = vld [vmem:[%s582] sm:$0xf]
        %v2170 = vperm.slane %v2168, 0
        %v2171 = vperm.slane %v2168, 1
        %v2172 = vperm.slane %v2168, 2
        %v2173 = vperm.slane %v2168, 3
        %v2210 = vunpack.c.l.b16 %v2136
        %v2211 = vunpack.c.h.b16 %v2136
        %v2212 = vunpack.c.l.b16 %v2137
        %v2213 = vunpack.c.h.b16 %v2137
        %v2214 = vunpack.c.l.b16 %v2138
        %v2215 = vunpack.c.h.b16 %v2138
        %v2216 = vunpack.c.l.b16 %v2139
        %v2217 = vunpack.c.h.b16 %v2139
        %v2218 = vunpack.c.l.b16 %v2140
        %v2219 = vunpack.c.h.b16 %v2140
        %v2220 = vunpack.c.l.b16 %v2141
        %v2221 = vunpack.c.h.b16 %v2141
        %v2222 = vunpack.c.l.b16 %v2142
        %v2223 = vunpack.c.h.b16 %v2142
        %v2224 = vunpack.c.l.b16 %v2143
        %v2225 = vunpack.c.h.b16 %v2143
        %v2226 = vunpack.c.l.b16 %v2144
        %v2227 = vunpack.c.h.b16 %v2144
        %v2228 = vunpack.c.l.b16 %v2145
        %v2229 = vunpack.c.h.b16 %v2145
        %v2230 = vunpack.c.l.b16 %v2146
        %v2231 = vunpack.c.h.b16 %v2146
        %v2232 = vunpack.c.l.b16 %v2147
        %v2233 = vunpack.c.h.b16 %v2147
        %v2234 = vunpack.c.l.b16 %v2148
        %v2235 = vunpack.c.h.b16 %v2148
        %v2236 = vunpack.c.l.b16 %v2149
        %v2237 = vunpack.c.h.b16 %v2149
        %v2238 = vunpack.c.l.b16 %v2150
        %v2239 = vunpack.c.h.b16 %v2150
        %v2240 = vunpack.c.l.b16 %v2151
        %v2241 = vunpack.c.h.b16 %v2151
        %v2242 = vunpack.c.l.b16 %v2152
        %v2243 = vunpack.c.h.b16 %v2152
        %v2244 = vunpack.c.l.b16 %v2153
        %v2245 = vunpack.c.h.b16 %v2153
        %v2246 = vunpack.c.l.b16 %v2154
        %v2247 = vunpack.c.h.b16 %v2154
        %v2248 = vunpack.c.l.b16 %v2155
        %v2249 = vunpack.c.h.b16 %v2155
        %v2250 = vunpack.c.l.b16 %v2156
        %v2251 = vunpack.c.h.b16 %v2156
        %v2252 = vunpack.c.l.b16 %v2157
        %v2253 = vunpack.c.h.b16 %v2157
        %v2254 = vunpack.c.l.b16 %v2158
        %v2255 = vunpack.c.h.b16 %v2158
        %v2256 = vunpack.c.l.b16 %v2159
        %v2257 = vunpack.c.h.b16 %v2159
        %v2258 = vunpack.c.l.b16 %v2160
        %v2259 = vunpack.c.h.b16 %v2160
        %v2260 = vunpack.c.l.b16 %v2161
        %v2261 = vunpack.c.h.b16 %v2161
        %v2262 = vunpack.c.l.b16 %v2162
        %v2263 = vunpack.c.h.b16 %v2162
        %v2264 = vunpack.c.l.b16 %v2163
        %v2265 = vunpack.c.h.b16 %v2163
        %v2266 = vunpack.c.l.b16 %v2164
        %v2267 = vunpack.c.h.b16 %v2164
        %v2268 = vunpack.c.l.b16 %v2165
        %v2269 = vunpack.c.h.b16 %v2165
        %v2270 = vunpack.c.l.b16 %v2166
        %v2271 = vunpack.c.h.b16 %v2166
        %v2272 = vunpack.c.l.b16 %v2167
        %v2273 = vunpack.c.h.b16 %v2167
        %v2274 = vpack.c.b16 %v2214, %v2210
        %v2275 = vpack.c.b16 %v2215, %v2211
        %v2276 = vpack.c.b16 %v2216, %v2212
        %v2277 = vpack.c.b16 %v2217, %v2213
        %v2278 = vpack.c.b16 %v2222, %v2218
        %v2279 = vpack.c.b16 %v2223, %v2219
        %v2280 = vpack.c.b16 %v2224, %v2220
        %v2281 = vpack.c.b16 %v2225, %v2221
        %v2282 = vpack.c.b16 %v2230, %v2226
        %v2283 = vpack.c.b16 %v2231, %v2227
        %v2284 = vpack.c.b16 %v2232, %v2228
        %v2285 = vpack.c.b16 %v2233, %v2229
        %v2286 = vpack.c.b16 %v2238, %v2234
        %v2287 = vpack.c.b16 %v2239, %v2235
        %v2288 = vpack.c.b16 %v2240, %v2236
        %v2289 = vpack.c.b16 %v2241, %v2237
        %v2290 = vpack.c.b16 %v2246, %v2242
        %v2291 = vpack.c.b16 %v2247, %v2243
        %v2292 = vpack.c.b16 %v2248, %v2244
        %v2293 = vpack.c.b16 %v2249, %v2245
        %v2294 = vpack.c.b16 %v2254, %v2250
        %v2295 = vpack.c.b16 %v2255, %v2251
        %v2296 = vpack.c.b16 %v2256, %v2252
        %v2297 = vpack.c.b16 %v2257, %v2253
        %v2298 = vpack.c.b16 %v2262, %v2258
        %v2299 = vpack.c.b16 %v2263, %v2259
        %v2300 = vpack.c.b16 %v2264, %v2260
        %v2301 = vpack.c.b16 %v2265, %v2261
        %v2302 = vpack.c.b16 %v2270, %v2266
        %v2303 = vpack.c.b16 %v2271, %v2267
        %v2304 = vpack.c.b16 %v2272, %v2268
        %v2305 = vpack.c.b16 %v2273, %v2269
        %2338 = vmatpush.bf16.msra.mxu0 %v2302
        %2339 = vmatpush.bf16.msra.mxu0 %v2298
        %2340 = vmatpush.bf16.msra.mxu0 %v2294
        %2341 = vmatpush.bf16.msra.mxu0 %v2290
        %2342 = vmatpush.bf16.msra.mxu0 %v2286
        %2343 = vmatpush.bf16.msra.mxu0 %v2282
        %2344 = vmatpush.bf16.msra.mxu0 %v2278
        %2345 = vmatpush.bf16.msra.mxu0 %v2274
        %2346 = vmatmul.bf16.gmra.mxu0 %v2134
        %v2347 = vpop.f32.mrf.mxu0
        %v2348 = vadd.f32 %v2170, %v2347
        %v2349 = vpop.f32.mrf.mxu0
        %v2350 = vadd.f32 %v2170, %v2349
        %2351 = vmatmul.bf16.gmra.mxu0 %v2135
        %v2352 = vpop.f32.mrf.mxu0
        %v2353 = vadd.f32 %v2170, %v2352
        %v2354 = vpop.f32.mrf.mxu0
        %v2355 = vadd.f32 %v2170, %v2354
        %2356 = vdwg.mxu0
        %2357 = vmatpush.bf16.msra.mxu0 %v2303
        %2358 = vmatpush.bf16.msra.mxu0 %v2299
        %2359 = vmatpush.bf16.msra.mxu0 %v2295
        %2360 = vmatpush.bf16.msra.mxu0 %v2291
        %2361 = vmatpush.bf16.msra.mxu0 %v2287
        %2362 = vmatpush.bf16.msra.mxu0 %v2283
        %2363 = vmatpush.bf16.msra.mxu0 %v2279
        %2364 = vmatpush.bf16.msra.mxu0 %v2275
        %2365 = vmatmul.bf16.gmra.mxu0 %v2134
        %v2366 = vpop.f32.mrf.mxu0
        %v2367 = vadd.f32 %v2171, %v2366
        %v2368 = vpop.f32.mrf.mxu0
        %v2369 = vadd.f32 %v2171, %v2368
        %2370 = vmatmul.bf16.gmra.mxu0 %v2135
        %v2371 = vpop.f32.mrf.mxu0
        %v2372 = vadd.f32 %v2171, %v2371
        %v2373 = vpop.f32.mrf.mxu0
        %v2374 = vadd.f32 %v2171, %v2373
        %2375 = vdwg.mxu0
        %2376 = vmatpush.bf16.msra.mxu0 %v2304
        %2377 = vmatpush.bf16.msra.mxu0 %v2300
        %2378 = vmatpush.bf16.msra.mxu0 %v2296
        %2379 = vmatpush.bf16.msra.mxu0 %v2292
        %2380 = vmatpush.bf16.msra.mxu0 %v2288
        %2381 = vmatpush.bf16.msra.mxu0 %v2284
        %2382 = vmatpush.bf16.msra.mxu0 %v2280
        %2383 = vmatpush.bf16.msra.mxu0 %v2276
        %2384 = vmatmul.bf16.gmra.mxu0 %v2134
        %v2385 = vpop.f32.mrf.mxu0
        %v2386 = vadd.f32 %v2172, %v2385
        %v2387 = vpop.f32.mrf.mxu0
        %v2388 = vadd.f32 %v2172, %v2387
        %2389 = vmatmul.bf16.gmra.mxu0 %v2135
        %v2390 = vpop.f32.mrf.mxu0
        %v2391 = vadd.f32 %v2172, %v2390
        %v2392 = vpop.f32.mrf.mxu0
        %v2393 = vadd.f32 %v2172, %v2392
        %2394 = vdwg.mxu0
        %2395 = vmatpush.bf16.msra.mxu0 %v2305
        %2396 = vmatpush.bf16.msra.mxu0 %v2301
        %2397 = vmatpush.bf16.msra.mxu0 %v2297
        %2398 = vmatpush.bf16.msra.mxu0 %v2293
        %2399 = vmatpush.bf16.msra.mxu0 %v2289
        %2400 = vmatpush.bf16.msra.mxu0 %v2285
        %2401 = vmatpush.bf16.msra.mxu0 %v2281
        %2402 = vmatpush.bf16.msra.mxu0 %v2277
        %2403 = vmatmul.bf16.gmra.mxu0 %v2134
        %v2404 = vpop.f32.mrf.mxu0
        %v2405 = vadd.f32 %v2173, %v2404
        %v2406 = vpop.f32.mrf.mxu0
        %v2407 = vadd.f32 %v2173, %v2406
        %2408 = vmatmul.bf16.gmra.mxu0 %v2135
        %v2409 = vpop.f32.mrf.mxu0
        %v2410 = vadd.f32 %v2173, %v2409
        %v2411 = vpop.f32.mrf.mxu0
        %v2412 = vadd.f32 %v2173, %v2411
        %2413 = vdwg.mxu0
        %v2414 = vmul.f32 %v2348, 0.5
        %v2415 = vmul.f32 %v2367, 0.5
        %v2416 = vmul.f32 %v2386, 0.5
        %v2417 = vmul.f32 %v2405, 0.5
        %v2418 = vmul.f32 %v2350, 0.5
        %v2419 = vmul.f32 %v2369, 0.5
        %v2420 = vmul.f32 %v2388, 0.5
        %v2421 = vmul.f32 %v2407, 0.5
        %v2422 = vmul.f32 %v2353, 0.5
        %v2423 = vmul.f32 %v2372, 0.5
        %v2424 = vmul.f32 %v2391, 0.5
        %v2425 = vmul.f32 %v2410, 0.5
        %v2426 = vmul.f32 %v2355, 0.5
        %v2427 = vmul.f32 %v2374, 0.5
        %v2428 = vmul.f32 %v2393, 0.5
        %v2429 = vmul.f32 %v2412, 0.5
        %v2430 = vmul.f32 %v2348, 0.70710677
        %v2431 = vmul.f32 %v2367, 0.70710677
        %v2432 = vmul.f32 %v2386, 0.70710677
        %v2433 = vmul.f32 %v2405, 0.70710677
        %v2434 = vmul.f32 %v2350, 0.70710677
        %v2435 = vmul.f32 %v2369, 0.70710677
        %v2436 = vmul.f32 %v2388, 0.70710677
        %v2437 = vmul.f32 %v2407, 0.70710677
        %v2438 = vmul.f32 %v2353, 0.70710677
        %v2439 = vmul.f32 %v2372, 0.70710677
        %v2440 = vmul.f32 %v2391, 0.70710677
        %v2441 = vmul.f32 %v2410, 0.70710677
        %v2442 = vmul.f32 %v2355, 0.70710677
        %v2443 = vmul.f32 %v2374, 0.70710677
        %v2444 = vmul.f32 %v2393, 0.70710677
        %v2445 = vmul.f32 %v2412, 0.70710677
        %vm2446 = vcmp.ge.f32.partialorder %v2430, 0.0
        %vm2447 = vcmp.ge.f32.partialorder %v2431, 0.0
        %vm2448 = vcmp.ge.f32.partialorder %v2432, 0.0
        %vm2449 = vcmp.ge.f32.partialorder %v2433, 0.0
        %vm2450 = vcmp.ge.f32.partialorder %v2434, 0.0
        %vm2451 = vcmp.ge.f32.partialorder %v2435, 0.0
        %vm2452 = vcmp.ge.f32.partialorder %v2436, 0.0
        %vm2453 = vcmp.ge.f32.partialorder %v2437, 0.0
        %vm2454 = vcmp.ge.f32.partialorder %v2438, 0.0
        %vm2455 = vcmp.ge.f32.partialorder %v2439, 0.0
        %vm2456 = vcmp.ge.f32.partialorder %v2440, 0.0
        %vm2457 = vcmp.ge.f32.partialorder %v2441, 0.0
        %vm2458 = vcmp.ge.f32.partialorder %v2442, 0.0
        %vm2459 = vcmp.ge.f32.partialorder %v2443, 0.0
        %vm2460 = vcmp.ge.f32.partialorder %v2444, 0.0
        %vm2461 = vcmp.ge.f32.partialorder %v2445, 0.0
        %v2462 = vsel %vm2446, 1.0, -1.0
        %v2463 = vsel %vm2447, 1.0, -1.0
        %v2464 = vsel %vm2448, 1.0, -1.0
        %v2465 = vsel %vm2449, 1.0, -1.0
        %v2466 = vsel %vm2450, 1.0, -1.0
        %v2467 = vsel %vm2451, 1.0, -1.0
        %v2468 = vsel %vm2452, 1.0, -1.0
        %v2469 = vsel %vm2453, 1.0, -1.0
        %v2470 = vsel %vm2454, 1.0, -1.0
        %v2471 = vsel %vm2455, 1.0, -1.0
        %v2472 = vsel %vm2456, 1.0, -1.0
        %v2473 = vsel %vm2457, 1.0, -1.0
        %v2474 = vsel %vm2458, 1.0, -1.0
        %v2475 = vsel %vm2459, 1.0, -1.0
        %v2476 = vsel %vm2460, 1.0, -1.0
        %v2477 = vsel %vm2461, 1.0, -1.0
        %v2478 = vand.u32 2147483647, %v2430
        %v2479 = vand.u32 2147483647, %v2431
        %v2480 = vand.u32 2147483647, %v2432
        %v2481 = vand.u32 2147483647, %v2433
        %v2482 = vand.u32 2147483647, %v2434
        %v2483 = vand.u32 2147483647, %v2435
        %v2484 = vand.u32 2147483647, %v2436
        %v2485 = vand.u32 2147483647, %v2437
        %v2486 = vand.u32 2147483647, %v2438
        %v2487 = vand.u32 2147483647, %v2439
        %v2488 = vand.u32 2147483647, %v2440
        %v2489 = vand.u32 2147483647, %v2441
        %v2490 = vand.u32 2147483647, %v2442
        %v2491 = vand.u32 2147483647, %v2443
        %v2492 = vand.u32 2147483647, %v2444
        %v2493 = vand.u32 2147483647, %v2445
        %v2494 = vmul.f32 %v2478, 0.3275911
        %v2495 = vmul.f32 %v2479, 0.3275911
        %v2496 = vmul.f32 %v2480, 0.3275911
        %v2497 = vmul.f32 %v2481, 0.3275911
        %v2498 = vmul.f32 %v2482, 0.3275911
        %v2499 = vmul.f32 %v2483, 0.3275911
        %v2500 = vmul.f32 %v2484, 0.3275911
        %v2501 = vmul.f32 %v2485, 0.3275911
        %v2502 = vmul.f32 %v2486, 0.3275911
        %v2503 = vmul.f32 %v2487, 0.3275911
        %v2504 = vmul.f32 %v2488, 0.3275911
        %v2505 = vmul.f32 %v2489, 0.3275911
        %v2506 = vmul.f32 %v2490, 0.3275911
        %v2507 = vmul.f32 %v2491, 0.3275911
        %v2508 = vmul.f32 %v2492, 0.3275911
        %v2509 = vmul.f32 %v2493, 0.3275911
        %v2510 = vadd.f32 %v2494, 1.0
        %v2511 = vadd.f32 %v2495, 1.0
        %v2512 = vadd.f32 %v2496, 1.0
        %v2513 = vadd.f32 %v2497, 1.0
        %v2514 = vadd.f32 %v2498, 1.0
        %v2515 = vadd.f32 %v2499, 1.0
        %v2516 = vadd.f32 %v2500, 1.0
        %v2517 = vadd.f32 %v2501, 1.0
        %v2518 = vadd.f32 %v2502, 1.0
        %v2519 = vadd.f32 %v2503, 1.0
        %v2520 = vadd.f32 %v2504, 1.0
        %v2521 = vadd.f32 %v2505, 1.0
        %v2522 = vadd.f32 %v2506, 1.0
        %v2523 = vadd.f32 %v2507, 1.0
        %v2524 = vadd.f32 %v2508, 1.0
        %v2525 = vadd.f32 %v2509, 1.0
        %v2526 = vrcp.pop %v2510
        %v2527 = vmul.f32 %v2510, %v2526
        %v2528 = vsub.f32 1.0, %v2527
        %v2529 = vmul.f32 %v2526, %v2528
        %v2530 = vadd.f32 %v2526, %v2529
        %vm2531 = vweird.f32 %v2510
        %vm2532 = vweird.f32 %v2526
        %vm2533 = vmor %vm2531, %vm2532
        %v2534 = vsel %vm2533, %v2526, %v2530
        %v2535 = vand.u32 2147483647, %v2510
        %vm2536 = vcmp.eq.f32.partialorder %v2535, 8.507059e+37
        %v2537 = vand.u32 %v2510, 2147483648
        %v2538 = vor.u32 1.1754944e-38, %v2537
        %v2539 = vsel %vm2536, %v2538, %v2534
        %v2540 = vmul.f32 1.0, %v2539
        %v2541 = vrcp.pop %v2511
        %v2542 = vmul.f32 %v2511, %v2541
        %v2543 = vsub.f32 1.0, %v2542
        %v2544 = vmul.f32 %v2541, %v2543
        %v2545 = vadd.f32 %v2541, %v2544
        %vm2546 = vweird.f32 %v2511
        %vm2547 = vweird.f32 %v2541
        %vm2548 = vmor %vm2546, %vm2547
        %v2549 = vsel %vm2548, %v2541, %v2545
        %v2550 = vand.u32 2147483647, %v2511
        %vm2551 = vcmp.eq.f32.partialorder %v2550, 8.507059e+37
        %v2552 = vand.u32 %v2511, 2147483648
        %v2553 = vor.u32 1.1754944e-38, %v2552
        %v2554 = vsel %vm2551, %v2553, %v2549
        %v2555 = vmul.f32 1.0, %v2554
        %v2556 = vrcp.pop %v2512
        %v2557 = vmul.f32 %v2512, %v2556
        %v2558 = vsub.f32 1.0, %v2557
        %v2559 = vmul.f32 %v2556, %v2558
        %v2560 = vadd.f32 %v2556, %v2559
        %vm2561 = vweird.f32 %v2512
        %vm2562 = vweird.f32 %v2556
        %vm2563 = vmor %vm2561, %vm2562
        %v2564 = vsel %vm2563, %v2556, %v2560
        %v2565 = vand.u32 2147483647, %v2512
        %vm2566 = vcmp.eq.f32.partialorder %v2565, 8.507059e+37
        %v2567 = vand.u32 %v2512, 2147483648
        %v2568 = vor.u32 1.1754944e-38, %v2567
        %v2569 = vsel %vm2566, %v2568, %v2564
        %v2570 = vmul.f32 1.0, %v2569
        %v2571 = vrcp.pop %v2513
        %v2572 = vmul.f32 %v2513, %v2571
        %v2573 = vsub.f32 1.0, %v2572
        %v2574 = vmul.f32 %v2571, %v2573
        %v2575 = vadd.f32 %v2571, %v2574
        %vm2576 = vweird.f32 %v2513
        %vm2577 = vweird.f32 %v2571
        %vm2578 = vmor %vm2576, %vm2577
        %v2579 = vsel %vm2578, %v2571, %v2575
        %v2580 = vand.u32 2147483647, %v2513
        %vm2581 = vcmp.eq.f32.partialorder %v2580, 8.507059e+37
        %v2582 = vand.u32 %v2513, 2147483648
        %v2583 = vor.u32 1.1754944e-38, %v2582
        %v2584 = vsel %vm2581, %v2583, %v2579
        %v2585 = vmul.f32 1.0, %v2584
        %v2586 = vrcp.pop %v2514
        %v2587 = vmul.f32 %v2514, %v2586
        %v2588 = vsub.f32 1.0, %v2587
        %v2589 = vmul.f32 %v2586, %v2588
        %v2590 = vadd.f32 %v2586, %v2589
        %vm2591 = vweird.f32 %v2514
        %vm2592 = vweird.f32 %v2586
        %vm2593 = vmor %vm2591, %vm2592
        %v2594 = vsel %vm2593, %v2586, %v2590
        %v2595 = vand.u32 2147483647, %v2514
        %vm2596 = vcmp.eq.f32.partialorder %v2595, 8.507059e+37
        %v2597 = vand.u32 %v2514, 2147483648
        %v2598 = vor.u32 1.1754944e-38, %v2597
        %v2599 = vsel %vm2596, %v2598, %v2594
        %v2600 = vmul.f32 1.0, %v2599
        %v2601 = vrcp.pop %v2515
        %v2602 = vmul.f32 %v2515, %v2601
        %v2603 = vsub.f32 1.0, %v2602
        %v2604 = vmul.f32 %v2601, %v2603
        %v2605 = vadd.f32 %v2601, %v2604
        %vm2606 = vweird.f32 %v2515
        %vm2607 = vweird.f32 %v2601
        %vm2608 = vmor %vm2606, %vm2607
        %v2609 = vsel %vm2608, %v2601, %v2605
        %v2610 = vand.u32 2147483647, %v2515
        %vm2611 = vcmp.eq.f32.partialorder %v2610, 8.507059e+37
        %v2612 = vand.u32 %v2515, 2147483648
        %v2613 = vor.u32 1.1754944e-38, %v2612
        %v2614 = vsel %vm2611, %v2613, %v2609
        %v2615 = vmul.f32 1.0, %v2614
        %v2616 = vrcp.pop %v2516
        %v2617 = vmul.f32 %v2516, %v2616
        %v2618 = vsub.f32 1.0, %v2617
        %v2619 = vmul.f32 %v2616, %v2618
        %v2620 = vadd.f32 %v2616, %v2619
        %vm2621 = vweird.f32 %v2516
        %vm2622 = vweird.f32 %v2616
        %vm2623 = vmor %vm2621, %vm2622
        %v2624 = vsel %vm2623, %v2616, %v2620
        %v2625 = vand.u32 2147483647, %v2516
        %vm2626 = vcmp.eq.f32.partialorder %v2625, 8.507059e+37
        %v2627 = vand.u32 %v2516, 2147483648
        %v2628 = vor.u32 1.1754944e-38, %v2627
        %v2629 = vsel %vm2626, %v2628, %v2624
        %v2630 = vmul.f32 1.0, %v2629
        %v2631 = vrcp.pop %v2517
        %v2632 = vmul.f32 %v2517, %v2631
        %v2633 = vsub.f32 1.0, %v2632
        %v2634 = vmul.f32 %v2631, %v2633
        %v2635 = vadd.f32 %v2631, %v2634
        %vm2636 = vweird.f32 %v2517
        %vm2637 = vweird.f32 %v2631
        %vm2638 = vmor %vm2636, %vm2637
        %v2639 = vsel %vm2638, %v2631, %v2635
        %v2640 = vand.u32 2147483647, %v2517
        %vm2641 = vcmp.eq.f32.partialorder %v2640, 8.507059e+37
        %v2642 = vand.u32 %v2517, 2147483648
        %v2643 = vor.u32 1.1754944e-38, %v2642
        %v2644 = vsel %vm2641, %v2643, %v2639
        %v2645 = vmul.f32 1.0, %v2644
        %v2646 = vrcp.pop %v2518
        %v2647 = vmul.f32 %v2518, %v2646
        %v2648 = vsub.f32 1.0, %v2647
        %v2649 = vmul.f32 %v2646, %v2648
        %v2650 = vadd.f32 %v2646, %v2649
        %vm2651 = vweird.f32 %v2518
        %vm2652 = vweird.f32 %v2646
        %vm2653 = vmor %vm2651, %vm2652
        %v2654 = vsel %vm2653, %v2646, %v2650
        %v2655 = vand.u32 2147483647, %v2518
        %vm2656 = vcmp.eq.f32.partialorder %v2655, 8.507059e+37
        %v2657 = vand.u32 %v2518, 2147483648
        %v2658 = vor.u32 1.1754944e-38, %v2657
        %v2659 = vsel %vm2656, %v2658, %v2654
        %v2660 = vmul.f32 1.0, %v2659
        %v2661 = vrcp.pop %v2519
        %v2662 = vmul.f32 %v2519, %v2661
        %v2663 = vsub.f32 1.0, %v2662
        %v2664 = vmul.f32 %v2661, %v2663
        %v2665 = vadd.f32 %v2661, %v2664
        %vm2666 = vweird.f32 %v2519
        %vm2667 = vweird.f32 %v2661
        %vm2668 = vmor %vm2666, %vm2667
        %v2669 = vsel %vm2668, %v2661, %v2665
        %v2670 = vand.u32 2147483647, %v2519
        %vm2671 = vcmp.eq.f32.partialorder %v2670, 8.507059e+37
        %v2672 = vand.u32 %v2519, 2147483648
        %v2673 = vor.u32 1.1754944e-38, %v2672
        %v2674 = vsel %vm2671, %v2673, %v2669
        %v2675 = vmul.f32 1.0, %v2674
        %v2676 = vrcp.pop %v2520
        %v2677 = vmul.f32 %v2520, %v2676
        %v2678 = vsub.f32 1.0, %v2677
        %v2679 = vmul.f32 %v2676, %v2678
        %v2680 = vadd.f32 %v2676, %v2679
        %vm2681 = vweird.f32 %v2520
        %vm2682 = vweird.f32 %v2676
        %vm2683 = vmor %vm2681, %vm2682
        %v2684 = vsel %vm2683, %v2676, %v2680
        %v2685 = vand.u32 2147483647, %v2520
        %vm2686 = vcmp.eq.f32.partialorder %v2685, 8.507059e+37
        %v2687 = vand.u32 %v2520, 2147483648
        %v2688 = vor.u32 1.1754944e-38, %v2687
        %v2689 = vsel %vm2686, %v2688, %v2684
        %v2690 = vmul.f32 1.0, %v2689
        %v2691 = vrcp.pop %v2521
        %v2692 = vmul.f32 %v2521, %v2691
        %v2693 = vsub.f32 1.0, %v2692
        %v2694 = vmul.f32 %v2691, %v2693
        %v2695 = vadd.f32 %v2691, %v2694
        %vm2696 = vweird.f32 %v2521
        %vm2697 = vweird.f32 %v2691
        %vm2698 = vmor %vm2696, %vm2697
        %v2699 = vsel %vm2698, %v2691, %v2695
        %v2700 = vand.u32 2147483647, %v2521
        %vm2701 = vcmp.eq.f32.partialorder %v2700, 8.507059e+37
        %v2702 = vand.u32 %v2521, 2147483648
        %v2703 = vor.u32 1.1754944e-38, %v2702
        %v2704 = vsel %vm2701, %v2703, %v2699
        %v2705 = vmul.f32 1.0, %v2704
        %v2706 = vrcp.pop %v2522
        %v2707 = vmul.f32 %v2522, %v2706
        %v2708 = vsub.f32 1.0, %v2707
        %v2709 = vmul.f32 %v2706, %v2708
        %v2710 = vadd.f32 %v2706, %v2709
        %vm2711 = vweird.f32 %v2522
        %vm2712 = vweird.f32 %v2706
        %vm2713 = vmor %vm2711, %vm2712
        %v2714 = vsel %vm2713, %v2706, %v2710
        %v2715 = vand.u32 2147483647, %v2522
        %vm2716 = vcmp.eq.f32.partialorder %v2715, 8.507059e+37
        %v2717 = vand.u32 %v2522, 2147483648
        %v2718 = vor.u32 1.1754944e-38, %v2717
        %v2719 = vsel %vm2716, %v2718, %v2714
        %v2720 = vmul.f32 1.0, %v2719
        %v2721 = vrcp.pop %v2523
        %v2722 = vmul.f32 %v2523, %v2721
        %v2723 = vsub.f32 1.0, %v2722
        %v2724 = vmul.f32 %v2721, %v2723
        %v2725 = vadd.f32 %v2721, %v2724
        %vm2726 = vweird.f32 %v2523
        %vm2727 = vweird.f32 %v2721
        %vm2728 = vmor %vm2726, %vm2727
        %v2729 = vsel %vm2728, %v2721, %v2725
        %v2730 = vand.u32 2147483647, %v2523
        %vm2731 = vcmp.eq.f32.partialorder %v2730, 8.507059e+37
        %v2732 = vand.u32 %v2523, 2147483648
        %v2733 = vor.u32 1.1754944e-38, %v2732
        %v2734 = vsel %vm2731, %v2733, %v2729
        %v2735 = vmul.f32 1.0, %v2734
        %v2736 = vrcp.pop %v2524
        %v2737 = vmul.f32 %v2524, %v2736
        %v2738 = vsub.f32 1.0, %v2737
        %v2739 = vmul.f32 %v2736, %v2738
        %v2740 = vadd.f32 %v2736, %v2739
        %vm2741 = vweird.f32 %v2524
        %vm2742 = vweird.f32 %v2736
        %vm2743 = vmor %vm2741, %vm2742
        %v2744 = vsel %vm2743, %v2736, %v2740
        %v2745 = vand.u32 2147483647, %v2524
        %vm2746 = vcmp.eq.f32.partialorder %v2745, 8.507059e+37
        %v2747 = vand.u32 %v2524, 2147483648
        %v2748 = vor.u32 1.1754944e-38, %v2747
        %v2749 = vsel %vm2746, %v2748, %v2744
        %v2750 = vmul.f32 1.0, %v2749
        %v2751 = vrcp.pop %v2525
        %v2752 = vmul.f32 %v2525, %v2751
        %v2753 = vsub.f32 1.0, %v2752
        %v2754 = vmul.f32 %v2751, %v2753
        %v2755 = vadd.f32 %v2751, %v2754
        %vm2756 = vweird.f32 %v2525
        %vm2757 = vweird.f32 %v2751
        %vm2758 = vmor %vm2756, %vm2757
        %v2759 = vsel %vm2758, %v2751, %v2755
        %v2760 = vand.u32 2147483647, %v2525
        %vm2761 = vcmp.eq.f32.partialorder %v2760, 8.507059e+37
        %v2762 = vand.u32 %v2525, 2147483648
        %v2763 = vor.u32 1.1754944e-38, %v2762
        %v2764 = vsel %vm2761, %v2763, %v2759
        %v2765 = vmul.f32 1.0, %v2764
        %v2766 = vmul.f32 %v2540, 1.0614054
        %v2767 = vmul.f32 %v2555, 1.0614054
        %v2768 = vmul.f32 %v2570, 1.0614054
        %v2769 = vmul.f32 %v2585, 1.0614054
        %v2770 = vmul.f32 %v2600, 1.0614054
        %v2771 = vmul.f32 %v2615, 1.0614054
        %v2772 = vmul.f32 %v2630, 1.0614054
        %v2773 = vmul.f32 %v2645, 1.0614054
        %v2774 = vmul.f32 %v2660, 1.0614054
        %v2775 = vmul.f32 %v2675, 1.0614054
        %v2776 = vmul.f32 %v2690, 1.0614054
        %v2777 = vmul.f32 %v2705, 1.0614054
        %v2778 = vmul.f32 %v2720, 1.0614054
        %v2779 = vmul.f32 %v2735, 1.0614054
        %v2780 = vmul.f32 %v2750, 1.0614054
        %v2781 = vmul.f32 %v2765, 1.0614054
        %v2782 = vadd.f32 %v2766, -1.4531521
        %v2783 = vadd.f32 %v2767, -1.4531521
        %v2784 = vadd.f32 %v2768, -1.4531521
        %v2785 = vadd.f32 %v2769, -1.4531521
        %v2786 = vadd.f32 %v2770, -1.4531521
        %v2787 = vadd.f32 %v2771, -1.4531521
        %v2788 = vadd.f32 %v2772, -1.4531521
        %v2789 = vadd.f32 %v2773, -1.4531521
        %v2790 = vadd.f32 %v2774, -1.4531521
        %v2791 = vadd.f32 %v2775, -1.4531521
        %v2792 = vadd.f32 %v2776, -1.4531521
        %v2793 = vadd.f32 %v2777, -1.4531521
        %v2794 = vadd.f32 %v2778, -1.4531521
        %v2795 = vadd.f32 %v2779, -1.4531521
        %v2796 = vadd.f32 %v2780, -1.4531521
        %v2797 = vadd.f32 %v2781, -1.4531521
        %v2798 = vmul.f32 %v2782, %v2540
        %v2799 = vmul.f32 %v2783, %v2555
        %v2800 = vmul.f32 %v2784, %v2570
        %v2801 = vmul.f32 %v2785, %v2585
        %v2802 = vmul.f32 %v2786, %v2600
        %v2803 = vmul.f32 %v2787, %v2615
        %v2804 = vmul.f32 %v2788, %v2630
        %v2805 = vmul.f32 %v2789, %v2645
        %v2806 = vmul.f32 %v2790, %v2660
        %v2807 = vmul.f32 %v2791, %v2675
        %v2808 = vmul.f32 %v2792, %v2690
        %v2809 = vmul.f32 %v2793, %v2705
        %v2810 = vmul.f32 %v2794, %v2720
        %v2811 = vmul.f32 %v2795, %v2735
        %v2812 = vmul.f32 %v2796, %v2750
        %v2813 = vmul.f32 %v2797, %v2765
        %v2814 = vadd.f32 %v2798, 1.4214138
        %v2815 = vadd.f32 %v2799, 1.4214138
        %v2816 = vadd.f32 %v2800, 1.4214138
        %v2817 = vadd.f32 %v2801, 1.4214138
        %v2818 = vadd.f32 %v2802, 1.4214138
        %v2819 = vadd.f32 %v2803, 1.4214138
        %v2820 = vadd.f32 %v2804, 1.4214138
        %v2821 = vadd.f32 %v2805, 1.4214138
        %v2822 = vadd.f32 %v2806, 1.4214138
        %v2823 = vadd.f32 %v2807, 1.4214138
        %v2824 = vadd.f32 %v2808, 1.4214138
        %v2825 = vadd.f32 %v2809, 1.4214138
        %v2826 = vadd.f32 %v2810, 1.4214138
        %v2827 = vadd.f32 %v2811, 1.4214138
        %v2828 = vadd.f32 %v2812, 1.4214138
        %v2829 = vadd.f32 %v2813, 1.4214138
        %v2830 = vmul.f32 %v2814, %v2540
        %v2831 = vmul.f32 %v2815, %v2555
        %v2832 = vmul.f32 %v2816, %v2570
        %v2833 = vmul.f32 %v2817, %v2585
        %v2834 = vmul.f32 %v2818, %v2600
        %v2835 = vmul.f32 %v2819, %v2615
        %v2836 = vmul.f32 %v2820, %v2630
        %v2837 = vmul.f32 %v2821, %v2645
        %v2838 = vmul.f32 %v2822, %v2660
        %v2839 = vmul.f32 %v2823, %v2675
        %v2840 = vmul.f32 %v2824, %v2690
        %v2841 = vmul.f32 %v2825, %v2705
        %v2842 = vmul.f32 %v2826, %v2720
        %v2843 = vmul.f32 %v2827, %v2735
        %v2844 = vmul.f32 %v2828, %v2750
        %v2845 = vmul.f32 %v2829, %v2765
        %v2846 = vadd.f32 %v2830, -0.28449672
        %v2847 = vadd.f32 %v2831, -0.28449672
        %v2848 = vadd.f32 %v2832, -0.28449672
        %v2849 = vadd.f32 %v2833, -0.28449672
        %v2850 = vadd.f32 %v2834, -0.28449672
        %v2851 = vadd.f32 %v2835, -0.28449672
        %v2852 = vadd.f32 %v2836, -0.28449672
        %v2853 = vadd.f32 %v2837, -0.28449672
        %v2854 = vadd.f32 %v2838, -0.28449672
        %v2855 = vadd.f32 %v2839, -0.28449672
        %v2856 = vadd.f32 %v2840, -0.28449672
        %v2857 = vadd.f32 %v2841, -0.28449672
        %v2858 = vadd.f32 %v2842, -0.28449672
        %v2859 = vadd.f32 %v2843, -0.28449672
        %v2860 = vadd.f32 %v2844, -0.28449672
        %v2861 = vadd.f32 %v2845, -0.28449672
        %v2862 = vmul.f32 %v2846, %v2540
        %v2863 = vmul.f32 %v2847, %v2555
        %v2864 = vmul.f32 %v2848, %v2570
        %v2865 = vmul.f32 %v2849, %v2585
        %v2866 = vmul.f32 %v2850, %v2600
        %v2867 = vmul.f32 %v2851, %v2615
        %v2868 = vmul.f32 %v2852, %v2630
        %v2869 = vmul.f32 %v2853, %v2645
        %v2870 = vmul.f32 %v2854, %v2660
        %v2871 = vmul.f32 %v2855, %v2675
        %v2872 = vmul.f32 %v2856, %v2690
        %v2873 = vmul.f32 %v2857, %v2705
        %v2874 = vmul.f32 %v2858, %v2720
        %v2875 = vmul.f32 %v2859, %v2735
        %v2876 = vmul.f32 %v2860, %v2750
        %v2877 = vmul.f32 %v2861, %v2765
        %v2878 = vadd.f32 %v2862, 0.2548296
        %v2879 = vadd.f32 %v2863, 0.2548296
        %v2880 = vadd.f32 %v2864, 0.2548296
        %v2881 = vadd.f32 %v2865, 0.2548296
        %v2882 = vadd.f32 %v2866, 0.2548296
        %v2883 = vadd.f32 %v2867, 0.2548296
        %v2884 = vadd.f32 %v2868, 0.2548296
        %v2885 = vadd.f32 %v2869, 0.2548296
        %v2886 = vadd.f32 %v2870, 0.2548296
        %v2887 = vadd.f32 %v2871, 0.2548296
        %v2888 = vadd.f32 %v2872, 0.2548296
        %v2889 = vadd.f32 %v2873, 0.2548296
        %v2890 = vadd.f32 %v2874, 0.2548296
        %v2891 = vadd.f32 %v2875, 0.2548296
        %v2892 = vadd.f32 %v2876, 0.2548296
        %v2893 = vadd.f32 %v2877, 0.2548296
        %v2894 = vmul.f32 %v2878, %v2540
        %v2895 = vmul.f32 %v2879, %v2555
        %v2896 = vmul.f32 %v2880, %v2570
        %v2897 = vmul.f32 %v2881, %v2585
        %v2898 = vmul.f32 %v2882, %v2600
        %v2899 = vmul.f32 %v2883, %v2615
        %v2900 = vmul.f32 %v2884, %v2630
        %v2901 = vmul.f32 %v2885, %v2645
        %v2902 = vmul.f32 %v2886, %v2660
        %v2903 = vmul.f32 %v2887, %v2675
        %v2904 = vmul.f32 %v2888, %v2690
        %v2905 = vmul.f32 %v2889, %v2705
        %v2906 = vmul.f32 %v2890, %v2720
        %v2907 = vmul.f32 %v2891, %v2735
        %v2908 = vmul.f32 %v2892, %v2750
        %v2909 = vmul.f32 %v2893, %v2765
        %v2910 = vsub.f32 0.0, %v2478
        %v2911 = vsub.f32 0.0, %v2479
        %v2912 = vsub.f32 0.0, %v2480
        %v2913 = vsub.f32 0.0, %v2481
        %v2914 = vsub.f32 0.0, %v2482
        %v2915 = vsub.f32 0.0, %v2483
        %v2916 = vsub.f32 0.0, %v2484
        %v2917 = vsub.f32 0.0, %v2485
        %v2918 = vsub.f32 0.0, %v2486
        %v2919 = vsub.f32 0.0, %v2487
        %v2920 = vsub.f32 0.0, %v2488
        %v2921 = vsub.f32 0.0, %v2489
        %v2922 = vsub.f32 0.0, %v2490
        %v2923 = vsub.f32 0.0, %v2491
        %v2924 = vsub.f32 0.0, %v2492
        %v2925 = vsub.f32 0.0, %v2493
        %v2926 = vmul.f32 %v2910, %v2478
        %v2927 = vmul.f32 %v2911, %v2479
        %v2928 = vmul.f32 %v2912, %v2480
        %v2929 = vmul.f32 %v2913, %v2481
        %v2930 = vmul.f32 %v2914, %v2482
        %v2931 = vmul.f32 %v2915, %v2483
        %v2932 = vmul.f32 %v2916, %v2484
        %v2933 = vmul.f32 %v2917, %v2485
        %v2934 = vmul.f32 %v2918, %v2486
        %v2935 = vmul.f32 %v2919, %v2487
        %v2936 = vmul.f32 %v2920, %v2488
        %v2937 = vmul.f32 %v2921, %v2489
        %v2938 = vmul.f32 %v2922, %v2490
        %v2939 = vmul.f32 %v2923, %v2491
        %v2940 = vmul.f32 %v2924, %v2492
        %v2941 = vmul.f32 %v2925, %v2493
        %v2942 = vmul.f32 %v2926, 1.442695
        %v2943 = vpow.pop %v2942
        %v2944 = vmul.f32 %v2927, 1.442695
        %v2945 = vpow.pop %v2944
        %v2946 = vmul.f32 %v2928, 1.442695
        %v2947 = vpow.pop %v2946
        %v2948 = vmul.f32 %v2929, 1.442695
        %v2949 = vpow.pop %v2948
        %v2950 = vmul.f32 %v2930, 1.442695
        %v2951 = vpow.pop %v2950
        %v2952 = vmul.f32 %v2931, 1.442695
        %v2953 = vpow.pop %v2952
        %v2954 = vmul.f32 %v2932, 1.442695
        %v2955 = vpow.pop %v2954
        %v2956 = vmul.f32 %v2933, 1.442695
        %v2957 = vpow.pop %v2956
        %v2958 = vmul.f32 %v2934, 1.442695
        %v2959 = vpow.pop %v2958
        %v2960 = vmul.f32 %v2935, 1.442695
        %v2961 = vpow.pop %v2960
        %v2962 = vmul.f32 %v2936, 1.442695
        %v2963 = vpow.pop %v2962
        %v2964 = vmul.f32 %v2937, 1.442695
        %v2965 = vpow.pop %v2964
        %v2966 = vmul.f32 %v2938, 1.442695
        %v2967 = vpow.pop %v2966
        %v2968 = vmul.f32 %v2939, 1.442695
        %v2969 = vpow.pop %v2968
        %v2970 = vmul.f32 %v2940, 1.442695
        %v2971 = vpow.pop %v2970
        %v2972 = vmul.f32 %v2941, 1.442695
        %v2973 = vpow.pop %v2972
        %v2974 = vmul.f32 %v2894, %v2943
        %v2975 = vmul.f32 %v2895, %v2945
        %v2976 = vmul.f32 %v2896, %v2947
        %v2977 = vmul.f32 %v2897, %v2949
        %v2978 = vmul.f32 %v2898, %v2951
        %v2979 = vmul.f32 %v2899, %v2953
        %v2980 = vmul.f32 %v2900, %v2955
        %v2981 = vmul.f32 %v2901, %v2957
        %v2982 = vmul.f32 %v2902, %v2959
        %v2983 = vmul.f32 %v2903, %v2961
        %v2984 = vmul.f32 %v2904, %v2963
        %v2985 = vmul.f32 %v2905, %v2965
        %v2986 = vmul.f32 %v2906, %v2967
        %v2987 = vmul.f32 %v2907, %v2969
        %v2988 = vmul.f32 %v2908, %v2971
        %v2989 = vmul.f32 %v2909, %v2973
        %v2990 = vsub.f32 1.0, %v2974
        %v2991 = vsub.f32 1.0, %v2975
        %v2992 = vsub.f32 1.0, %v2976
        %v2993 = vsub.f32 1.0, %v2977
        %v2994 = vsub.f32 1.0, %v2978
        %v2995 = vsub.f32 1.0, %v2979
        %v2996 = vsub.f32 1.0, %v2980
        %v2997 = vsub.f32 1.0, %v2981
        %v2998 = vsub.f32 1.0, %v2982
        %v2999 = vsub.f32 1.0, %v2983
        %v3000 = vsub.f32 1.0, %v2984
        %v3001 = vsub.f32 1.0, %v2985
        %v3002 = vsub.f32 1.0, %v2986
        %v3003 = vsub.f32 1.0, %v2987
        %v3004 = vsub.f32 1.0, %v2988
        %v3005 = vsub.f32 1.0, %v2989
        %v3006 = vmul.f32 %v2462, %v2990
        %v3007 = vmul.f32 %v2463, %v2991
        %v3008 = vmul.f32 %v2464, %v2992
        %v3009 = vmul.f32 %v2465, %v2993
        %v3010 = vmul.f32 %v2466, %v2994
        %v3011 = vmul.f32 %v2467, %v2995
        %v3012 = vmul.f32 %v2468, %v2996
        %v3013 = vmul.f32 %v2469, %v2997
        %v3014 = vmul.f32 %v2470, %v2998
        %v3015 = vmul.f32 %v2471, %v2999
        %v3016 = vmul.f32 %v2472, %v3000
        %v3017 = vmul.f32 %v2473, %v3001
        %v3018 = vmul.f32 %v2474, %v3002
        %v3019 = vmul.f32 %v2475, %v3003
        %v3020 = vmul.f32 %v2476, %v3004
        %v3021 = vmul.f32 %v2477, %v3005
        %v3022 = vadd.f32 %v3006, 1.0
        %v3023 = vadd.f32 %v3007, 1.0
        %v3024 = vadd.f32 %v3008, 1.0
        %v3025 = vadd.f32 %v3009, 1.0
        %v3026 = vadd.f32 %v3010, 1.0
        %v3027 = vadd.f32 %v3011, 1.0
        %v3028 = vadd.f32 %v3012, 1.0
        %v3029 = vadd.f32 %v3013, 1.0
        %v3030 = vadd.f32 %v3014, 1.0
        %v3031 = vadd.f32 %v3015, 1.0
        %v3032 = vadd.f32 %v3016, 1.0
        %v3033 = vadd.f32 %v3017, 1.0
        %v3034 = vadd.f32 %v3018, 1.0
        %v3035 = vadd.f32 %v3019, 1.0
        %v3036 = vadd.f32 %v3020, 1.0
        %v3037 = vadd.f32 %v3021, 1.0
        %v3038 = vmul.f32 %v2414, %v3022
        %v3039 = vmul.f32 %v2415, %v3023
        %v3040 = vmul.f32 %v2416, %v3024
        %v3041 = vmul.f32 %v2417, %v3025
        %v3042 = vmul.f32 %v2418, %v3026
        %v3043 = vmul.f32 %v2419, %v3027
        %v3044 = vmul.f32 %v2420, %v3028
        %v3045 = vmul.f32 %v2421, %v3029
        %v3046 = vmul.f32 %v2422, %v3030
        %v3047 = vmul.f32 %v2423, %v3031
        %v3048 = vmul.f32 %v2424, %v3032
        %v3049 = vmul.f32 %v2425, %v3033
        %v3050 = vmul.f32 %v2426, %v3034
        %v3051 = vmul.f32 %v2427, %v3035
        %v3052 = vmul.f32 %v2428, %v3036
        %v3053 = vmul.f32 %v2429, %v3037
        %v3054 = vpack.c.bf16 %v3042, %v3038
        %v3055 = vpack.c.bf16 %v3043, %v3039
        %v3056 = vpack.c.bf16 %v3044, %v3040
        %v3057 = vpack.c.bf16 %v3045, %v3041
        %v3058 = vpack.c.bf16 %v3050, %v3046
        %v3059 = vpack.c.bf16 %v3051, %v3047
        %v3060 = vpack.c.bf16 %v3052, %v3048
        %v3061 = vpack.c.bf16 %v3053, %v3049
        %v3062 = vld [vmem:[%s500] sm:$0xf]
        %v3063 = vld [vmem:[%s500 + $0x4] sm:$0xf]
        %v3064 = vld [vmem:[%s500 + $0x8] sm:$0xf]
        %v3065 = vld [vmem:[%s500 + $0xc] sm:$0xf]
        %v3066 = vld [vmem:[%s500 + $0x10] sm:$0xf]
        %v3067 = vld [vmem:[%s500 + $0x14] sm:$0xf]
        %v3068 = vld [vmem:[%s500 + $0x18] sm:$0xf]
        %v3069 = vld [vmem:[%s500 + $0x1c] sm:$0xf]
        %v3070 = vld [vmem:[%s500 + $0x20] sm:$0xf]
        %v3071 = vld [vmem:[%s500 + $0x24] sm:$0xf]
        %v3072 = vld [vmem:[%s500 + $0x28] sm:$0xf]
        %v3073 = vld [vmem:[%s500 + $0x2c] sm:$0xf]
        %v3074 = vld [vmem:[%s500 + $0x30] sm:$0xf]
        %v3075 = vld [vmem:[%s500 + $0x34] sm:$0xf]
        %v3076 = vld [vmem:[%s500 + $0x38] sm:$0xf]
        %v3077 = vld [vmem:[%s500 + $0x3c] sm:$0xf]
        %v3078 = vld [vmem:[%s500 + $0x40] sm:$0xf]
        %v3079 = vld [vmem:[%s500 + $0x44] sm:$0xf]
        %v3080 = vld [vmem:[%s500 + $0x48] sm:$0xf]
        %v3081 = vld [vmem:[%s500 + $0x4c] sm:$0xf]
        %v3082 = vld [vmem:[%s500 + $0x50] sm:$0xf]
        %v3083 = vld [vmem:[%s500 + $0x54] sm:$0xf]
        %v3084 = vld [vmem:[%s500 + $0x58] sm:$0xf]
        %v3085 = vld [vmem:[%s500 + $0x5c] sm:$0xf]
        %v3086 = vld [vmem:[%s500 + $0x60] sm:$0xf]
        %v3087 = vld [vmem:[%s500 + $0x64] sm:$0xf]
        %v3088 = vld [vmem:[%s500 + $0x68] sm:$0xf]
        %v3089 = vld [vmem:[%s500 + $0x6c] sm:$0xf]
        %v3090 = vld [vmem:[%s500 + $0x70] sm:$0xf]
        %v3091 = vld [vmem:[%s500 + $0x74] sm:$0xf]
        %v3092 = vld [vmem:[%s500 + $0x78] sm:$0xf]
        %v3093 = vld [vmem:[%s500 + $0x7c] sm:$0xf]
        %v3094 = vld [vmem:[%s500 + $0x80] sm:$0xf]
        %v3095 = vld [vmem:[%s500 + $0x84] sm:$0xf]
        %v3096 = vld [vmem:[%s500 + $0x88] sm:$0xf]
        %v3097 = vld [vmem:[%s500 + $0x8c] sm:$0xf]
        %v3098 = vld [vmem:[%s500 + $0x90] sm:$0xf]
        %v3099 = vld [vmem:[%s500 + $0x94] sm:$0xf]
        %v3100 = vld [vmem:[%s500 + $0x98] sm:$0xf]
        %v3101 = vld [vmem:[%s500 + $0x9c] sm:$0xf]
        %v3102 = vld [vmem:[%s500 + $0xa0] sm:$0xf]
        %v3103 = vld [vmem:[%s500 + $0xa4] sm:$0xf]
        %v3104 = vld [vmem:[%s500 + $0xa8] sm:$0xf]
        %v3105 = vld [vmem:[%s500 + $0xac] sm:$0xf]
        %v3106 = vld [vmem:[%s500 + $0xb0] sm:$0xf]
        %v3107 = vld [vmem:[%s500 + $0xb4] sm:$0xf]
        %v3108 = vld [vmem:[%s500 + $0xb8] sm:$0xf]
        %v3109 = vld [vmem:[%s500 + $0xbc] sm:$0xf]
        %v3110 = vld [vmem:[%s500 + $0xc0] sm:$0xf]
        %v3111 = vld [vmem:[%s500 + $0xc4] sm:$0xf]
        %v3112 = vld [vmem:[%s500 + $0xc8] sm:$0xf]
        %v3113 = vld [vmem:[%s500 + $0xcc] sm:$0xf]
        %v3114 = vld [vmem:[%s500 + $0xd0] sm:$0xf]
        %v3115 = vld [vmem:[%s500 + $0xd4] sm:$0xf]
        %v3116 = vld [vmem:[%s500 + $0xd8] sm:$0xf]
        %v3117 = vld [vmem:[%s500 + $0xdc] sm:$0xf]
        %v3118 = vld [vmem:[%s500 + $0xe0] sm:$0xf]
        %v3119 = vld [vmem:[%s500 + $0xe4] sm:$0xf]
        %v3120 = vld [vmem:[%s500 + $0xe8] sm:$0xf]
        %v3121 = vld [vmem:[%s500 + $0xec] sm:$0xf]
        %v3122 = vld [vmem:[%s500 + $0xf0] sm:$0xf]
        %v3123 = vld [vmem:[%s500 + $0xf4] sm:$0xf]
        %v3124 = vld [vmem:[%s500 + $0xf8] sm:$0xf]
        %v3125 = vld [vmem:[%s500 + $0xfc] sm:$0xf]
        %v3126 = vperm.slane %v604, 3
        %v3191 = vunpack.c.l.b16 %v3062
        %v3192 = vunpack.c.l.b16 %v3063
        %v3193 = vunpack.c.l.b16 %v3064
        %v3194 = vunpack.c.l.b16 %v3065
        %v3195 = vunpack.c.l.b16 %v3066
        %v3196 = vunpack.c.l.b16 %v3067
        %v3197 = vunpack.c.l.b16 %v3068
        %v3198 = vunpack.c.l.b16 %v3069
        %v3199 = vunpack.c.l.b16 %v3070
        %v3200 = vunpack.c.l.b16 %v3071
        %v3201 = vunpack.c.l.b16 %v3072
        %v3202 = vunpack.c.l.b16 %v3073
        %v3203 = vunpack.c.l.b16 %v3074
        %v3204 = vunpack.c.l.b16 %v3075
        %v3205 = vunpack.c.l.b16 %v3076
        %v3206 = vunpack.c.l.b16 %v3077
        %v3207 = vunpack.c.l.b16 %v3078
        %v3208 = vunpack.c.l.b16 %v3079
        %v3209 = vunpack.c.l.b16 %v3080
        %v3210 = vunpack.c.l.b16 %v3081
        %v3211 = vunpack.c.l.b16 %v3082
        %v3212 = vunpack.c.l.b16 %v3083
        %v3213 = vunpack.c.l.b16 %v3084
        %v3214 = vunpack.c.l.b16 %v3085
        %v3215 = vunpack.c.l.b16 %v3086
        %v3216 = vunpack.c.l.b16 %v3087
        %v3217 = vunpack.c.l.b16 %v3088
        %v3218 = vunpack.c.l.b16 %v3089
        %v3219 = vunpack.c.l.b16 %v3090
        %v3220 = vunpack.c.l.b16 %v3091
        %v3221 = vunpack.c.l.b16 %v3092
        %v3222 = vunpack.c.l.b16 %v3093
        %v3223 = vunpack.c.l.b16 %v3094
        %v3224 = vunpack.c.l.b16 %v3095
        %v3225 = vunpack.c.l.b16 %v3096
        %v3226 = vunpack.c.l.b16 %v3097
        %v3227 = vunpack.c.l.b16 %v3098
        %v3228 = vunpack.c.l.b16 %v3099
        %v3229 = vunpack.c.l.b16 %v3100
        %v3230 = vunpack.c.l.b16 %v3101
        %v3231 = vunpack.c.l.b16 %v3102
        %v3232 = vunpack.c.l.b16 %v3103
        %v3233 = vunpack.c.l.b16 %v3104
        %v3234 = vunpack.c.l.b16 %v3105
        %v3235 = vunpack.c.l.b16 %v3106
        %v3236 = vunpack.c.l.b16 %v3107
        %v3237 = vunpack.c.l.b16 %v3108
        %v3238 = vunpack.c.l.b16 %v3109
        %v3239 = vunpack.c.l.b16 %v3110
        %v3240 = vunpack.c.l.b16 %v3111
        %v3241 = vunpack.c.l.b16 %v3112
        %v3242 = vunpack.c.l.b16 %v3113
        %v3243 = vunpack.c.l.b16 %v3114
        %v3244 = vunpack.c.l.b16 %v3115
        %v3245 = vunpack.c.l.b16 %v3116
        %v3246 = vunpack.c.l.b16 %v3117
        %v3247 = vunpack.c.l.b16 %v3118
        %v3248 = vunpack.c.l.b16 %v3119
        %v3249 = vunpack.c.l.b16 %v3120
        %v3250 = vunpack.c.l.b16 %v3121
        %v3251 = vunpack.c.l.b16 %v3122
        %v3252 = vunpack.c.l.b16 %v3123
        %v3253 = vunpack.c.l.b16 %v3124
        %v3254 = vunpack.c.l.b16 %v3125
        %v3255 = vpack.c.b16 %v3192, %v3191
        %v3256 = vpack.c.b16 %v3194, %v3193
        %v3257 = vpack.c.b16 %v3196, %v3195
        %v3258 = vpack.c.b16 %v3198, %v3197
        %v3259 = vpack.c.b16 %v3200, %v3199
        %v3260 = vpack.c.b16 %v3202, %v3201
        %v3261 = vpack.c.b16 %v3204, %v3203
        %v3262 = vpack.c.b16 %v3206, %v3205
        %v3263 = vpack.c.b16 %v3208, %v3207
        %v3264 = vpack.c.b16 %v3210, %v3209
        %v3265 = vpack.c.b16 %v3212, %v3211
        %v3266 = vpack.c.b16 %v3214, %v3213
        %v3267 = vpack.c.b16 %v3216, %v3215
        %v3268 = vpack.c.b16 %v3218, %v3217
        %v3269 = vpack.c.b16 %v3220, %v3219
        %v3270 = vpack.c.b16 %v3222, %v3221
        %v3271 = vpack.c.b16 %v3224, %v3223
        %v3272 = vpack.c.b16 %v3226, %v3225
        %v3273 = vpack.c.b16 %v3228, %v3227
        %v3274 = vpack.c.b16 %v3230, %v3229
        %v3275 = vpack.c.b16 %v3232, %v3231
        %v3276 = vpack.c.b16 %v3234, %v3233
        %v3277 = vpack.c.b16 %v3236, %v3235
        %v3278 = vpack.c.b16 %v3238, %v3237
        %v3279 = vpack.c.b16 %v3240, %v3239
        %v3280 = vpack.c.b16 %v3242, %v3241
        %v3281 = vpack.c.b16 %v3244, %v3243
        %v3282 = vpack.c.b16 %v3246, %v3245
        %v3283 = vpack.c.b16 %v3248, %v3247
        %v3284 = vpack.c.b16 %v3250, %v3249
        %v3285 = vpack.c.b16 %v3252, %v3251
        %v3286 = vpack.c.b16 %v3254, %v3253
        %3319 = vmatpush.bf16.msra.mxu0 %v3262
        %3320 = vmatpush.bf16.msra.mxu0 %v3261
        %3321 = vmatpush.bf16.msra.mxu0 %v3260
        %3322 = vmatpush.bf16.msra.mxu0 %v3259
        %3323 = vmatpush.bf16.msra.mxu0 %v3258
        %3324 = vmatpush.bf16.msra.mxu0 %v3257
        %3325 = vmatpush.bf16.msra.mxu0 %v3256
        %3326 = vmatpush.bf16.msra.mxu0 %v3255
        %3327 = vmatmul.bf16.gmra.mxu0 %v3054
        %v3328 = vpop.f32.mrf.mxu0
        %v3329 = vadd.f32 %v3126, %v3328
        %v3330 = vpop.f32.mrf.mxu0
        %v3331 = vadd.f32 %v3126, %v3330
        %3332 = vmatmul.bf16.gmra.mxu0 %v3058
        %v3333 = vpop.f32.mrf.mxu0
        %v3334 = vadd.f32 %v3126, %v3333
        %v3335 = vpop.f32.mrf.mxu0
        %v3336 = vadd.f32 %v3126, %v3335
        %3337 = vdwg.mxu0
        %3338 = vmatpush.bf16.msra.mxu0 %v3270
        %3339 = vmatpush.bf16.msra.mxu0 %v3269
        %3340 = vmatpush.bf16.msra.mxu0 %v3268
        %3341 = vmatpush.bf16.msra.mxu0 %v3267
        %3342 = vmatpush.bf16.msra.mxu0 %v3266
        %3343 = vmatpush.bf16.msra.mxu0 %v3265
        %3344 = vmatpush.bf16.msra.mxu0 %v3264
        %3345 = vmatpush.bf16.msra.mxu0 %v3263
        %3346 = vmatmul.bf16.gmra.mxu0 %v3055
        %v3347 = vpop.f32.mrf.mxu0
        %v3348 = vadd.f32 %v3329, %v3347
        %v3349 = vpop.f32.mrf.mxu0
        %v3350 = vadd.f32 %v3331, %v3349
        %3351 = vmatmul.bf16.gmra.mxu0 %v3059
        %v3352 = vpop.f32.mrf.mxu0
        %v3353 = vadd.f32 %v3334, %v3352
        %v3354 = vpop.f32.mrf.mxu0
        %v3355 = vadd.f32 %v3336, %v3354
        %3356 = vdwg.mxu0
        %3357 = vmatpush.bf16.msra.mxu0 %v3278
        %3358 = vmatpush.bf16.msra.mxu0 %v3277
        %3359 = vmatpush.bf16.msra.mxu0 %v3276
        %3360 = vmatpush.bf16.msra.mxu0 %v3275
        %3361 = vmatpush.bf16.msra.mxu0 %v3274
        %3362 = vmatpush.bf16.msra.mxu0 %v3273
        %3363 = vmatpush.bf16.msra.mxu0 %v3272
        %3364 = vmatpush.bf16.msra.mxu0 %v3271
        %3365 = vmatmul.bf16.gmra.mxu0 %v3056
        %v3366 = vpop.f32.mrf.mxu0
        %v3367 = vadd.f32 %v3348, %v3366
        %v3368 = vpop.f32.mrf.mxu0
        %v3369 = vadd.f32 %v3350, %v3368
        %3370 = vmatmul.bf16.gmra.mxu0 %v3060
        %v3371 = vpop.f32.mrf.mxu0
        %v3372 = vadd.f32 %v3353, %v3371
        %v3373 = vpop.f32.mrf.mxu0
        %v3374 = vadd.f32 %v3355, %v3373
        %3375 = vdwg.mxu0
        %3376 = vmatpush.bf16.msra.mxu0 %v3286
        %3377 = vmatpush.bf16.msra.mxu0 %v3285
        %3378 = vmatpush.bf16.msra.mxu0 %v3284
        %3379 = vmatpush.bf16.msra.mxu0 %v3283
        %3380 = vmatpush.bf16.msra.mxu0 %v3282
        %3381 = vmatpush.bf16.msra.mxu0 %v3281
        %3382 = vmatpush.bf16.msra.mxu0 %v3280
        %3383 = vmatpush.bf16.msra.mxu0 %v3279
        %3384 = vmatmul.bf16.gmra.mxu0 %v3057
        %v3385 = vpop.f32.mrf.mxu0
        %v3386 = vadd.f32 %v3367, %v3385
        %v3387 = vpop.f32.mrf.mxu0
        %v3388 = vadd.f32 %v3369, %v3387
        %3389 = vmatmul.bf16.gmra.mxu0 %v3061
        %v3390 = vpop.f32.mrf.mxu0
        %v3391 = vadd.f32 %v3372, %v3390
        %v3392 = vpop.f32.mrf.mxu0
        %v3393 = vadd.f32 %v3374, %v3392
        %3394 = vdwg.mxu0
        %v3395 = vadd.f32 %v2130, %v3386
        %v3396 = vadd.f32 %v2131, %v3388
        %v3397 = vadd.f32 %v2132, %v3391
        %v3398 = vadd.f32 %v2133, %v3393
        %3399 = vadd.xlane.f32.xlu0 %v3395
        %v3400 = vpop.xlane.xlu0 %3399
        %3401 = vadd.xlane.f32.xlu0 %v3396
        %v3402 = vpop.xlane.xlu0 %3401
        %3403 = vadd.xlane.f32.xlu0 %v3397
        %v3404 = vpop.xlane.xlu0 %3403
        %3405 = vadd.xlane.f32.xlu0 %v3398
        %v3406 = vpop.xlane.xlu0 %3405
        %v3407 = vmul.f32 %v3400, %v2051
        %v3408 = vmul.f32 %v3402, %v2051
        %v3409 = vmul.f32 %v3404, %v2051
        %v3410 = vmul.f32 %v3406, %v2051
        %v3411 = vsub.f32 %v3395, %v3407
        %v3412 = vsub.f32 %v3396, %v3408
        %v3413 = vsub.f32 %v3397, %v3409
        %v3414 = vsub.f32 %v3398, %v3410
        %v3415 = vmul.f32 %v3411, %v3411
        %v3416 = vmul.f32 %v3412, %v3412
        %v3417 = vmul.f32 %v3413, %v3413
        %v3418 = vmul.f32 %v3414, %v3414
        %3419 = vadd.xlane.f32.xlu0 %v3415
        %v3420 = vpop.xlane.xlu0 %3419
        %3421 = vadd.xlane.f32.xlu0 %v3416
        %v3422 = vpop.xlane.xlu0 %3421
        %3423 = vadd.xlane.f32.xlu0 %v3417
        %v3424 = vpop.xlane.xlu0 %3423
        %3425 = vadd.xlane.f32.xlu0 %v3418
        %v3426 = vpop.xlane.xlu0 %3425
        %v3427 = vmul.f32 %v3420, %v2051
        %v3428 = vmul.f32 %v3422, %v2051
        %v3429 = vmul.f32 %v3424, %v2051
        %v3430 = vmul.f32 %v3426, %v2051
        %v3431 = vadd.f32 %v3427, 1e-05
        %v3432 = vadd.f32 %v3428, 1e-05
        %v3433 = vadd.f32 %v3429, 1e-05
        %v3434 = vadd.f32 %v3430, 1e-05
        %v3435 = vrsqrt.pop %v3431
        %v3436 = vmul.f32 %v3435, %v3431
        %v3437 = vmul.f32 %v3436, %v3435
        %v3438 = vmul.f32 0.5, %v3437
        %v3439 = vsub.f32 1.5, %v3438
        %v3440 = vmul.f32 %v3435, %v3439
        %vm3441 = vweird.f32 %v3431
        %vm3442 = vweird.f32 %v3435
        %vm3443 = vmor %vm3441, %vm3442
        %v3444 = vsel %vm3443, %v3435, %v3440
        %v3445 = vrsqrt.pop %v3432
        %v3446 = vmul.f32 %v3445, %v3432
        %v3447 = vmul.f32 %v3446, %v3445
        %v3448 = vmul.f32 0.5, %v3447
        %v3449 = vsub.f32 1.5, %v3448
        %v3450 = vmul.f32 %v3445, %v3449
        %vm3451 = vweird.f32 %v3432
        %vm3452 = vweird.f32 %v3445
        %vm3453 = vmor %vm3451, %vm3452
        %v3454 = vsel %vm3453, %v3445, %v3450
        %v3455 = vrsqrt.pop %v3433
        %v3456 = vmul.f32 %v3455, %v3433
        %v3457 = vmul.f32 %v3456, %v3455
        %v3458 = vmul.f32 0.5, %v3457
        %v3459 = vsub.f32 1.5, %v3458
        %v3460 = vmul.f32 %v3455, %v3459
        %vm3461 = vweird.f32 %v3433
        %vm3462 = vweird.f32 %v3455
        %vm3463 = vmor %vm3461, %vm3462
        %v3464 = vsel %vm3463, %v3455, %v3460
        %v3465 = vrsqrt.pop %v3434
        %v3466 = vmul.f32 %v3465, %v3434
        %v3467 = vmul.f32 %v3466, %v3465
        %v3468 = vmul.f32 0.5, %v3467
        %v3469 = vsub.f32 1.5, %v3468
        %v3470 = vmul.f32 %v3465, %v3469
        %vm3471 = vweird.f32 %v3434
        %vm3472 = vweird.f32 %v3465
        %vm3473 = vmor %vm3471, %vm3472
        %v3474 = vsel %vm3473, %v3465, %v3470
        %v3475 = vmul.f32 %v3411, %v3444
        %v3476 = vmul.f32 %v3412, %v3454
        %v3477 = vmul.f32 %v3413, %v3464
        %v3478 = vmul.f32 %v3414, %v3474
        %v3479 = vperm.slane %v604, 4
        %v3480 = vmul.f32 %v3475, %v3479
        %v3481 = vmul.f32 %v3476, %v3479
        %v3482 = vmul.f32 %v3477, %v3479
        %v3483 = vmul.f32 %v3478, %v3479
        %v3484 = vperm.slane %v604, 5
        %v3485 = vadd.f32 %v3480, %v3484
        %v3486 = vadd.f32 %v3481, %v3484
        %v3487 = vadd.f32 %v3482, %v3484
        %v3488 = vadd.f32 %v3483, %v3484
        %3489 = vst [vmem:[#allocation2] sm:$0xff] %v3485
        %3490 = vst [vmem:[#allocation2 + $0x8] sm:$0xff] %v3486
        %3491 = vst [vmem:[#allocation2 + $0x10] sm:$0xff] %v3487
        %3492 = vst [vmem:[#allocation2 + $0x18] sm:$0xff] %v3488
        %p3493 = scmp.eq.s32.totalorder %s39, 2
        // Predicated region
        $region81: #{dimension_reducer_forward.1} parent=59 // pred_check
          %p3494 = pneg %p3493
        $region82: #{dimension_reducer_forward.1} parent=59 // pred_check_branch
          %3496 = sbr.rel (%p3494) target = $region84
        $region83: #{dimension_reducer_forward.1} parent=59 // pred_region
          %v3497 = vld [vmem:[%s1] sm:$0xff]
          %v3498 = vld [vmem:[%s1 + $0x8] sm:$0xff]
          %s3499 = sld [smem:[#allocation4]]
          %v3500 = vstv %s3499
          %v3502 = vsel %vm872, %v3497, 0
          %v3505 = vsel %vm872, %v3498, 0
          %3507 = vmatpush.msra.mxu0 0.0
          %3508 = vmatpush.msra.mxu0 0.0
          %3509 = vmatpush.msra.mxu0 0.0
          %3510 = vmatpush.msra.mxu0 0.0
          %3511 = vmatpush.msra.mxu0 0.0
          %3512 = vmatpush.msra.mxu0 0.0
          %3513 = vmatpush.msra.mxu0 0.0
          %3514 = vmatpush.msra.mxu0 0.0
          %3515 = vmatpush.msra.mxu0 0.0
          %3516 = vmatpush.msra.mxu0 0.0
          %3517 = vmatpush.msra.mxu0 0.0
          %3518 = vmatpush.msra.mxu0 0.0
          %3519 = vmatpush.msra.mxu0 %v3488
          %3520 = vmatpush.msra.mxu0 %v3487
          %3521 = vmatpush.msra.mxu0 %v3486
          %3522 = vmatpush.msra.mxu0 %v3485
          %3523 = vmatmul.f32.gmra.mxu0 %v3502
          %v3524 = vpop.f32.mrf.mxu0
          %v3525 = vadd.f32 %v3500, %v3524
          %3526 = vmatmul.f32.gmra.mxu0 %v3505
          %v3527 = vpop.f32.mrf.mxu0
          %v3528 = vadd.f32 %v3500, %v3527
          %3529 = vdwg.mxu0
          %3530 = vst [vmem:[%s569] sm:$0xff] %v3525
          %3531 = vst [vmem:[%s569 + $0x8] sm:$0xff] %v3528
        $region84: #{dimension_reducer_forward.1} parent=59 // pred_fallthru
          _
        %s3532 = sand.u32 %s304, 1
        %s3533 = scalar_lea.sflag [#allocation7], %s3532
        %s3534 = sand.u32 %s304, 1
        %s3535 = smul.addr %s3534, 16
        %s3536 = scalar_lea.vmem [#allocation13], %s3535
        // Predicated region
        $region85: #{dimension_reducer_forward.1} parent=59 // pred_check
          %p3537 = pneg %p314
        $region86: #{dimension_reducer_forward.1} parent=59 // pred_check_branch
          %3539 = sbr.rel (%p3537) target = $region88
        $region87: #{dimension_reducer_forward.1} parent=59 // pred_region
          %3541 = vsyncadd %s3533, 0
          %s3542 = smul.addr %s38, 2
          %s3543 = smul.addr %s3542, 8
          %s3544 = scalar_lea.hbm %s10, %s3543
          %s3545 = sshll.u32 %s3536, 4
          %s3546 = int_to_ptr.vmem [resolvable:$true] %s3545
          %s3547 = sshll.u32 %s3544, 4
          %s3548 = int_to_ptr.hbm [resolvable:$true] %s3547
          %3553 = dma.vmem_to_hbm [thread:$0]  %s3546, 256, %s3548, %s3533, 128, 128, 8
        $region88: #{dimension_reducer_forward.1} parent=59 // pred_fallthru
          _
      $region60: #{dimension_reducer_forward.1} parent=5 // pred_fallthru
        _
      %p3554 = scmp.le.s32.totalorder 2, %s29
      // Predicated region
      $region89: #{dimension_reducer_forward.1} parent=5 // pred_check
        %p3555 = pneg %p3554
      $region90: #{dimension_reducer_forward.1} parent=5 // pred_check_branch
        %3557 = sbr.rel (%p3555) target = $region92
      $region91: #{dimension_reducer_forward.1} parent=5 // pred_region
        %s3558 = ssub.s32 %s29, 2
        // Predicated region
        $region93: #{dimension_reducer_forward.1} parent=91 // pred_check
          %p3559 = pneg %p320
        $region94: #{dimension_reducer_forward.1} parent=91 // pred_check_branch
          %3561 = sbr.rel (%p3559) target = $region96
        $region95: #{dimension_reducer_forward.1} parent=91 // pred_region
          %s3562 = sand.u32 %s305, 1
          %s3563 = scalar_lea.sflag [#allocation7], %s3562
          %s3564 = sand.u32 %s305, 1
          %s3565 = smul.addr %s3564, 16
          %s3566 = scalar_lea.vmem [#allocation13], %s3565
          %3568 = dma.done %s3563, 256
        $region96: #{dimension_reducer_forward.1} parent=91 // pred_fallthru
          _
      $region92: #{dimension_reducer_forward.1} parent=5 // pred_fallthru
        _
    $region6: #{dimension_reducer_forward.1} parent=1 // loop_footer
      %s33 = sadd.s32 1, %s29
    $region7: #{dimension_reducer_forward.1} parent=1 // loop_footer_branch
      %28 = sbr.rel target = $region3
    $region8: #{dimension_reducer_forward.1} parent=1 // loop_exit
      _
    %3569 = vsyncpa [#allocation6], 1
    %s3570 = scalar_lea.sflag [#allocation6], 1
    %3571 = vsyncpa %s3570, 1
    %3572 = vsyncpa [#allocation9], 1
    %s3573 = scalar_lea.sflag [#allocation9], 1
    %3574 = vsyncpa %s3573, 1
    %3575 = vsyncpa [#allocation12], 1
    %s3576 = scalar_lea.sflag [#allocation12], 1
    %3577 = vsyncpa %s3576, 1
    %3578 = vsyncpa [#allocation7], 1
    %s3579 = scalar_lea.sflag [#allocation7], 1
    %3580 = vsyncpa %s3579, 1

</llo_original>
